<compile_context>
chip_gen: v6e
topology: v6e:2x2x1
jax: 0.10.0
libtpu: 0.0.40
codegen_flags: <defaults>
</compile_context>

<pallas_src>
import functools
import math

import jax
import jax.numpy as jnp
from jax import lax
from jax.experimental import pallas as pl
from jax.experimental.pallas import tpu as pltpu

# ----------------------------- model config (small, synthetic) -----------------------------
B = 2                    # batch
C = 3                    # image channels (CLIP expects RGB)
IMG = 16                 # image spatial size
P = 8                    # patch size
GH = GW = IMG // P
NP = GH * GW             # num patches (4)
SEQ = NP + 1             # + class token (5)
SEQP = 8                 # token dim padded to a full sublane group
D = 32                   # transformer width (stand-in for 1024 of ViT-L/14)
DPAD = 128               # lane-padded width
H = 2                    # attention heads
DH = D // H              # head dim (16)
LAYERS = 2               # transformer depth
MLP = 4 * D              # MLP hidden (128)
MLPPAD = ((MLP + 127) // 128) * 128
EMBED = 32               # CLIP output embed dim (stand-in for CHANNELS['ViT-L/14']=768)
FPAD = 128               # lane-padded feature width
NUM_CLASSES = 1          # nn.Linear(CHANNELS[name], num_classes)
OPAD = 128               # lane-padded logit width
CPP = C * P * P          # unfolded patch length (192)
CPAD = ((CPP + 127) // 128) * 128   # 256
NT = B * SEQP            # padded token rows (16)
QKV_COLS = 3 * H * DPAD  # packed QKV output width (768)
SCALE = 1.0 / math.sqrt(DH)


# ----------------------------- in-kernel helpers -----------------------------

def _layernorm(x, g, b, lane_mask, eps=1e-5):
    """f32 LayerNorm over the last axis; stats divide by the REAL width D so the
    zero-padded lanes do not bias them.  gamma/beta are zero in padded lanes, so
    padded lanes stay exactly zero on the output."""
    inv_d = 1.0 / D
    mu = jnp.sum(x, axis=-1, keepdims=True) * inv_d
    cen = (x - mu) * lane_mask
    var = jnp.sum(cen * cen, axis=-1, keepdims=True) * inv_d
    return cen * lax.rsqrt(var + eps) * g + b


def _mm(x_f32, w_bf16):
    """bf16 x bf16 matmul with f32 accumulation on the MXU."""
    return jnp.dot(x_f32.astype(jnp.bfloat16), w_bf16,
                   preferred_element_type=jnp.float32)


# ----------------------------- fused / layer-streamed CLIP kernel -----------------------------

def _clip_kernel(patches_ref, cls_pos_ref, patch_w_ref,
                 ln_pre_g_ref, ln_pre_b_ref,
                 ln1_g_ref, ln1_b_ref, qkv_w_ref, qkv_b_ref,
                 proj_w_ref, proj_b_ref,
                 ln2_g_ref, ln2_b_ref, fc1_w_ref, fc1_b_ref,
                 fc2_w_ref, fc2_b_ref,
                 ln_post_g_ref, ln_post_b_ref,
                 head_proj_ref, head_fcw_ref, head_fcb_ref,
                 feat_ref, logits_ref,
                 h_ref):
    l = pl.program_id(0)

    # Masks for zero-padded feature lanes / key tokens (hoisted, VPU-cheap).
    lane_mask = (lax.broadcasted_iota(jnp.int32, (1, DPAD), 1) < D).astype(jnp.float32)
    key_mask = jnp.where(
        lax.broadcasted_iota(jnp.int32, (1, 1, SEQP), 2) < SEQ, 0.0, -1e30
    ).astype(jnp.float32)

    # ---- prologue (layer 0 only): patch embed + cls/pos + ln_pre ----
    # patches_ref already has zero rows at the CLS / pad-token positions, so one
    # dense matmul + add builds the whole padded (B*SEQP, DPAD) token grid.
    @pl.when(l == 0)
    def _():
        tok = jnp.dot(patches_ref[...], patch_w_ref[...],
                      preferred_element_type=jnp.float32)          # (NT, DPAD)
        h0 = tok + cls_pos_ref[...]
        h_ref[...] = _layernorm(h0, ln_pre_g_ref[...], ln_pre_b_ref[...], lane_mask)

    h = h_ref[...]                                                  # (NT, DPAD) f32

    # ---- multi-head self-attention (pre-LN) ----
    xn = _layernorm(h, ln1_g_ref[0], ln1_b_ref[0], lane_mask)
    qkv = _mm(xn, qkv_w_ref[0]) + qkv_b_ref[0]                      # (NT, 3*H*DPAD)
    qkv3 = qkv.reshape(B, SEQP, QKV_COLS)

    proj_w = proj_w_ref[0]                                          # (H, DPAD, DPAD)
    o = jnp.zeros((NT, DPAD), jnp.float32)
    for hi in range(H):                                             # static unroll; 128-aligned slices
        q = qkv3[:, :, (0 * H + hi) * DPAD:(0 * H + hi + 1) * DPAD]
        k = qkv3[:, :, (1 * H + hi) * DPAD:(1 * H + hi + 1) * DPAD]
        v = qkv3[:, :, (2 * H + hi) * DPAD:(2 * H + hi + 1) * DPAD]
        s = jnp.einsum('bqd,bkd->bqk',
                       q.astype(jnp.bfloat16), k.astype(jnp.bfloat16),
                       preferred_element_type=jnp.float32) * SCALE  # (B, SEQP, SEQP)
        s = s + key_mask                                            # mask padded key tokens
        m = jnp.max(s, axis=-1, keepdims=True)
        p = jnp.exp(s - m)
        # exact reciprocal for closer parity with torch.softmax (approx=True is the EUP fast path)
        p = p * pl.reciprocal(jnp.sum(p, axis=-1, keepdims=True), approx=False)
        ctx = jnp.einsum('bqk,bkd->bqd',
                         p.astype(jnp.bfloat16), v.astype(jnp.bfloat16),
                         preferred_element_type=jnp.float32)        # (B, SEQP, DPAD)
        # concat-by-matmul: head hi's out-projection rows live in proj_w[hi]
        o = o + _mm(ctx.reshape(NT, DPAD), proj_w[hi])
    h = h + o + proj_b_ref[0]

    # ---- MLP (QuickGELU) ----
    xn = _layernorm(h, ln2_g_ref[0], ln2_b_ref[0], lane_mask)
    m1 = _mm(xn, fc1_w_ref[0]) + fc1_b_ref[0]                       # (NT, MLPPAD)
    m1 = m1 * jax.nn.sigmoid(1.702 * m1)                            # QuickGELU (f32, EUP)
    h = h + _mm(m1, fc2_w_ref[0]) + fc2_b_ref[0]

    h_ref[...] = h                                                  # persists to the next layer

    # ---- epilogue (last layer only): ln_post + image projection + fc head ----
    # Runs on the full lane/sublane-dense slab (extra rows are discarded by the
    # wrapper); output stores are fully dense (16,128).
    @pl.when(l == LAYERS - 1)
    def _():
        hn = _layernorm(h, ln_post_g_ref[...], ln_post_b_ref[...], lane_mask)
        feat = _mm(hn, head_proj_ref[...])                          # (NT, FPAD)
        feat_ref[...] = feat                                        # encode_image(x).float()
        logits_ref[...] = _mm(feat, head_fcw_ref[...]) + head_fcb_ref[...]   # self.fc(features)


# ----------------------------- pallas_call construction -----------------------------

def _resident(shape):
    nd = len(shape)
    return pl.BlockSpec(tuple(shape), lambda *_: (0,) * nd)


def _streamed(shape):
    nd = len(shape)
    return pl.BlockSpec((1,) + tuple(shape[1:]), lambda l: (l,) + (0,) * (nd - 1))


def _build_clip_call():
    in_specs = [
        _resident((NT, CPAD)),                    # patches (zero rows at cls/pad slots)
        _resident((NT, DPAD)),                    # class emb + positional emb (padded grid)
        _resident((CPAD, DPAD)),                  # patch embedding weight
        _resident((1, DPAD)), _resident((1, DPAD)),                         # ln_pre g/b
        _streamed((LAYERS, 1, DPAD)), _streamed((LAYERS, 1, DPAD)),         # ln1 g/b
        _streamed((LAYERS, DPAD, QKV_COLS)),                                # qkv_w (head-major slots)
        _streamed((LAYERS, 1, QKV_COLS)),                                   # qkv_b
        _streamed((LAYERS, H, DPAD, DPAD)),                                 # per-head out-proj
        _streamed((LAYERS, 1, DPAD)),                                       # proj_b
        _streamed((LAYERS, 1, DPAD)), _streamed((LAYERS, 1, DPAD)),         # ln2 g/b
        _streamed((LAYERS, DPAD, MLPPAD)), _streamed((LAYERS, 1, MLPPAD)),  # fc1
        _streamed((LAYERS, MLPPAD, DPAD)), _streamed((LAYERS, 1, DPAD)),    # fc2
        _resident((1, DPAD)), _resident((1, DPAD)),                         # ln_post g/b
        _resident((DPAD, FPAD)),                  # image projection (lane-padded)
        _resident((FPAD, OPAD)),                  # fc weight (lane-padded)
        _resident((1, OPAD)),                     # fc bias
    ]
    out_specs = [_resident((NT, FPAD)), _resident((NT, OPAD))]
    out_shape = (jax.ShapeDtypeStruct((NT, FPAD), jnp.float32),
                 jax.ShapeDtypeStruct((NT, OPAD), jnp.float32))

    flops = 2 * NT * (
        CPAD * DPAD
        + LAYERS * (DPAD * QKV_COLS + H * (2 * SEQP * DPAD + DPAD * DPAD)
                    + DPAD * MLPPAD + MLPPAD * DPAD)
        + DPAD * FPAD + FPAD * OPAD)
    transcendentals = NT * LAYERS * (H * SEQP + MLPPAD)
    bytes_accessed = (
        NT * (CPAD * 2 + DPAD * 4 + (FPAD + OPAD) * 4)
        + (CPAD * DPAD + DPAD * FPAD + FPAD * OPAD) * 2 + 6 * DPAD * 4
        + LAYERS * ((DPAD * QKV_COLS + H * DPAD * DPAD + 2 * DPAD * MLPPAD) * 2
                    + (QKV_COLS + 5 * DPAD + MLPPAD) * 4))

    return pl.pallas_call(
        _clip_kernel,
        out_shape=out_shape,
        grid_spec=pltpu.PrefetchScalarGridSpec(
            num_scalar_prefetch=0,
            grid=(LAYERS,),                        # layer streaming: weights double-buffered by BlockSpec
            in_specs=in_specs,
            out_specs=out_specs,
            scratch_shapes=[pltpu.VMEM((NT, DPAD), jnp.float32)],   # resident activations
        ),
        compiler_params=pltpu.CompilerParams(dimension_semantics=("arbitrary",)),
        cost_estimate=pl.CostEstimate(flops=int(flops),
                                      transcendentals=int(transcendentals),
                                      bytes_accessed=int(bytes_accessed)),
    )


_CLIP_FWD = _build_clip_call()


# ----------------------------- parameter init (deterministic, synthetic) -----------------------------

def init_params(key):
    ks = list(jax.random.split(key, 8 + LAYERS * 6))
    ki = iter(ks)

    def w(shape, scale=0.02):
        return (scale * jax.random.normal(next(ki), shape)).astype(jnp.float32)

    params = {
        "patch_w": w((CPP, D)),                     # conv1 (stride=patch) as matmul, no bias
        "class_emb": w((D,)),
        "pos_emb": w((SEQ, D)),
        "ln_pre_g": jnp.ones((D,), jnp.float32), "ln_pre_b": jnp.zeros((D,), jnp.float32),
        "ln_post_g": jnp.ones((D,), jnp.float32), "ln_post_b": jnp.zeros((D,), jnp.float32),
        "proj": w((D, EMBED)),                      # image projection, no bias
        "fc_w": w((EMBED, NUM_CLASSES)),            # self.fc = nn.Linear(CHANNELS[name], num_classes)
        "fc_b": jnp.zeros((NUM_CLASSES,), jnp.float32),
        "blocks": [],
    }
    for _ in range(LAYERS):
        params["blocks"].append({
            "ln1_g": jnp.ones((D,), jnp.float32), "ln1_b": jnp.zeros((D,), jnp.float32),
            "qkv_w": w((D, 3 * D)), "qkv_b": jnp.zeros((3 * D,), jnp.float32),
            "proj_w": w((D, D)),    "proj_b": jnp.zeros((D,), jnp.float32),
            "ln2_g": jnp.ones((D,), jnp.float32), "ln2_b": jnp.zeros((D,), jnp.float32),
            "fc1_w": w((D, MLP)),   "fc1_b": jnp.zeros((MLP,), jnp.float32),
            "fc2_w": w((MLP, D)),   "fc2_b": jnp.zeros((D,), jnp.float32),
        })
    return params


def prepare_kernel_params(p):
    """One-time repack: lane/sublane-padded, head-major, per-layer-stacked weights."""
    bf = jnp.bfloat16
    f32 = jnp.float32

    def pad2(a, rows, cols, dtype):
        out = jnp.zeros((rows, cols), f32).at[:a.shape[0], :a.shape[1]].set(a)
        return out.astype(dtype)

    def pad_vec(v, width):
        return jnp.zeros((1, width), f32).at[0, :v.shape[0]].set(v)

    patch_w = pad2(p["patch_w"], CPAD, DPAD, bf)

    # class token + positional embedding, pre-placed on the padded (B, SEQP) token grid
    cls_pos = jnp.zeros((B, SEQP, DPAD), f32)
    row0 = p["class_emb"] + p["pos_emb"][0]
    cls_pos = cls_pos.at[:, 0, :D].set(jnp.broadcast_to(row0, (B, D)))
    cls_pos = cls_pos.at[:, 1:1 + NP, :D].set(
        jnp.broadcast_to(p["pos_emb"][1:1 + NP], (B, NP, D)))
    cls_pos = cls_pos.reshape(NT, DPAD)

    ln_pre_g, ln_pre_b = pad_vec(p["ln_pre_g"], DPAD), pad_vec(p["ln_pre_b"], DPAD)
    ln_post_g, ln_post_b = pad_vec(p["ln_post_g"], DPAD), pad_vec(p["ln_post_b"], DPAD)

    ln1_g, ln1_b, ln2_g, ln2_b = [], [], [], []
    qkv_w, qkv_b, proj_w, proj_b = [], [], [], []
    fc1_w, fc1_b, fc2_w, fc2_b = [], [], [], []
    for blk in p["blocks"]:
        ln1_g.append(pad_vec(blk["ln1_g"], DPAD)); ln1_b.append(pad_vec(blk["ln1_b"], DPAD))
        ln2_g.append(pad_vec(blk["ln2_g"], DPAD)); ln2_b.append(pad_vec(blk["ln2_b"], DPAD))

        # head-major QKV packing: slot (t, h) occupies lanes [(t*H+h)*DPAD, ...+DH)
        wq = jnp.zeros((DPAD, QKV_COLS), f32)
        bq = jnp.zeros((1, QKV_COLS), f32)
        for t in range(3):
            for hi in range(H):
                c0 = (t * H + hi) * DPAD
                src = slice(t * D + hi * DH, t * D + (hi + 1) * DH)
                wq = wq.at[:D, c0:c0 + DH].set(blk["qkv_w"][:, src])
                bq = bq.at[0, c0:c0 + DH].set(blk["qkv_b"][src])
        qkv_w.append(wq.astype(bf)); qkv_b.append(bq)

        # per-head out-projection (concat-by-matmul): head h rows live at [0:DH] of slot h
        wp = jnp.zeros((H, DPAD, DPAD), f32)
        for hi in range(H):
            wp = wp.at[hi, :DH, :D].set(blk["proj_w"][hi * DH:(hi + 1) * DH, :])
        proj_w.append(wp.astype(bf)); proj_b.append(pad_vec(blk["proj_b"], DPAD))

        fc1_w.append(pad2(blk["fc1_w"], DPAD, MLPPAD, bf)); fc1_b.append(pad_vec(blk["fc1_b"], MLPPAD))
        fc2_w.append(pad2(blk["fc2_w"], MLPPAD, DPAD, bf)); fc2_b.append(pad_vec(blk["fc2_b"], DPAD))

    stk = jnp.stack
    head_proj = pad2(p["proj"], DPAD, FPAD, bf)
    head_fcw = pad2(p["fc_w"], FPAD, OPAD, bf)
    head_fcb = pad_vec(p["fc_b"], OPAD)

    return (cls_pos, patch_w, ln_pre_g, ln_pre_b,
            stk(ln1_g), stk(ln1_b), stk(qkv_w), stk(qkv_b),
            stk(proj_w), stk(proj_b), stk(ln2_g), stk(ln2_b),
            stk(fc1_w), stk(fc1_b), stk(fc2_w), stk(fc2_b),
            ln_post_g, ln_post_b, head_proj, head_fcw, head_fcb)


# ----------------------------- forward (CLIPModel.forward, top_layer='fc') -----------------------------

@functools.partial(jax.jit, static_argnames=("return_feature",))
def clip_model_forward(kernel_params, x, return_feature=False):
    """x: NCHW float32 image batch (B, C, IMG, IMG) -> logits (B, NUM_CLASSES)."""
    # unfold: conv(stride=P, kernel=P) == patchify + matmul; patches land on the padded
    # (B, SEQP) token grid with zero rows at CLS / pad positions (addressing glue only).
    patches = (x.reshape(B, C, GH, P, GW, P)
                 .transpose(0, 2, 4, 1, 3, 5)
                 .reshape(B, NP, CPP))
    patches_padded = jnp.zeros((B, SEQP, CPAD), jnp.bfloat16)
    patches_padded = patches_padded.at[:, 1:1 + NP, :CPP].set(patches.astype(jnp.bfloat16))
    patches_padded = patches_padded.reshape(NT, CPAD)

    feat_all, logits_all = _CLIP_FWD(patches_padded, *kernel_params)

    if return_feature:
        return feat_all.reshape(B, SEQP, FPAD)[:, 0, :EMBED]          # encode_image(x).float()
    return logits_all.reshape(B, SEQP, OPAD)[:, 0, :NUM_CLASSES]      # self.fc(features)


if __name__ == "__main__":
    key = jax.random.PRNGKey(0)
    pkey, xkey = jax.random.split(key)
    params = init_params(pkey)
    kparams = prepare_kernel_params(params)
    x = jax.random.normal(xkey, (B, C, IMG, IMG), dtype=jnp.float32)   # NCHW like PyTorch

    logits = jax.block_until_ready(clip_model_forward(kparams, x))
    assert logits.shape == (B, NUM_CLASSES) and logits.dtype == jnp.float32
    assert bool(jnp.all(jnp.isfinite(logits)))

    feats = jax.block_until_ready(clip_model_forward(kparams, x, return_feature=True))
    assert feats.shape == (B, EMBED) and feats.dtype == jnp.float32
    assert bool(jnp.all(jnp.isfinite(feats)))

    print("KERNEL_OK")
</pallas_src>

<mosaic_0001>
module attributes {stable_mosaic.version = 11 : i64} {
  func.func @_clip_kernel(%arg0: i32, %arg1: memref<16x256xbf16, #tpu.memory_space<vmem>>, %arg2: memref<16x128xf32, #tpu.memory_space<vmem>>, %arg3: memref<256x128xbf16, #tpu.memory_space<vmem>>, %arg4: memref<1x128xf32, #tpu.memory_space<vmem>>, %arg5: memref<1x128xf32, #tpu.memory_space<vmem>>, %arg6: memref<1x1x128xf32, #tpu.memory_space<vmem>>, %arg7: memref<1x1x128xf32, #tpu.memory_space<vmem>>, %arg8: memref<1x128x768xbf16, #tpu.memory_space<vmem>>, %arg9: memref<1x1x768xf32, #tpu.memory_space<vmem>>, %arg10: memref<1x2x128x128xbf16, #tpu.memory_space<vmem>>, %arg11: memref<1x1x128xf32, #tpu.memory_space<vmem>>, %arg12: memref<1x1x128xf32, #tpu.memory_space<vmem>>, %arg13: memref<1x1x128xf32, #tpu.memory_space<vmem>>, %arg14: memref<1x128x128xbf16, #tpu.memory_space<vmem>>, %arg15: memref<1x1x128xf32, #tpu.memory_space<vmem>>, %arg16: memref<1x128x128xbf16, #tpu.memory_space<vmem>>, %arg17: memref<1x1x128xf32, #tpu.memory_space<vmem>>, %arg18: memref<1x128xf32, #tpu.memory_space<vmem>>, %arg19: memref<1x128xf32, #tpu.memory_space<vmem>>, %arg20: memref<128x128xbf16, #tpu.memory_space<vmem>>, %arg21: memref<128x128xbf16, #tpu.memory_space<vmem>>, %arg22: memref<1x128xf32, #tpu.memory_space<vmem>>, %arg23: memref<16x128xf32, #tpu.memory_space<vmem>>, %arg24: memref<16x128xf32, #tpu.memory_space<vmem>>, %arg25: memref<16x128xf32, #tpu.memory_space<vmem>>) attributes {dimension_semantics = [#tpu.dimension_semantics<arbitrary>], iteration_bounds = array<i64: 2>, scalar_prefetch = 0 : i64, scratch_operands = 1 : i64, tpu.core_type = #tpu.core_type<tc>, window_params = [{pipeline_mode = #tpu.pipeline_mode<synchronous>, transform_indices = @transform_0, window_bounds = array<i64: 16, 256>}, {pipeline_mode = #tpu.pipeline_mode<synchronous>, transform_indices = @transform_1, window_bounds = array<i64: 16, 128>}, {pipeline_mode = #tpu.pipeline_mode<synchronous>, transform_indices = @transform_2, window_bounds = array<i64: 256, 128>}, {pipeline_mode = #tpu.pipeline_mode<synchronous>, transform_indices = @transform_3, window_bounds = array<i64: 1, 128>}, {pipeline_mode = #tpu.pipeline_mode<synchronous>, transform_indices = @transform_4, window_bounds = array<i64: 1, 128>}, {transform_indices = @transform_5, window_bounds = array<i64: 1, 1, 128>}, {transform_indices = @transform_6, window_bounds = array<i64: 1, 1, 128>}, {transform_indices = @transform_7, window_bounds = array<i64: 1, 128, 768>}, {transform_indices = @transform_8, window_bounds = array<i64: 1, 1, 768>}, {transform_indices = @transform_9, window_bounds = array<i64: 1, 2, 128, 128>}, {transform_indices = @transform_10, window_bounds = array<i64: 1, 1, 128>}, {transform_indices = @transform_11, window_bounds = array<i64: 1, 1, 128>}, {transform_indices = @transform_12, window_bounds = array<i64: 1, 1, 128>}, {transform_indices = @transform_13, window_bounds = array<i64: 1, 128, 128>}, {transform_indices = @transform_14, window_bounds = array<i64: 1, 1, 128>}, {transform_indices = @transform_15, window_bounds = array<i64: 1, 128, 128>}, {transform_indices = @transform_16, window_bounds = array<i64: 1, 1, 128>}, {pipeline_mode = #tpu.pipeline_mode<synchronous>, transform_indices = @transform_17, window_bounds = array<i64: 1, 128>}, {pipeline_mode = #tpu.pipeline_mode<synchronous>, transform_indices = @transform_18, window_bounds = array<i64: 1, 128>}, {pipeline_mode = #tpu.pipeline_mode<synchronous>, transform_indices = @transform_19, window_bounds = array<i64: 128, 128>}, {pipeline_mode = #tpu.pipeline_mode<synchronous>, transform_indices = @transform_20, window_bounds = array<i64: 128, 128>}, {pipeline_mode = #tpu.pipeline_mode<synchronous>, transform_indices = @transform_21, window_bounds = array<i64: 1, 128>}, {pipeline_mode = #tpu.pipeline_mode<synchronous>, transform_indices = @transform_22, window_bounds = array<i64: 16, 128>}, {pipeline_mode = #tpu.pipeline_mode<synchronous>, transform_indices = @transform_23, window_bounds = array<i64: 16, 128>}]} {
    %0 = tpu.iota {dimensions = array<i32: 1>} : vector<1x128xi32>
    %c32_i32 = arith.constant 32 : i32
    %1 = vector.broadcast %c32_i32 : i32 to vector<1x128xi32>
    %2 = arith.cmpi slt, %0, %1 : vector<1x128xi32>
    %3 = arith.extui %2 : vector<1x128xi1> to vector<1x128xi32>
    %4 = arith.sitofp %3 : vector<1x128xi32> to vector<1x128xf32>
    %5 = tpu.iota {dimensions = array<i32: 2>} : vector<1x1x8xi32>
    %c5_i32 = arith.constant 5 : i32
    %6 = vector.broadcast %c5_i32 : i32 to vector<1x1x8xi32>
    %7 = arith.cmpi slt, %5, %6 : vector<1x1x8xi32>
    %cst = arith.constant 0.000000e+00 : f32
    %cst_0 = arith.constant -1.000000e+30 : f32
    %8 = vector.broadcast %cst : f32 to vector<1x1x8xf32>
    %9 = vector.broadcast %cst_0 : f32 to vector<1x1x8xf32>
    %10 = arith.select %7, %8, %9 : vector<1x1x8xi1>, vector<1x1x8xf32>
    %c0_i32 = arith.constant 0 : i32
    %11 = arith.cmpi eq, %arg0, %c0_i32 : i32
    %12 = arith.extui %11 : i1 to i32
    %c0_i32_1 = arith.constant 0 : i32
    %13 = arith.cmpi ne, %12, %c0_i32_1 : i32
    scf.if %13 {
      %c0_71 = arith.constant 0 : index
      %c0_72 = arith.constant 0 : index
      %171 = vector.load %arg1[%c0_71, %c0_72] : memref<16x256xbf16, #tpu.memory_space<vmem>>, vector<16x256xbf16>
      %c0_73 = arith.constant 0 : index
      %c0_74 = arith.constant 0 : index
      %172 = vector.load %arg3[%c0_73, %c0_74] : memref<256x128xbf16, #tpu.memory_space<vmem>>, vector<256x128xbf16>
      %cst_75 = arith.constant dense<0.000000e+00> : vector<16x128xf32>
      %173 = tpu.matmul %171, %172, %cst_75 {dimension_numbers = #tpu.dot_dimension_numbers<[1], [0], [0], [1], [0, 0, 1, 1], [], []>} : vector<16x256xbf16>, vector<256x128xbf16>, vector<16x128xf32> -> vector<16x128xf32>
      %c0_76 = arith.constant 0 : index
      %c0_77 = arith.constant 0 : index
      %174 = vector.load %arg2[%c0_76, %c0_77] : memref<16x128xf32, #tpu.memory_space<vmem>>, vector<16x128xf32>
      %175 = arith.addf %173, %174 : vector<16x128xf32>
      %c0_78 = arith.constant 0 : index
      %c0_79 = arith.constant 0 : index
      %176 = vector.load %arg4[%c0_78, %c0_79] : memref<1x128xf32, #tpu.memory_space<vmem>>, vector<1x128xf32>
      %c0_80 = arith.constant 0 : index
      %c0_81 = arith.constant 0 : index
      %177 = vector.load %arg5[%c0_80, %c0_81] : memref<1x128xf32, #tpu.memory_space<vmem>>, vector<1x128xf32>
      %cst_82 = arith.constant dense<0.000000e+00> : vector<16xf32>
      %178 = vector.multi_reduction <add>, %175, %cst_82 [1] : vector<16x128xf32> to vector<16xf32>
      %179 = vector.shape_cast %178 : vector<16xf32> to vector<16x1xf32>
      %cst_83 = arith.constant 3.125000e-02 : f32
      %180 = vector.broadcast %cst_83 : f32 to vector<16x1xf32>
      %181 = arith.mulf %179, %180 : vector<16x1xf32>
      %182 = vector.broadcast %181 : vector<16x1xf32> to vector<16x128xf32>
      %183 = arith.subf %175, %182 : vector<16x128xf32>
      %184 = vector.broadcast %4 : vector<1x128xf32> to vector<16x128xf32>
      %185 = arith.mulf %183, %184 : vector<16x128xf32>
      %186 = arith.mulf %185, %185 : vector<16x128xf32>
      %cst_84 = arith.constant dense<0.000000e+00> : vector<16xf32>
      %187 = vector.multi_reduction <add>, %186, %cst_84 [1] : vector<16x128xf32> to vector<16xf32>
      %188 = vector.shape_cast %187 : vector<16xf32> to vector<16x1xf32>
      %cst_85 = arith.constant 3.125000e-02 : f32
      %189 = vector.broadcast %cst_85 : f32 to vector<16x1xf32>
      %190 = arith.mulf %188, %189 : vector<16x1xf32>
      %cst_86 = arith.constant 9.99999974E-6 : f32
      %191 = vector.broadcast %cst_86 : f32 to vector<16x1xf32>
      %192 = arith.addf %190, %191 : vector<16x1xf32>
      %193 = math.rsqrt %192 : vector<16x1xf32>
      %194 = vector.broadcast %193 : vector<16x1xf32> to vector<16x128xf32>
      %195 = arith.mulf %185, %194 : vector<16x128xf32>
      %196 = vector.broadcast %176 : vector<1x128xf32> to vector<16x128xf32>
      %197 = arith.mulf %195, %196 : vector<16x128xf32>
      %198 = vector.broadcast %177 : vector<1x128xf32> to vector<16x128xf32>
      %199 = arith.addf %197, %198 : vector<16x128xf32>
      %c0_87 = arith.constant 0 : index
      %c0_88 = arith.constant 0 : index
      %200 = vector.load %arg25[%c0_87, %c0_88] : memref<16x128xf32, #tpu.memory_space<vmem>>, vector<16x128xf32>
      tpu.vector_store %arg25[%c0_87, %c0_88], %199 {strides = array<i32>} : memref<16x128xf32, #tpu.memory_space<vmem>>, vector<16x128xf32>,
    } else {
    }
    %c0 = arith.constant 0 : index
    %c0_2 = arith.constant 0 : index
    %14 = vector.load %arg25[%c0, %c0_2] : memref<16x128xf32, #tpu.memory_space<vmem>>, vector<16x128xf32>
    %c0_3 = arith.constant 0 : index
    %c0_4 = arith.constant 0 : index
    %c0_5 = arith.constant 0 : index
    %15 = vector.load %arg6[%c0_3, %c0_4, %c0_5] : memref<1x1x128xf32, #tpu.memory_space<vmem>>, vector<1x1x128xf32>
    %16 = vector.shape_cast %15 : vector<1x1x128xf32> to vector<1x128xf32>
    %c0_6 = arith.constant 0 : index
    %c0_7 = arith.constant 0 : index
    %c0_8 = arith.constant 0 : index
    %17 = vector.load %arg7[%c0_6, %c0_7, %c0_8] : memref<1x1x128xf32, #tpu.memory_space<vmem>>, vector<1x1x128xf32>
    %18 = vector.shape_cast %17 : vector<1x1x128xf32> to vector<1x128xf32>
    %cst_9 = arith.constant dense<0.000000e+00> : vector<16xf32>
    %19 = vector.multi_reduction <add>, %14, %cst_9 [1] : vector<16x128xf32> to vector<16xf32>
    %20 = vector.shape_cast %19 : vector<16xf32> to vector<16x1xf32>
    %cst_10 = arith.constant 3.125000e-02 : f32
    %21 = vector.broadcast %cst_10 : f32 to vector<16x1xf32>
    %22 = arith.mulf %20, %21 : vector<16x1xf32>
    %23 = vector.broadcast %22 : vector<16x1xf32> to vector<16x128xf32>
    %24 = arith.subf %14, %23 : vector<16x128xf32>
    %25 = vector.broadcast %4 : vector<1x128xf32> to vector<16x128xf32>
    %26 = arith.mulf %24, %25 : vector<16x128xf32>
    %27 = arith.mulf %26, %26 : vector<16x128xf32>
    %cst_11 = arith.constant dense<0.000000e+00> : vector<16xf32>
    %28 = vector.multi_reduction <add>, %27, %cst_11 [1] : vector<16x128xf32> to vector<16xf32>
    %29 = vector.shape_cast %28 : vector<16xf32> to vector<16x1xf32>
    %cst_12 = arith.constant 3.125000e-02 : f32
    %30 = vector.broadcast %cst_12 : f32 to vector<16x1xf32>
    %31 = arith.mulf %29, %30 : vector<16x1xf32>
    %cst_13 = arith.constant 9.99999974E-6 : f32
    %32 = vector.broadcast %cst_13 : f32 to vector<16x1xf32>
    %33 = arith.addf %31, %32 : vector<16x1xf32>
    %34 = math.rsqrt %33 : vector<16x1xf32>
    %35 = vector.broadcast %34 : vector<16x1xf32> to vector<16x128xf32>
    %36 = arith.mulf %26, %35 : vector<16x128xf32>
    %37 = vector.broadcast %16 : vector<1x128xf32> to vector<16x128xf32>
    %38 = arith.mulf %36, %37 : vector<16x128xf32>
    %39 = vector.broadcast %18 : vector<1x128xf32> to vector<16x128xf32>
    %40 = arith.addf %38, %39 : vector<16x128xf32>
    %c0_14 = arith.constant 0 : index
    %c0_15 = arith.constant 0 : index
    %c0_16 = arith.constant 0 : index
    %41 = vector.load %arg8[%c0_14, %c0_15, %c0_16] : memref<1x128x768xbf16, #tpu.memory_space<vmem>>, vector<1x128x768xbf16>
    %42 = vector.shape_cast %41 : vector<1x128x768xbf16> to vector<128x768xbf16>
    %43 = arith.truncf %40 : vector<16x128xf32> to vector<16x128xbf16>
    %cst_17 = arith.constant dense<0.000000e+00> : vector<16x768xf32>
    %44 = tpu.matmul %43, %42, %cst_17 {dimension_numbers = #tpu.dot_dimension_numbers<[1], [0], [0], [1], [0, 0, 1, 1], [], []>} : vector<16x128xbf16>, vector<128x768xbf16>, vector<16x768xf32> -> vector<16x768xf32>
    %c0_18 = arith.constant 0 : index
    %c0_19 = arith.constant 0 : index
    %c0_20 = arith.constant 0 : index
    %45 = vector.load %arg9[%c0_18, %c0_19, %c0_20] : memref<1x1x768xf32, #tpu.memory_space<vmem>>, vector<1x1x768xf32>
    %46 = vector.shape_cast %45 : vector<1x1x768xf32> to vector<1x768xf32>
    %47 = vector.broadcast %46 : vector<1x768xf32> to vector<16x768xf32>
    %48 = arith.addf %44, %47 : vector<16x768xf32>
    %49 = vector.shape_cast %48 : vector<16x768xf32> to vector<2x8x768xf32>
    %c0_21 = arith.constant 0 : index
    %c0_22 = arith.constant 0 : index
    %c0_23 = arith.constant 0 : index
    %c0_24 = arith.constant 0 : index
    %50 = vector.load %arg10[%c0_21, %c0_22, %c0_23, %c0_24] : memref<1x2x128x128xbf16, #tpu.memory_space<vmem>>, vector<1x2x128x128xbf16>
    %51 = vector.shape_cast %50 : vector<1x2x128x128xbf16> to vector<2x128x128xbf16>
    %cst_25 = arith.constant 0.000000e+00 : f32
    %52 = vector.broadcast %cst_25 : f32 to vector<16x128xf32>
    %53 = vector.extract_strided_slice %49 {offsets = [0, 0, 0], sizes = [2, 8, 128], strides = [1, 1, 1]} : vector<2x8x768xf32> to vector<2x8x128xf32>
    %54 = vector.extract_strided_slice %49 {offsets = [0, 0, 256], sizes = [2, 8, 128], strides = [1, 1, 1]} : vector<2x8x768xf32> to vector<2x8x128xf32>
    %55 = vector.extract_strided_slice %49 {offsets = [0, 0, 512], sizes = [2, 8, 128], strides = [1, 1, 1]} : vector<2x8x768xf32> to vector<2x8x128xf32>
    %56 = arith.truncf %53 : vector<2x8x128xf32> to vector<2x8x128xbf16>
    %57 = arith.truncf %54 : vector<2x8x128xf32> to vector<2x8x128xbf16>
    "tpu.trace_start"() <{level = 10 : i32, message = "bqd,bkd->bqk"}> : () -> ()
    %cst_26 = arith.constant dense<0.000000e+00> : vector<2x8x8xf32>
    %58 = tpu.matmul %56, %57, %cst_26 {dimension_numbers = #tpu.dot_dimension_numbers<[2], [2], [1], [1], [0, 0, 0, 1, 1, 1], [0], [0]>} : vector<2x8x128xbf16>, vector<2x8x128xbf16>, vector<2x8x8xf32> -> vector<2x8x8xf32>
    "tpu.trace_stop"() : () -> ()
    %cst_27 = arith.constant 2.500000e-01 : f32
    %59 = vector.broadcast %cst_27 : f32 to vector<2x8x8xf32>
    %60 = arith.mulf %58, %59 : vector<2x8x8xf32>
    %61 = vector.broadcast %10 : vector<1x1x8xf32> to vector<2x8x8xf32>
    %62 = arith.addf %60, %61 : vector<2x8x8xf32>
    %cst_28 = arith.constant dense<0xFF800000> : vector<2x8xf32>
    %63 = vector.multi_reduction <maximumf>, %62, %cst_28 [2] : vector<2x8x8xf32> to vector<2x8xf32>
    %64 = vector.shape_cast %63 : vector<2x8xf32> to vector<2x8x1xf32>
    %65 = vector.broadcast %64 : vector<2x8x1xf32> to vector<2x8x8xf32>
    %66 = arith.subf %62, %65 : vector<2x8x8xf32>
    %67 = math.exp %66 : vector<2x8x8xf32>
    %cst_29 = arith.constant dense<0.000000e+00> : vector<2x8xf32>
    %68 = vector.multi_reduction <add>, %67, %cst_29 [2] : vector<2x8x8xf32> to vector<2x8xf32>
    %69 = vector.shape_cast %68 : vector<2x8xf32> to vector<2x8x1xf32>
    %70 = tpu.reciprocal %69 : vector<2x8x1xf32> -> vector<2x8x1xf32>
    %71 = vector.broadcast %70 : vector<2x8x1xf32> to vector<2x8x8xf32>
    %72 = arith.mulf %67, %71 : vector<2x8x8xf32>
    %73 = arith.truncf %72 : vector<2x8x8xf32> to vector<2x8x8xbf16>
    %74 = arith.truncf %55 : vector<2x8x128xf32> to vector<2x8x128xbf16>
    "tpu.trace_start"() <{level = 10 : i32, message = "bqk,bkd->bqd"}> : () -> ()
    %cst_30 = arith.constant dense<0.000000e+00> : vector<2x8x128xf32>
    %75 = tpu.matmul %73, %74, %cst_30 {dimension_numbers = #tpu.dot_dimension_numbers<[2], [1], [1], [2], [0, 0, 0, 1, 1, 2], [0], [0]>} : vector<2x8x8xbf16>, vector<2x8x128xbf16>, vector<2x8x128xf32> -> vector<2x8x128xf32>
    "tpu.trace_stop"() : () -> ()
    %76 = vector.shape_cast %75 : vector<2x8x128xf32> to vector<16x128xf32>
    %77 = vector.extract_strided_slice %51 {offsets = [0, 0, 0], sizes = [1, 128, 128], strides = [1, 1, 1]} : vector<2x128x128xbf16> to vector<1x128x128xbf16>
    %78 = vector.shape_cast %77 : vector<1x128x128xbf16> to vector<128x128xbf16>
    %79 = arith.truncf %76 : vector<16x128xf32> to vector<16x128xbf16>
    %cst_31 = arith.constant dense<0.000000e+00> : vector<16x128xf32>
    %80 = tpu.matmul %79, %78, %cst_31 {dimension_numbers = #tpu.dot_dimension_numbers<[1], [0], [0], [1], [0, 0, 1, 1], [], []>} : vector<16x128xbf16>, vector<128x128xbf16>, vector<16x128xf32> -> vector<16x128xf32>
    %81 = arith.addf %52, %80 : vector<16x128xf32>
    %82 = vector.extract_strided_slice %49 {offsets = [0, 0, 128], sizes = [2, 8, 128], strides = [1, 1, 1]} : vector<2x8x768xf32> to vector<2x8x128xf32>
    %83 = vector.extract_strided_slice %49 {offsets = [0, 0, 384], sizes = [2, 8, 128], strides = [1, 1, 1]} : vector<2x8x768xf32> to vector<2x8x128xf32>
    %84 = vector.extract_strided_slice %49 {offsets = [0, 0, 640], sizes = [2, 8, 128], strides = [1, 1, 1]} : vector<2x8x768xf32> to vector<2x8x128xf32>
    %85 = arith.truncf %82 : vector<2x8x128xf32> to vector<2x8x128xbf16>
    %86 = arith.truncf %83 : vector<2x8x128xf32> to vector<2x8x128xbf16>
    "tpu.trace_start"() <{level = 10 : i32, message = "bqd,bkd->bqk"}> : () -> ()
    %cst_32 = arith.constant dense<0.000000e+00> : vector<2x8x8xf32>
    %87 = tpu.matmul %85, %86, %cst_32 {dimension_numbers = #tpu.dot_dimension_numbers<[2], [2], [1], [1], [0, 0, 0, 1, 1, 1], [0], [0]>} : vector<2x8x128xbf16>, vector<2x8x128xbf16>, vector<2x8x8xf32> -> vector<2x8x8xf32>
    "tpu.trace_stop"() : () -> ()
    %cst_33 = arith.constant 2.500000e-01 : f32
    %88 = vector.broadcast %cst_33 : f32 to vector<2x8x8xf32>
    %89 = arith.mulf %87, %88 : vector<2x8x8xf32>
    %90 = vector.broadcast %10 : vector<1x1x8xf32> to vector<2x8x8xf32>
    %91 = arith.addf %89, %90 : vector<2x8x8xf32>
    %cst_34 = arith.constant dense<0xFF800000> : vector<2x8xf32>
    %92 = vector.multi_reduction <maximumf>, %91, %cst_34 [2] : vector<2x8x8xf32> to vector<2x8xf32>
    %93 = vector.shape_cast %92 : vector<2x8xf32> to vector<2x8x1xf32>
    %94 = vector.broadcast %93 : vector<2x8x1xf32> to vector<2x8x8xf32>
    %95 = arith.subf %91, %94 : vector<2x8x8xf32>
    %96 = math.exp %95 : vector<2x8x8xf32>
    %cst_35 = arith.constant dense<0.000000e+00> : vector<2x8xf32>
    %97 = vector.multi_reduction <add>, %96, %cst_35 [2] : vector<2x8x8xf32> to vector<2x8xf32>
    %98 = vector.shape_cast %97 : vector<2x8xf32> to vector<2x8x1xf32>
    %99 = tpu.reciprocal %98 : vector<2x8x1xf32> -> vector<2x8x1xf32>
    %100 = vector.broadcast %99 : vector<2x8x1xf32> to vector<2x8x8xf32>
    %101 = arith.mulf %96, %100 : vector<2x8x8xf32>
    %102 = arith.truncf %101 : vector<2x8x8xf32> to vector<2x8x8xbf16>
    %103 = arith.truncf %84 : vector<2x8x128xf32> to vector<2x8x128xbf16>
    "tpu.trace_start"() <{level = 10 : i32, message = "bqk,bkd->bqd"}> : () -> ()
    %cst_36 = arith.constant dense<0.000000e+00> : vector<2x8x128xf32>
    %104 = tpu.matmul %102, %103, %cst_36 {dimension_numbers = #tpu.dot_dimension_numbers<[2], [1], [1], [2], [0, 0, 0, 1, 1, 2], [0], [0]>} : vector<2x8x8xbf16>, vector<2x8x128xbf16>, vector<2x8x128xf32> -> vector<2x8x128xf32>
    "tpu.trace_stop"() : () -> ()
    %105 = vector.shape_cast %104 : vector<2x8x128xf32> to vector<16x128xf32>
    %106 = vector.extract_strided_slice %51 {offsets = [1, 0, 0], sizes = [1, 128, 128], strides = [1, 1, 1]} : vector<2x128x128xbf16> to vector<1x128x128xbf16>
    %107 = vector.shape_cast %106 : vector<1x128x128xbf16> to vector<128x128xbf16>
    %108 = arith.truncf %105 : vector<16x128xf32> to vector<16x128xbf16>
    %cst_37 = arith.constant dense<0.000000e+00> : vector<16x128xf32>
    %109 = tpu.matmul %108, %107, %cst_37 {dimension_numbers = #tpu.dot_dimension_numbers<[1], [0], [0], [1], [0, 0, 1, 1], [], []>} : vector<16x128xbf16>, vector<128x128xbf16>, vector<16x128xf32> -> vector<16x128xf32>
    %110 = arith.addf %81, %109 : vector<16x128xf32>
    %111 = arith.addf %14, %110 : vector<16x128xf32>
    %c0_38 = arith.constant 0 : index
    %c0_39 = arith.constant 0 : index
    %c0_40 = arith.constant 0 : index
    %112 = vector.load %arg11[%c0_38, %c0_39, %c0_40] : memref<1x1x128xf32, #tpu.memory_space<vmem>>, vector<1x1x128xf32>
    %113 = vector.shape_cast %112 : vector<1x1x128xf32> to vector<1x128xf32>
    %114 = vector.broadcast %113 : vector<1x128xf32> to vector<16x128xf32>
    %115 = arith.addf %111, %114 : vector<16x128xf32>
    %c0_41 = arith.constant 0 : index
    %c0_42 = arith.constant 0 : index
    %c0_43 = arith.constant 0 : index
    %116 = vector.load %arg12[%c0_41, %c0_42, %c0_43] : memref<1x1x128xf32, #tpu.memory_space<vmem>>, vector<1x1x128xf32>
    %117 = vector.shape_cast %116 : vector<1x1x128xf32> to vector<1x128xf32>
    %c0_44 = arith.constant 0 : index
    %c0_45 = arith.constant 0 : index
    %c0_46 = arith.constant 0 : index
    %118 = vector.load %arg13[%c0_44, %c0_45, %c0_46] : memref<1x1x128xf32, #tpu.memory_space<vmem>>, vector<1x1x128xf32>
    %119 = vector.shape_cast %118 : vector<1x1x128xf32> to vector<1x128xf32>
    %cst_47 = arith.constant dense<0.000000e+00> : vector<16xf32>
    %120 = vector.multi_reduction <add>, %115, %cst_47 [1] : vector<16x128xf32> to vector<16xf32>
    %121 = vector.shape_cast %120 : vector<16xf32> to vector<16x1xf32>
    %cst_48 = arith.constant 3.125000e-02 : f32
    %122 = vector.broadcast %cst_48 : f32 to vector<16x1xf32>
    %123 = arith.mulf %121, %122 : vector<16x1xf32>
    %124 = vector.broadcast %123 : vector<16x1xf32> to vector<16x128xf32>
    %125 = arith.subf %115, %124 : vector<16x128xf32>
    %126 = vector.broadcast %4 : vector<1x128xf32> to vector<16x128xf32>
    %127 = arith.mulf %125, %126 : vector<16x128xf32>
    %128 = arith.mulf %127, %127 : vector<16x128xf32>
    %cst_49 = arith.constant dense<0.000000e+00> : vector<16xf32>
    %129 = vector.multi_reduction <add>, %128, %cst_49 [1] : vector<16x128xf32> to vector<16xf32>
    %130 = vector.shape_cast %129 : vector<16xf32> to vector<16x1xf32>
    %cst_50 = arith.constant 3.125000e-02 : f32
    %131 = vector.broadcast %cst_50 : f32 to vector<16x1xf32>
    %132 = arith.mulf %130, %131 : vector<16x1xf32>
    %cst_51 = arith.constant 9.99999974E-6 : f32
    %133 = vector.broadcast %cst_51 : f32 to vector<16x1xf32>
    %134 = arith.addf %132, %133 : vector<16x1xf32>
    %135 = math.rsqrt %134 : vector<16x1xf32>
    %136 = vector.broadcast %135 : vector<16x1xf32> to vector<16x128xf32>
    %137 = arith.mulf %127, %136 : vector<16x128xf32>
    %138 = vector.broadcast %117 : vector<1x128xf32> to vector<16x128xf32>
    %139 = arith.mulf %137, %138 : vector<16x128xf32>
    %140 = vector.broadcast %119 : vector<1x128xf32> to vector<16x128xf32>
    %141 = arith.addf %139, %140 : vector<16x128xf32>
    %c0_52 = arith.constant 0 : index
    %c0_53 = arith.constant 0 : index
    %c0_54 = arith.constant 0 : index
    %142 = vector.load %arg14[%c0_52, %c0_53, %c0_54] : memref<1x128x128xbf16, #tpu.memory_space<vmem>>, vector<1x128x128xbf16>
    %143 = vector.shape_cast %142 : vector<1x128x128xbf16> to vector<128x128xbf16>
    %144 = arith.truncf %141 : vector<16x128xf32> to vector<16x128xbf16>
    %cst_55 = arith.constant dense<0.000000e+00> : vector<16x128xf32>
    %145 = tpu.matmul %144, %143, %cst_55 {dimension_numbers = #tpu.dot_dimension_numbers<[1], [0], [0], [1], [0, 0, 1, 1], [], []>} : vector<16x128xbf16>, vector<128x128xbf16>, vector<16x128xf32> -> vector<16x128xf32>
    %c0_56 = arith.constant 0 : index
    %c0_57 = arith.constant 0 : index
    %c0_58 = arith.constant 0 : index
    %146 = vector.load %arg15[%c0_56, %c0_57, %c0_58] : memref<1x1x128xf32, #tpu.memory_space<vmem>>, vector<1x1x128xf32>
    %147 = vector.shape_cast %146 : vector<1x1x128xf32> to vector<1x128xf32>
    %148 = vector.broadcast %147 : vector<1x128xf32> to vector<16x128xf32>
    %149 = arith.addf %145, %148 : vector<16x128xf32>
    %cst_59 = arith.constant 1.702000e+00 : f32
    %150 = vector.broadcast %cst_59 : f32 to vector<16x128xf32>
    %151 = arith.mulf %150, %149 : vector<16x128xf32>
    %152 = arith.negf %151 : vector<16x128xf32>
    %153 = math.exp %152 : vector<16x128xf32>
    %cst_60 = arith.constant 1.000000e+00 : f32
    %154 = vector.broadcast %cst_60 : f32 to vector<16x128xf32>
    %155 = arith.addf %154, %153 : vector<16x128xf32>
    %156 = arith.divf %154, %155 : vector<16x128xf32>
    %157 = arith.mulf %149, %156 : vector<16x128xf32>
    %c0_61 = arith.constant 0 : index
    %c0_62 = arith.constant 0 : index
    %c0_63 = arith.constant 0 : index
    %158 = vector.load %arg16[%c0_61, %c0_62, %c0_63] : memref<1x128x128xbf16, #tpu.memory_space<vmem>>, vector<1x128x128xbf16>
    %159 = vector.shape_cast %158 : vector<1x128x128xbf16> to vector<128x128xbf16>
    %160 = arith.truncf %157 : vector<16x128xf32> to vector<16x128xbf16>
    %cst_64 = arith.constant dense<0.000000e+00> : vector<16x128xf32>
    %161 = tpu.matmul %160, %159, %cst_64 {dimension_numbers = #tpu.dot_dimension_numbers<[1], [0], [0], [1], [0, 0, 1, 1], [], []>} : vector<16x128xbf16>, vector<128x128xbf16>, vector<16x128xf32> -> vector<16x128xf32>
    %162 = arith.addf %115, %161 : vector<16x128xf32>
    %c0_65 = arith.constant 0 : index
    %c0_66 = arith.constant 0 : index
    %c0_67 = arith.constant 0 : index
    %163 = vector.load %arg17[%c0_65, %c0_66, %c0_67] : memref<1x1x128xf32, #tpu.memory_space<vmem>>, vector<1x1x128xf32>
    %164 = vector.shape_cast %163 : vector<1x1x128xf32> to vector<1x128xf32>
    %165 = vector.broadcast %164 : vector<1x128xf32> to vector<16x128xf32>
    %166 = arith.addf %162, %165 : vector<16x128xf32>
    %c0_68 = arith.constant 0 : index
    %c0_69 = arith.constant 0 : index
    %167 = vector.load %arg25[%c0_68, %c0_69] : memref<16x128xf32, #tpu.memory_space<vmem>>, vector<16x128xf32>
    tpu.vector_store %arg25[%c0_68, %c0_69], %166 {strides = array<i32>} : memref<16x128xf32, #tpu.memory_space<vmem>>, vector<16x128xf32>,
    %c1_i32 = arith.constant 1 : i32
    %168 = arith.cmpi eq, %arg0, %c1_i32 : i32
    %169 = arith.extui %168 : i1 to i32
    %c0_i32_70 = arith.constant 0 : i32
    %170 = arith.cmpi ne, %169, %c0_i32_70 : i32
    scf.if %170 {
      %c0_71 = arith.constant 0 : index
      %c0_72 = arith.constant 0 : index
      %171 = vector.load %arg18[%c0_71, %c0_72] : memref<1x128xf32, #tpu.memory_space<vmem>>, vector<1x128xf32>
      %c0_73 = arith.constant 0 : index
      %c0_74 = arith.constant 0 : index
      %172 = vector.load %arg19[%c0_73, %c0_74] : memref<1x128xf32, #tpu.memory_space<vmem>>, vector<1x128xf32>
      %cst_75 = arith.constant dense<0.000000e+00> : vector<16xf32>
      %173 = vector.multi_reduction <add>, %166, %cst_75 [1] : vector<16x128xf32> to vector<16xf32>
      %174 = vector.shape_cast %173 : vector<16xf32> to vector<16x1xf32>
      %cst_76 = arith.constant 3.125000e-02 : f32
      %175 = vector.broadcast %cst_76 : f32 to vector<16x1xf32>
      %176 = arith.mulf %174, %175 : vector<16x1xf32>
      %177 = vector.broadcast %176 : vector<16x1xf32> to vector<16x128xf32>
      %178 = arith.subf %166, %177 : vector<16x128xf32>
      %179 = vector.broadcast %4 : vector<1x128xf32> to vector<16x128xf32>
      %180 = arith.mulf %178, %179 : vector<16x128xf32>
      %181 = arith.mulf %180, %180 : vector<16x128xf32>
      %cst_77 = arith.constant dense<0.000000e+00> : vector<16xf32>
      %182 = vector.multi_reduction <add>, %181, %cst_77 [1] : vector<16x128xf32> to vector<16xf32>
      %183 = vector.shape_cast %182 : vector<16xf32> to vector<16x1xf32>
      %cst_78 = arith.constant 3.125000e-02 : f32
      %184 = vector.broadcast %cst_78 : f32 to vector<16x1xf32>
      %185 = arith.mulf %183, %184 : vector<16x1xf32>
      %cst_79 = arith.constant 9.99999974E-6 : f32
      %186 = vector.broadcast %cst_79 : f32 to vector<16x1xf32>
      %187 = arith.addf %185, %186 : vector<16x1xf32>
      %188 = math.rsqrt %187 : vector<16x1xf32>
      %189 = vector.broadcast %188 : vector<16x1xf32> to vector<16x128xf32>
      %190 = arith.mulf %180, %189 : vector<16x128xf32>
      %191 = vector.broadcast %171 : vector<1x128xf32> to vector<16x128xf32>
      %192 = arith.mulf %190, %191 : vector<16x128xf32>
      %193 = vector.broadcast %172 : vector<1x128xf32> to vector<16x128xf32>
      %194 = arith.addf %192, %193 : vector<16x128xf32>
      %c0_80 = arith.constant 0 : index
      %c0_81 = arith.constant 0 : index
      %195 = vector.load %arg20[%c0_80, %c0_81] : memref<128x128xbf16, #tpu.memory_space<vmem>>, vector<128x128xbf16>
      %196 = arith.truncf %194 : vector<16x128xf32> to vector<16x128xbf16>
      %cst_82 = arith.constant dense<0.000000e+00> : vector<16x128xf32>
      %197 = tpu.matmul %196, %195, %cst_82 {dimension_numbers = #tpu.dot_dimension_numbers<[1], [0], [0], [1], [0, 0, 1, 1], [], []>} : vector<16x128xbf16>, vector<128x128xbf16>, vector<16x128xf32> -> vector<16x128xf32>
      %c0_83 = arith.constant 0 : index
      %c0_84 = arith.constant 0 : index
      %198 = vector.load %arg23[%c0_83, %c0_84] : memref<16x128xf32, #tpu.memory_space<vmem>>, vector<16x128xf32>
      tpu.vector_store %arg23[%c0_83, %c0_84], %197 {strides = array<i32>} : memref<16x128xf32, #tpu.memory_space<vmem>>, vector<16x128xf32>,
      %c0_85 = arith.constant 0 : index
      %c0_86 = arith.constant 0 : index
      %199 = vector.load %arg21[%c0_85, %c0_86] : memref<128x128xbf16, #tpu.memory_space<vmem>>, vector<128x128xbf16>
      %200 = arith.truncf %197 : vector<16x128xf32> to vector<16x128xbf16>
      %cst_87 = arith.constant dense<0.000000e+00> : vector<16x128xf32>
      %201 = tpu.matmul %200, %199, %cst_87 {dimension_numbers = #tpu.dot_dimension_numbers<[1], [0], [0], [1], [0, 0, 1, 1], [], []>} : vector<16x128xbf16>, vector<128x128xbf16>, vector<16x128xf32> -> vector<16x128xf32>
      %c0_88 = arith.constant 0 : index
      %c0_89 = arith.constant 0 : index
      %202 = vector.load %arg22[%c0_88, %c0_89] : memref<1x128xf32, #tpu.memory_space<vmem>>, vector<1x128xf32>
      %203 = vector.broadcast %202 : vector<1x128xf32> to vector<16x128xf32>
      %204 = arith.addf %201, %203 : vector<16x128xf32>
      %c0_90 = arith.constant 0 : index
      %c0_91 = arith.constant 0 : index
      %205 = vector.load %arg24[%c0_90, %c0_91] : memref<16x128xf32, #tpu.memory_space<vmem>>, vector<16x128xf32>
      tpu.vector_store %arg24[%c0_90, %c0_91], %204 {strides = array<i32>} : memref<16x128xf32, #tpu.memory_space<vmem>>, vector<16x128xf32>,
    } else {
    }
    return
  }
  func.func @transform_0(%arg0: i32) -> (i32, i32) {
    %c0_i32 = arith.constant 0 : i32
    %c0_i32_0 = arith.constant 0 : i32
    %c0_i32_1 = arith.constant 0 : i32
    return %c0_i32, %c0_i32_0 : i32, i32
  }
  func.func @transform_1(%arg0: i32) -> (i32, i32) {
    %c0_i32 = arith.constant 0 : i32
    %c0_i32_0 = arith.constant 0 : i32
    %c0_i32_1 = arith.constant 0 : i32
    return %c0_i32, %c0_i32_0 : i32, i32
  }
  func.func @transform_2(%arg0: i32) -> (i32, i32) {
    %c0_i32 = arith.constant 0 : i32
    %c0_i32_0 = arith.constant 0 : i32
    %c0_i32_1 = arith.constant 0 : i32
    return %c0_i32, %c0_i32_0 : i32, i32
  }
  func.func @transform_3(%arg0: i32) -> (i32, i32) {
    %c0_i32 = arith.constant 0 : i32
    %c0_i32_0 = arith.constant 0 : i32
    %c0_i32_1 = arith.constant 0 : i32
    return %c0_i32, %c0_i32_0 : i32, i32
  }
  func.func @transform_4(%arg0: i32) -> (i32, i32) {
    %c0_i32 = arith.constant 0 : i32
    %c0_i32_0 = arith.constant 0 : i32
    %c0_i32_1 = arith.constant 0 : i32
    return %c0_i32, %c0_i32_0 : i32, i32
  }
  func.func @transform_5(%arg0: i32) -> (i32, i32, i32) {
    %c0_i32 = arith.constant 0 : i32
    %c0_i32_0 = arith.constant 0 : i32
    %c0_i32_1 = arith.constant 0 : i32
    return %arg0, %c0_i32, %c0_i32_0 : i32, i32, i32
  }
  func.func @transform_6(%arg0: i32) -> (i32, i32, i32) {
    %c0_i32 = arith.constant 0 : i32
    %c0_i32_0 = arith.constant 0 : i32
    %c0_i32_1 = arith.constant 0 : i32
    return %arg0, %c0_i32, %c0_i32_0 : i32, i32, i32
  }
  func.func @transform_7(%arg0: i32) -> (i32, i32, i32) {
    %c0_i32 = arith.constant 0 : i32
    %c0_i32_0 = arith.constant 0 : i32
    %c0_i32_1 = arith.constant 0 : i32
    return %arg0, %c0_i32, %c0_i32_0 : i32, i32, i32
  }
  func.func @transform_8(%arg0: i32) -> (i32, i32, i32) {
    %c0_i32 = arith.constant 0 : i32
    %c0_i32_0 = arith.constant 0 : i32
    %c0_i32_1 = arith.constant 0 : i32
    return %arg0, %c0_i32, %c0_i32_0 : i32, i32, i32
  }
  func.func @transform_9(%arg0: i32) -> (i32, i32, i32, i32) {
    %c0_i32 = arith.constant 0 : i32
    %c0_i32_0 = arith.constant 0 : i32
    %c0_i32_1 = arith.constant 0 : i32
    %c0_i32_2 = arith.constant 0 : i32
    return %arg0, %c0_i32, %c0_i32_0, %c0_i32_1 : i32, i32, i32, i32
  }
  func.func @transform_10(%arg0: i32) -> (i32, i32, i32) {
    %c0_i32 = arith.constant 0 : i32
    %c0_i32_0 = arith.constant 0 : i32
    %c0_i32_1 = arith.constant 0 : i32
    return %arg0, %c0_i32, %c0_i32_0 : i32, i32, i32
  }
  func.func @transform_11(%arg0: i32) -> (i32, i32, i32) {
    %c0_i32 = arith.constant 0 : i32
    %c0_i32_0 = arith.constant 0 : i32
    %c0_i32_1 = arith.constant 0 : i32
    return %arg0, %c0_i32, %c0_i32_0 : i32, i32, i32
  }
  func.func @transform_12(%arg0: i32) -> (i32, i32, i32) {
    %c0_i32 = arith.constant 0 : i32
    %c0_i32_0 = arith.constant 0 : i32
    %c0_i32_1 = arith.constant 0 : i32
    return %arg0, %c0_i32, %c0_i32_0 : i32, i32, i32
  }
  func.func @transform_13(%arg0: i32) -> (i32, i32, i32) {
    %c0_i32 = arith.constant 0 : i32
    %c0_i32_0 = arith.constant 0 : i32
    %c0_i32_1 = arith.constant 0 : i32
    return %arg0, %c0_i32, %c0_i32_0 : i32, i32, i32
  }
  func.func @transform_14(%arg0: i32) -> (i32, i32, i32) {
    %c0_i32 = arith.constant 0 : i32
    %c0_i32_0 = arith.constant 0 : i32
    %c0_i32_1 = arith.constant 0 : i32
    return %arg0, %c0_i32, %c0_i32_0 : i32, i32, i32
  }
  func.func @transform_15(%arg0: i32) -> (i32, i32, i32) {
    %c0_i32 = arith.constant 0 : i32
    %c0_i32_0 = arith.constant 0 : i32
    %c0_i32_1 = arith.constant 0 : i32
    return %arg0, %c0_i32, %c0_i32_0 : i32, i32, i32
  }
  func.func @transform_16(%arg0: i32) -> (i32, i32, i32) {
    %c0_i32 = arith.constant 0 : i32
    %c0_i32_0 = arith.constant 0 : i32
    %c0_i32_1 = arith.constant 0 : i32
    return %arg0, %c0_i32, %c0_i32_0 : i32, i32, i32
  }
  func.func @transform_17(%arg0: i32) -> (i32, i32) {
    %c0_i32 = arith.constant 0 : i32
    %c0_i32_0 = arith.constant 0 : i32
    %c0_i32_1 = arith.constant 0 : i32
    return %c0_i32, %c0_i32_0 : i32, i32
  }
  func.func @transform_18(%arg0: i32) -> (i32, i32) {
    %c0_i32 = arith.constant 0 : i32
    %c0_i32_0 = arith.constant 0 : i32
    %c0_i32_1 = arith.constant 0 : i32
    return %c0_i32, %c0_i32_0 : i32, i32
  }
  func.func @transform_19(%arg0: i32) -> (i32, i32) {
    %c0_i32 = arith.constant 0 : i32
    %c0_i32_0 = arith.constant 0 : i32
    %c0_i32_1 = arith.constant 0 : i32
    return %c0_i32, %c0_i32_0 : i32, i32
  }
  func.func @transform_20(%arg0: i32) -> (i32, i32) {
    %c0_i32 = arith.constant 0 : i32
    %c0_i32_0 = arith.constant 0 : i32
    %c0_i32_1 = arith.constant 0 : i32
    return %c0_i32, %c0_i32_0 : i32, i32
  }
  func.func @transform_21(%arg0: i32) -> (i32, i32) {
    %c0_i32 = arith.constant 0 : i32
    %c0_i32_0 = arith.constant 0 : i32
    %c0_i32_1 = arith.constant 0 : i32
    return %c0_i32, %c0_i32_0 : i32, i32
  }
  func.func @transform_22(%arg0: i32) -> (i32, i32) {
    %c0_i32 = arith.constant 0 : i32
    %c0_i32_0 = arith.constant 0 : i32
    %c0_i32_1 = arith.constant 0 : i32
    return %c0_i32, %c0_i32_0 : i32, i32
  }
  func.func @transform_23(%arg0: i32) -> (i32, i32) {
    %c0_i32 = arith.constant 0 : i32
    %c0_i32_0 = arith.constant 0 : i32
    %c0_i32_1 = arith.constant 0 : i32
    return %c0_i32, %c0_i32_0 : i32, i32
  }
}

</mosaic_0001>

<llo_original>
// kernel: clip_model_forward.1
$region0: #{clip_model_forward.1}
  #allocation0 [shape = 'u32[]', space=smem, size = 0x4, offset = 0x4, fixed_abs, tag = 'smem constant byte address 0x4 - core index']
  #allocation1 [shape = 'u32[144,128]{1,0:T(1,128)}', space=vmem, size = 0x12000, scoped, tag = 'internal scratch']
  #allocation2 [shape = 'f32[16,128]{1,0:T(8,128)}', space=vmem, size = 0x2000, scoped, tag = 'scratch operand']
  %s0 = inlined_call_operand.vmem [shape: bf16[16,256], index: 0, kind: input, shape index: {}]
  %s1 = inlined_call_operand.vmem [shape: f32[16,128], index: 1, kind: input, shape index: {}]
  %s2 = inlined_call_operand.vmem [shape: bf16[256,128], index: 2, kind: input, shape index: {}]
  %s3 = inlined_call_operand.vmem [shape: f32[1,128], index: 3, kind: input, shape index: {}]
  %s4 = inlined_call_operand.hbm [shape: f32[1,128], index: 4, kind: input, shape index: {}]
  %s5 = inlined_call_operand.vmem [shape: f32[2,1,128], index: 5, kind: input, shape index: {}]
  %s6 = inlined_call_operand.vmem [shape: f32[2,1,128], index: 6, kind: input, shape index: {}]
  %s7 = inlined_call_operand.hbm [shape: bf16[2,128,768], index: 7, kind: input, shape index: {}]
  %s8 = inlined_call_operand.vmem [shape: f32[2,1,768], index: 8, kind: input, shape index: {}]
  %s9 = inlined_call_operand.vmem [shape: bf16[2,2,128,128], index: 9, kind: input, shape index: {}]
  %s10 = inlined_call_operand.vmem [shape: f32[2,1,128], index: 10, kind: input, shape index: {}]
  %s11 = inlined_call_operand.vmem [shape: f32[2,1,128], index: 11, kind: input, shape index: {}]
  %s12 = inlined_call_operand.vmem [shape: f32[2,1,128], index: 12, kind: input, shape index: {}]
  %s13 = inlined_call_operand.vmem [shape: bf16[2,128,128], index: 13, kind: input, shape index: {}]
  %s14 = inlined_call_operand.vmem [shape: f32[2,1,128], index: 14, kind: input, shape index: {}]
  %s15 = inlined_call_operand.hbm [shape: bf16[2,128,128], index: 15, kind: input, shape index: {}]
  %s16 = inlined_call_operand.vmem [shape: f32[2,1,128], index: 16, kind: input, shape index: {}]
  %s17 = inlined_call_operand.vmem [shape: f32[1,128], index: 17, kind: input, shape index: {}]
  %s18 = inlined_call_operand.vmem [shape: f32[1,128], index: 18, kind: input, shape index: {}]
  %s19 = inlined_call_operand.vmem [shape: bf16[128,128], index: 19, kind: input, shape index: {}]
  %s20 = inlined_call_operand.hbm [shape: bf16[128,128], index: 20, kind: input, shape index: {}]
  %s21 = inlined_call_operand.vmem [shape: f32[1,128], index: 21, kind: input, shape index: {}]
  %s22 = inlined_call_operand.hbm [shape: f32[16,128], index: 22, kind: output, shape index: {0}]
  %s23 = inlined_call_operand.vmem [shape: f32[16,128], index: 23, kind: output, shape index: {1}]
  %24 = xla_tuple %s22, %s23
  %s25 = sld [smem:[#allocation0]]
  $region153: #{clip_model_forward.1} parent=0
    _
  %s27 = ssub.s32 1, %s25
  %s28 = scalar_select 0, %s27, %s25
  $region1: #{clip_model_forward.1} parent=0
    #allocation3 [shape = 'u8[512]{0}', space=vmem, size = 0x400, scoped, tag = 'input window, operand 4, single buffered']
    #allocation4 [shape = 's32[2]{0}', space=sflag, size = 0x8, scoped, tag = 'scoped memory for clip_model_forward.1']
    #allocation5 [shape = 's32[2]{0}', space=sflag, size = 0x8, scoped, tag = 'scoped memory for clip_model_forward.1']
    #allocation6 [shape = 'u8[393216]{0}', space=vmem, size = 0x60000, scoped, tag = 'input window, operand 7']
    #allocation7 [shape = 's32[2]{0}', space=sflag, size = 0x8, scoped, tag = 'scoped memory for clip_model_forward.1']
    #allocation8 [shape = 'u8[65536]{0}', space=vmem, size = 0x10000, scoped, tag = 'input window, operand 15']
    #allocation9 [shape = 'u8[32768]{0}', space=vmem, size = 0x8000, scoped, tag = 'input window, operand 20, single buffered']
    #allocation10 [shape = 's32[1]{0}', space=sflag, size = 0x4, scoped, tag = 'scoped memory for clip_model_forward.1']
    #allocation11 [shape = 'u8[8192]{0}', space=vmem, size = 0x2000, scoped, tag = 'output window, operand 0, single buffered']
    %29 = vsyncpa [#allocation4], 0
    %30 = vsyncpa [#allocation7], 0
    %s31 = scalar_lea.sflag [#allocation7], 1
    %32 = vsyncpa %s31, 0
    %33 = vsyncpa [#allocation10], 0
    %34 = vsyncpa [#allocation5], 0
    loop: start=0, step=1, limit=4
    $region2: #{clip_model_forward.1} parent=1 // loop_pre_header
      _
    $region3: #{clip_model_forward.1} parent=1 // loop_header
      %s36 = sphi 0, %s40
      %p37 = scmp.ge.s32.totalorder %s36, 4
      %s44 = sphi 0, %s44
      %s46 = sphi 0, %s44
      %s47 = sphi 0, %s46
      %s61 = sphi 0, %s47
      %s65 = sphi 0, %s65
      %s67 = sphi 0, %s65
      %s68 = sphi 0, %s67
      %s82 = sphi 0, %s68
      %s86 = sphi 0, %s86
      %s88 = sphi 0, %s86
      %s89 = sphi 0, %s88
      %s103 = sphi 0, %s89
      %s107 = sphi 0, %s107
      %s109 = sphi 0, %s107
      %s110 = sphi 0, %s109
      %s124 = sphi 0, %s110
      %s128 = sphi 0, %s128
      %s130 = sphi 0, %s128
      %s131 = sphi 0, %s130
      %s145 = sphi 0, %s131
      %s151 = sphi 0, %s153
      %s154 = sphi 0, %s151
      %s155 = sphi 0, %s154
      %s171 = sphi 0, %s155
      %s177 = sphi 0, %s179
      %s180 = sphi 0, %s177
      %s181 = sphi 0, %s180
      %s197 = sphi 0, %s181
      %s203 = sphi 0, %s205
      %s206 = sphi 0, %s203
      %s207 = sphi 0, %s206
      %s223 = sphi 0, %s207
      %s229 = sphi 0, %s231
      %s232 = sphi 0, %s229
      %s233 = sphi 0, %s232
      %s249 = sphi 0, %s233
      %s255 = sphi 0, %s257
      %s258 = sphi 0, %s255
      %s259 = sphi 0, %s258
      %s275 = sphi 0, %s259
      %s281 = sphi 0, %s283
      %s284 = sphi 0, %s281
      %s285 = sphi 0, %s284
      %s301 = sphi 0, %s285
      %s307 = sphi 0, %s309
      %s310 = sphi 0, %s307
      %s311 = sphi 0, %s310
      %s327 = sphi 0, %s311
      %s333 = sphi 0, %s335
      %s336 = sphi 0, %s333
      %s337 = sphi 0, %s336
      %s353 = sphi 0, %s337
      %s359 = sphi 0, %s361
      %s362 = sphi 0, %s359
      %s363 = sphi 0, %s362
      %s379 = sphi 0, %s363
      %s385 = sphi 0, %s387
      %s388 = sphi 0, %s385
      %s389 = sphi 0, %s388
      %s405 = sphi 0, %s389
      %s411 = sphi 0, %s413
      %s414 = sphi 0, %s411
      %s415 = sphi 0, %s414
      %s431 = sphi 0, %s415
      %s437 = sphi 0, %s439
      %s440 = sphi 0, %s437
      %s441 = sphi 0, %s440
      %s457 = sphi 0, %s441
      %s461 = sphi 0, %s461
      %s463 = sphi 0, %s461
      %s464 = sphi 0, %s463
      %s478 = sphi 0, %s464
      %s482 = sphi 0, %s482
      %s484 = sphi 0, %s482
      %s485 = sphi 0, %s484
      %s499 = sphi 0, %s485
      %s503 = sphi 0, %s503
      %s505 = sphi 0, %s503
      %s506 = sphi 0, %s505
      %s520 = sphi 0, %s506
      %s524 = sphi 0, %s524
      %s526 = sphi 0, %s524
      %s527 = sphi 0, %s526
      %s541 = sphi 0, %s527
      %s545 = sphi 0, %s545
      %s547 = sphi 0, %s545
      %s548 = sphi 0, %s547
      %s562 = sphi 0, %s548
      %s566 = sphi 0, %s566
      %s568 = sphi 0, %s566
      %s569 = sphi 0, %s568
      %s583 = sphi 0, %s569
      %s587 = sphi 0, %s587
      %s589 = sphi 0, %s587
      %s590 = sphi 0, %s589
      %s604 = sphi 0, %s590
    $region4: #{clip_model_forward.1} parent=1 // loop_header_branch
      %39 = sbr.rel (%p37) target = $region8
    $region5: #{clip_model_forward.1} parent=1 // loop_body
      %s41 = ssub.s32 %s36, 1
      %s42 = ssub.s32 %s36, 2
      %s43 = sadd.s32 %s36, 1
      %s45 = sadd.s32 %s44, 1
      %p48 = scmp.eq.s32.totalorder %s36, 1
      %p49 = scmp.ne.s32.totalorder %s44, %s46
      %p50 = scmp.eq.s32.totalorder %s36, 0
      %p51 = por %p49, %p50
      %p52 = scmp.ne.s32.totalorder %s44, %s46
      %p53 = scmp.eq.s32.totalorder %s41, 1
      %p54 = por %p52, %p53
      %p55 = scmp.ne.s32.totalorder %s46, %s47
      %p56 = scmp.eq.s32.totalorder %s41, 0
      %p57 = por %p55, %p56
      %p58 = scmp.ne.s32.totalorder %s46, %s47
      %p59 = scmp.eq.s32.totalorder %s42, 1
      %p60 = por %p58, %p59
      %p62 = scmp.ne.s32.totalorder %s47, %s61
      %p63 = scmp.eq.s32.totalorder %s42, 0
      %p64 = por %p62, %p63
      %s66 = sadd.s32 %s65, 1
      %p69 = scmp.eq.s32.totalorder %s36, 1
      %p70 = scmp.ne.s32.totalorder %s65, %s67
      %p71 = scmp.eq.s32.totalorder %s36, 0
      %p72 = por %p70, %p71
      %p73 = scmp.ne.s32.totalorder %s65, %s67
      %p74 = scmp.eq.s32.totalorder %s41, 1
      %p75 = por %p73, %p74
      %p76 = scmp.ne.s32.totalorder %s67, %s68
      %p77 = scmp.eq.s32.totalorder %s41, 0
      %p78 = por %p76, %p77
      %p79 = scmp.ne.s32.totalorder %s67, %s68
      %p80 = scmp.eq.s32.totalorder %s42, 1
      %p81 = por %p79, %p80
      %p83 = scmp.ne.s32.totalorder %s68, %s82
      %p84 = scmp.eq.s32.totalorder %s42, 0
      %p85 = por %p83, %p84
      %s87 = sadd.s32 %s86, 1
      %p90 = scmp.eq.s32.totalorder %s36, 1
      %p91 = scmp.ne.s32.totalorder %s86, %s88
      %p92 = scmp.eq.s32.totalorder %s36, 0
      %p93 = por %p91, %p92
      %p94 = scmp.ne.s32.totalorder %s86, %s88
      %p95 = scmp.eq.s32.totalorder %s41, 1
      %p96 = por %p94, %p95
      %p97 = scmp.ne.s32.totalorder %s88, %s89
      %p98 = scmp.eq.s32.totalorder %s41, 0
      %p99 = por %p97, %p98
      %p100 = scmp.ne.s32.totalorder %s88, %s89
      %p101 = scmp.eq.s32.totalorder %s42, 1
      %p102 = por %p100, %p101
      %p104 = scmp.ne.s32.totalorder %s89, %s103
      %p105 = scmp.eq.s32.totalorder %s42, 0
      %p106 = por %p104, %p105
      %s108 = sadd.s32 %s107, 1
      %p111 = scmp.eq.s32.totalorder %s36, 1
      %p112 = scmp.ne.s32.totalorder %s107, %s109
      %p113 = scmp.eq.s32.totalorder %s36, 0
      %p114 = por %p112, %p113
      %p115 = scmp.ne.s32.totalorder %s107, %s109
      %p116 = scmp.eq.s32.totalorder %s41, 1
      %p117 = por %p115, %p116
      %p118 = scmp.ne.s32.totalorder %s109, %s110
      %p119 = scmp.eq.s32.totalorder %s41, 0
      %p120 = por %p118, %p119
      %p121 = scmp.ne.s32.totalorder %s109, %s110
      %p122 = scmp.eq.s32.totalorder %s42, 1
      %p123 = por %p121, %p122
      %p125 = scmp.ne.s32.totalorder %s110, %s124
      %p126 = scmp.eq.s32.totalorder %s42, 0
      %p127 = por %p125, %p126
      %s129 = sadd.s32 %s128, 1
      %p132 = scmp.eq.s32.totalorder %s36, 1
      %p133 = scmp.ne.s32.totalorder %s128, %s130
      %p134 = scmp.eq.s32.totalorder %s36, 0
      %p135 = por %p133, %p134
      %p136 = scmp.ne.s32.totalorder %s128, %s130
      %p137 = scmp.eq.s32.totalorder %s41, 1
      %p138 = por %p136, %p137
      %p139 = scmp.ne.s32.totalorder %s130, %s131
      %p140 = scmp.eq.s32.totalorder %s41, 0
      %p141 = por %p139, %p140
      %p142 = scmp.ne.s32.totalorder %s130, %s131
      %p143 = scmp.eq.s32.totalorder %s42, 1
      %p144 = por %p142, %p143
      %p146 = scmp.ne.s32.totalorder %s131, %s145
      %p147 = scmp.eq.s32.totalorder %s42, 0
      %p148 = por %p146, %p147
      %s149 = ssub.s32 %s36, %s43
      %p150 = scmp.eq.s32.totalorder %s149, 0
      %s152 = sadd.s32 %s151, 1
      %s153 = scalar_select %p150, %s151, %s152
      %p156 = pneg %p150
      %p157 = scmp.eq.s32.totalorder %s36, 1
      %p158 = por %p156, %p157
      %p159 = scmp.ne.s32.totalorder %s151, %s154
      %p160 = scmp.eq.s32.totalorder %s36, 0
      %p161 = por %p159, %p160
      %p162 = scmp.ne.s32.totalorder %s151, %s154
      %p163 = scmp.eq.s32.totalorder %s41, 1
      %p164 = por %p162, %p163
      %p165 = scmp.ne.s32.totalorder %s154, %s155
      %p166 = scmp.eq.s32.totalorder %s41, 0
      %p167 = por %p165, %p166
      %p168 = scmp.ne.s32.totalorder %s154, %s155
      %p169 = scmp.eq.s32.totalorder %s42, 1
      %p170 = por %p168, %p169
      %p172 = scmp.ne.s32.totalorder %s155, %s171
      %p173 = scmp.eq.s32.totalorder %s42, 0
      %p174 = por %p172, %p173
      %s175 = ssub.s32 %s36, %s43
      %p176 = scmp.eq.s32.totalorder %s175, 0
      %s178 = sadd.s32 %s177, 1
      %s179 = scalar_select %p176, %s177, %s178
      %p182 = pneg %p176
      %p183 = scmp.eq.s32.totalorder %s36, 1
      %p184 = por %p182, %p183
      %p185 = scmp.ne.s32.totalorder %s177, %s180
      %p186 = scmp.eq.s32.totalorder %s36, 0
      %p187 = por %p185, %p186
      %p188 = scmp.ne.s32.totalorder %s177, %s180
      %p189 = scmp.eq.s32.totalorder %s41, 1
      %p190 = por %p188, %p189
      %p191 = scmp.ne.s32.totalorder %s180, %s181
      %p192 = scmp.eq.s32.totalorder %s41, 0
      %p193 = por %p191, %p192
      %p194 = scmp.ne.s32.totalorder %s180, %s181
      %p195 = scmp.eq.s32.totalorder %s42, 1
      %p196 = por %p194, %p195
      %p198 = scmp.ne.s32.totalorder %s181, %s197
      %p199 = scmp.eq.s32.totalorder %s42, 0
      %p200 = por %p198, %p199
      %s201 = ssub.s32 %s36, %s43
      %p202 = scmp.eq.s32.totalorder %s201, 0
      %s204 = sadd.s32 %s203, 1
      %s205 = scalar_select %p202, %s203, %s204
      %p208 = pneg %p202
      %p209 = scmp.eq.s32.totalorder %s36, 1
      %p210 = por %p208, %p209
      %p211 = scmp.ne.s32.totalorder %s203, %s206
      %p212 = scmp.eq.s32.totalorder %s36, 0
      %p213 = por %p211, %p212
      %p214 = scmp.ne.s32.totalorder %s203, %s206
      %p215 = scmp.eq.s32.totalorder %s41, 1
      %p216 = por %p214, %p215
      %p217 = scmp.ne.s32.totalorder %s206, %s207
      %p218 = scmp.eq.s32.totalorder %s41, 0
      %p219 = por %p217, %p218
      %p220 = scmp.ne.s32.totalorder %s206, %s207
      %p221 = scmp.eq.s32.totalorder %s42, 1
      %p222 = por %p220, %p221
      %p224 = scmp.ne.s32.totalorder %s207, %s223
      %p225 = scmp.eq.s32.totalorder %s42, 0
      %p226 = por %p224, %p225
      %s227 = ssub.s32 %s36, %s43
      %p228 = scmp.eq.s32.totalorder %s227, 0
      %s230 = sadd.s32 %s229, 1
      %s231 = scalar_select %p228, %s229, %s230
      %p234 = pneg %p228
      %p235 = scmp.eq.s32.totalorder %s36, 1
      %p236 = por %p234, %p235
      %p237 = scmp.ne.s32.totalorder %s229, %s232
      %p238 = scmp.eq.s32.totalorder %s36, 0
      %p239 = por %p237, %p238
      %p240 = scmp.ne.s32.totalorder %s229, %s232
      %p241 = scmp.eq.s32.totalorder %s41, 1
      %p242 = por %p240, %p241
      %p243 = scmp.ne.s32.totalorder %s232, %s233
      %p244 = scmp.eq.s32.totalorder %s41, 0
      %p245 = por %p243, %p244
      %p246 = scmp.ne.s32.totalorder %s232, %s233
      %p247 = scmp.eq.s32.totalorder %s42, 1
      %p248 = por %p246, %p247
      %p250 = scmp.ne.s32.totalorder %s233, %s249
      %p251 = scmp.eq.s32.totalorder %s42, 0
      %p252 = por %p250, %p251
      %s253 = ssub.s32 %s36, %s43
      %p254 = scmp.eq.s32.totalorder %s253, 0
      %s256 = sadd.s32 %s255, 1
      %s257 = scalar_select %p254, %s255, %s256
      %p260 = pneg %p254
      %p261 = scmp.eq.s32.totalorder %s36, 1
      %p262 = por %p260, %p261
      %p263 = scmp.ne.s32.totalorder %s255, %s258
      %p264 = scmp.eq.s32.totalorder %s36, 0
      %p265 = por %p263, %p264
      %p266 = scmp.ne.s32.totalorder %s255, %s258
      %p267 = scmp.eq.s32.totalorder %s41, 1
      %p268 = por %p266, %p267
      %p269 = scmp.ne.s32.totalorder %s258, %s259
      %p270 = scmp.eq.s32.totalorder %s41, 0
      %p271 = por %p269, %p270
      %p272 = scmp.ne.s32.totalorder %s258, %s259
      %p273 = scmp.eq.s32.totalorder %s42, 1
      %p274 = por %p272, %p273
      %p276 = scmp.ne.s32.totalorder %s259, %s275
      %p277 = scmp.eq.s32.totalorder %s42, 0
      %p278 = por %p276, %p277
      %s279 = ssub.s32 %s36, %s43
      %p280 = scmp.eq.s32.totalorder %s279, 0
      %s282 = sadd.s32 %s281, 1
      %s283 = scalar_select %p280, %s281, %s282
      %p286 = pneg %p280
      %p287 = scmp.eq.s32.totalorder %s36, 1
      %p288 = por %p286, %p287
      %p289 = scmp.ne.s32.totalorder %s281, %s284
      %p290 = scmp.eq.s32.totalorder %s36, 0
      %p291 = por %p289, %p290
      %p292 = scmp.ne.s32.totalorder %s281, %s284
      %p293 = scmp.eq.s32.totalorder %s41, 1
      %p294 = por %p292, %p293
      %p295 = scmp.ne.s32.totalorder %s284, %s285
      %p296 = scmp.eq.s32.totalorder %s41, 0
      %p297 = por %p295, %p296
      %p298 = scmp.ne.s32.totalorder %s284, %s285
      %p299 = scmp.eq.s32.totalorder %s42, 1
      %p300 = por %p298, %p299
      %p302 = scmp.ne.s32.totalorder %s285, %s301
      %p303 = scmp.eq.s32.totalorder %s42, 0
      %p304 = por %p302, %p303
      %s305 = ssub.s32 %s36, %s43
      %p306 = scmp.eq.s32.totalorder %s305, 0
      %s308 = sadd.s32 %s307, 1
      %s309 = scalar_select %p306, %s307, %s308
      %p312 = pneg %p306
      %p313 = scmp.eq.s32.totalorder %s36, 1
      %p314 = por %p312, %p313
      %p315 = scmp.ne.s32.totalorder %s307, %s310
      %p316 = scmp.eq.s32.totalorder %s36, 0
      %p317 = por %p315, %p316
      %p318 = scmp.ne.s32.totalorder %s307, %s310
      %p319 = scmp.eq.s32.totalorder %s41, 1
      %p320 = por %p318, %p319
      %p321 = scmp.ne.s32.totalorder %s310, %s311
      %p322 = scmp.eq.s32.totalorder %s41, 0
      %p323 = por %p321, %p322
      %p324 = scmp.ne.s32.totalorder %s310, %s311
      %p325 = scmp.eq.s32.totalorder %s42, 1
      %p326 = por %p324, %p325
      %p328 = scmp.ne.s32.totalorder %s311, %s327
      %p329 = scmp.eq.s32.totalorder %s42, 0
      %p330 = por %p328, %p329
      %s331 = ssub.s32 %s36, %s43
      %p332 = scmp.eq.s32.totalorder %s331, 0
      %s334 = sadd.s32 %s333, 1
      %s335 = scalar_select %p332, %s333, %s334
      %p338 = pneg %p332
      %p339 = scmp.eq.s32.totalorder %s36, 1
      %p340 = por %p338, %p339
      %p341 = scmp.ne.s32.totalorder %s333, %s336
      %p342 = scmp.eq.s32.totalorder %s36, 0
      %p343 = por %p341, %p342
      %p344 = scmp.ne.s32.totalorder %s333, %s336
      %p345 = scmp.eq.s32.totalorder %s41, 1
      %p346 = por %p344, %p345
      %p347 = scmp.ne.s32.totalorder %s336, %s337
      %p348 = scmp.eq.s32.totalorder %s41, 0
      %p349 = por %p347, %p348
      %p350 = scmp.ne.s32.totalorder %s336, %s337
      %p351 = scmp.eq.s32.totalorder %s42, 1
      %p352 = por %p350, %p351
      %p354 = scmp.ne.s32.totalorder %s337, %s353
      %p355 = scmp.eq.s32.totalorder %s42, 0
      %p356 = por %p354, %p355
      %s357 = ssub.s32 %s36, %s43
      %p358 = scmp.eq.s32.totalorder %s357, 0
      %s360 = sadd.s32 %s359, 1
      %s361 = scalar_select %p358, %s359, %s360
      %p364 = pneg %p358
      %p365 = scmp.eq.s32.totalorder %s36, 1
      %p366 = por %p364, %p365
      %p367 = scmp.ne.s32.totalorder %s359, %s362
      %p368 = scmp.eq.s32.totalorder %s36, 0
      %p369 = por %p367, %p368
      %p370 = scmp.ne.s32.totalorder %s359, %s362
      %p371 = scmp.eq.s32.totalorder %s41, 1
      %p372 = por %p370, %p371
      %p373 = scmp.ne.s32.totalorder %s362, %s363
      %p374 = scmp.eq.s32.totalorder %s41, 0
      %p375 = por %p373, %p374
      %p376 = scmp.ne.s32.totalorder %s362, %s363
      %p377 = scmp.eq.s32.totalorder %s42, 1
      %p378 = por %p376, %p377
      %p380 = scmp.ne.s32.totalorder %s363, %s379
      %p381 = scmp.eq.s32.totalorder %s42, 0
      %p382 = por %p380, %p381
      %s383 = ssub.s32 %s36, %s43
      %p384 = scmp.eq.s32.totalorder %s383, 0
      %s386 = sadd.s32 %s385, 1
      %s387 = scalar_select %p384, %s385, %s386
      %p390 = pneg %p384
      %p391 = scmp.eq.s32.totalorder %s36, 1
      %p392 = por %p390, %p391
      %p393 = scmp.ne.s32.totalorder %s385, %s388
      %p394 = scmp.eq.s32.totalorder %s36, 0
      %p395 = por %p393, %p394
      %p396 = scmp.ne.s32.totalorder %s385, %s388
      %p397 = scmp.eq.s32.totalorder %s41, 1
      %p398 = por %p396, %p397
      %p399 = scmp.ne.s32.totalorder %s388, %s389
      %p400 = scmp.eq.s32.totalorder %s41, 0
      %p401 = por %p399, %p400
      %p402 = scmp.ne.s32.totalorder %s388, %s389
      %p403 = scmp.eq.s32.totalorder %s42, 1
      %p404 = por %p402, %p403
      %p406 = scmp.ne.s32.totalorder %s389, %s405
      %p407 = scmp.eq.s32.totalorder %s42, 0
      %p408 = por %p406, %p407
      %s409 = ssub.s32 %s36, %s43
      %p410 = scmp.eq.s32.totalorder %s409, 0
      %s412 = sadd.s32 %s411, 1
      %s413 = scalar_select %p410, %s411, %s412
      %p416 = pneg %p410
      %p417 = scmp.eq.s32.totalorder %s36, 1
      %p418 = por %p416, %p417
      %p419 = scmp.ne.s32.totalorder %s411, %s414
      %p420 = scmp.eq.s32.totalorder %s36, 0
      %p421 = por %p419, %p420
      %p422 = scmp.ne.s32.totalorder %s411, %s414
      %p423 = scmp.eq.s32.totalorder %s41, 1
      %p424 = por %p422, %p423
      %p425 = scmp.ne.s32.totalorder %s414, %s415
      %p426 = scmp.eq.s32.totalorder %s41, 0
      %p427 = por %p425, %p426
      %p428 = scmp.ne.s32.totalorder %s414, %s415
      %p429 = scmp.eq.s32.totalorder %s42, 1
      %p430 = por %p428, %p429
      %p432 = scmp.ne.s32.totalorder %s415, %s431
      %p433 = scmp.eq.s32.totalorder %s42, 0
      %p434 = por %p432, %p433
      %s435 = ssub.s32 %s36, %s43
      %p436 = scmp.eq.s32.totalorder %s435, 0
      %s438 = sadd.s32 %s437, 1
      %s439 = scalar_select %p436, %s437, %s438
      %p442 = pneg %p436
      %p443 = scmp.eq.s32.totalorder %s36, 1
      %p444 = por %p442, %p443
      %p445 = scmp.ne.s32.totalorder %s437, %s440
      %p446 = scmp.eq.s32.totalorder %s36, 0
      %p447 = por %p445, %p446
      %p448 = scmp.ne.s32.totalorder %s437, %s440
      %p449 = scmp.eq.s32.totalorder %s41, 1
      %p450 = por %p448, %p449
      %p451 = scmp.ne.s32.totalorder %s440, %s441
      %p452 = scmp.eq.s32.totalorder %s41, 0
      %p453 = por %p451, %p452
      %p454 = scmp.ne.s32.totalorder %s440, %s441
      %p455 = scmp.eq.s32.totalorder %s42, 1
      %p456 = por %p454, %p455
      %p458 = scmp.ne.s32.totalorder %s441, %s457
      %p459 = scmp.eq.s32.totalorder %s42, 0
      %p460 = por %p458, %p459
      %s462 = sadd.s32 %s461, 1
      %p465 = scmp.eq.s32.totalorder %s36, 1
      %p466 = scmp.ne.s32.totalorder %s461, %s463
      %p467 = scmp.eq.s32.totalorder %s36, 0
      %p468 = por %p466, %p467
      %p469 = scmp.ne.s32.totalorder %s461, %s463
      %p470 = scmp.eq.s32.totalorder %s41, 1
      %p471 = por %p469, %p470
      %p472 = scmp.ne.s32.totalorder %s463, %s464
      %p473 = scmp.eq.s32.totalorder %s41, 0
      %p474 = por %p472, %p473
      %p475 = scmp.ne.s32.totalorder %s463, %s464
      %p476 = scmp.eq.s32.totalorder %s42, 1
      %p477 = por %p475, %p476
      %p479 = scmp.ne.s32.totalorder %s464, %s478
      %p480 = scmp.eq.s32.totalorder %s42, 0
      %p481 = por %p479, %p480
      %s483 = sadd.s32 %s482, 1
      %p486 = scmp.eq.s32.totalorder %s36, 1
      %p487 = scmp.ne.s32.totalorder %s482, %s484
      %p488 = scmp.eq.s32.totalorder %s36, 0
      %p489 = por %p487, %p488
      %p490 = scmp.ne.s32.totalorder %s482, %s484
      %p491 = scmp.eq.s32.totalorder %s41, 1
      %p492 = por %p490, %p491
      %p493 = scmp.ne.s32.totalorder %s484, %s485
      %p494 = scmp.eq.s32.totalorder %s41, 0
      %p495 = por %p493, %p494
      %p496 = scmp.ne.s32.totalorder %s484, %s485
      %p497 = scmp.eq.s32.totalorder %s42, 1
      %p498 = por %p496, %p497
      %p500 = scmp.ne.s32.totalorder %s485, %s499
      %p501 = scmp.eq.s32.totalorder %s42, 0
      %p502 = por %p500, %p501
      %s504 = sadd.s32 %s503, 1
      %p507 = scmp.eq.s32.totalorder %s36, 1
      %p508 = scmp.ne.s32.totalorder %s503, %s505
      %p509 = scmp.eq.s32.totalorder %s36, 0
      %p510 = por %p508, %p509
      %p511 = scmp.ne.s32.totalorder %s503, %s505
      %p512 = scmp.eq.s32.totalorder %s41, 1
      %p513 = por %p511, %p512
      %p514 = scmp.ne.s32.totalorder %s505, %s506
      %p515 = scmp.eq.s32.totalorder %s41, 0
      %p516 = por %p514, %p515
      %p517 = scmp.ne.s32.totalorder %s505, %s506
      %p518 = scmp.eq.s32.totalorder %s42, 1
      %p519 = por %p517, %p518
      %p521 = scmp.ne.s32.totalorder %s506, %s520
      %p522 = scmp.eq.s32.totalorder %s42, 0
      %p523 = por %p521, %p522
      %s525 = sadd.s32 %s524, 1
      %p528 = scmp.eq.s32.totalorder %s36, 1
      %p529 = scmp.ne.s32.totalorder %s524, %s526
      %p530 = scmp.eq.s32.totalorder %s36, 0
      %p531 = por %p529, %p530
      %p532 = scmp.ne.s32.totalorder %s524, %s526
      %p533 = scmp.eq.s32.totalorder %s41, 1
      %p534 = por %p532, %p533
      %p535 = scmp.ne.s32.totalorder %s526, %s527
      %p536 = scmp.eq.s32.totalorder %s41, 0
      %p537 = por %p535, %p536
      %p538 = scmp.ne.s32.totalorder %s526, %s527
      %p539 = scmp.eq.s32.totalorder %s42, 1
      %p540 = por %p538, %p539
      %p542 = scmp.ne.s32.totalorder %s527, %s541
      %p543 = scmp.eq.s32.totalorder %s42, 0
      %p544 = por %p542, %p543
      %s546 = sadd.s32 %s545, 1
      %p549 = scmp.eq.s32.totalorder %s36, 1
      %p550 = scmp.ne.s32.totalorder %s545, %s547
      %p551 = scmp.eq.s32.totalorder %s36, 0
      %p552 = por %p550, %p551
      %p553 = scmp.ne.s32.totalorder %s545, %s547
      %p554 = scmp.eq.s32.totalorder %s41, 1
      %p555 = por %p553, %p554
      %p556 = scmp.ne.s32.totalorder %s547, %s548
      %p557 = scmp.eq.s32.totalorder %s41, 0
      %p558 = por %p556, %p557
      %p559 = scmp.ne.s32.totalorder %s547, %s548
      %p560 = scmp.eq.s32.totalorder %s42, 1
      %p561 = por %p559, %p560
      %p563 = scmp.ne.s32.totalorder %s548, %s562
      %p564 = scmp.eq.s32.totalorder %s42, 0
      %p565 = por %p563, %p564
      %s567 = sadd.s32 %s566, 1
      %p570 = scmp.eq.s32.totalorder %s36, 1
      %p571 = scmp.ne.s32.totalorder %s566, %s568
      %p572 = scmp.eq.s32.totalorder %s36, 0
      %p573 = por %p571, %p572
      %p574 = scmp.ne.s32.totalorder %s566, %s568
      %p575 = scmp.eq.s32.totalorder %s41, 1
      %p576 = por %p574, %p575
      %p577 = scmp.ne.s32.totalorder %s568, %s569
      %p578 = scmp.eq.s32.totalorder %s41, 0
      %p579 = por %p577, %p578
      %p580 = scmp.ne.s32.totalorder %s568, %s569
      %p581 = scmp.eq.s32.totalorder %s42, 1
      %p582 = por %p580, %p581
      %p584 = scmp.ne.s32.totalorder %s569, %s583
      %p585 = scmp.eq.s32.totalorder %s42, 0
      %p586 = por %p584, %p585
      %s588 = sadd.s32 %s587, 1
      %p591 = scmp.eq.s32.totalorder %s36, 1
      %p592 = scmp.ne.s32.totalorder %s587, %s589
      %p593 = scmp.eq.s32.totalorder %s36, 0
      %p594 = por %p592, %p593
      %p595 = scmp.ne.s32.totalorder %s587, %s589
      %p596 = scmp.eq.s32.totalorder %s41, 1
      %p597 = por %p595, %p596
      %p598 = scmp.ne.s32.totalorder %s589, %s590
      %p599 = scmp.eq.s32.totalorder %s41, 0
      %p600 = por %p598, %p599
      %p601 = scmp.ne.s32.totalorder %s589, %s590
      %p602 = scmp.eq.s32.totalorder %s42, 1
      %p603 = por %p601, %p602
      %p605 = scmp.ne.s32.totalorder %s590, %s604
      %p606 = scmp.eq.s32.totalorder %s42, 0
      %p607 = por %p605, %p606
      %p608 = scmp.le.s32.totalorder 1, %s36
      %p609 = scmp.lt.s32.totalorder %s36, 3
      %p610 = pnand %p608, %p609
      %p611 = pneg %p610
      // Predicated region
      $region9: #{clip_model_forward.1} parent=5 // pred_check
        _
      $region10: #{clip_model_forward.1} parent=5 // pred_check_branch
        %613 = sbr.rel (%p610) target = $region12
      $region11: #{clip_model_forward.1} parent=5 // pred_region
        %s614 = ssub.s32 %s36, 1
        // Predicated region
        $region13: #{clip_model_forward.1} parent=11 // pred_check
          %p615 = pneg %p57
        $region14: #{clip_model_forward.1} parent=11 // pred_check_branch
          %617 = sbr.rel (%p615) target = $region16
        $region15: #{clip_model_forward.1} parent=11 // pred_region
          _
        $region16: #{clip_model_forward.1} parent=11 // pred_fallthru
          _
        // Predicated region
        $region17: #{clip_model_forward.1} parent=11 // pred_check
          %p618 = pneg %p78
        $region18: #{clip_model_forward.1} parent=11 // pred_check_branch
          %620 = sbr.rel (%p618) target = $region20
        $region19: #{clip_model_forward.1} parent=11 // pred_region
          _
        $region20: #{clip_model_forward.1} parent=11 // pred_fallthru
          _
        // Predicated region
        $region21: #{clip_model_forward.1} parent=11 // pred_check
          %p621 = pneg %p99
        $region22: #{clip_model_forward.1} parent=11 // pred_check_branch
          %623 = sbr.rel (%p621) target = $region24
        $region23: #{clip_model_forward.1} parent=11 // pred_region
          _
        $region24: #{clip_model_forward.1} parent=11 // pred_fallthru
          _
        // Predicated region
        $region25: #{clip_model_forward.1} parent=11 // pred_check
          %p624 = pneg %p120
        $region26: #{clip_model_forward.1} parent=11 // pred_check_branch
          %626 = sbr.rel (%p624) target = $region28
        $region27: #{clip_model_forward.1} parent=11 // pred_region
          _
        $region28: #{clip_model_forward.1} parent=11 // pred_fallthru
          _
        // Predicated region
        $region29: #{clip_model_forward.1} parent=11 // pred_check
          %p627 = pneg %p141
        $region30: #{clip_model_forward.1} parent=11 // pred_check_branch
          %629 = sbr.rel (%p627) target = $region32
        $region31: #{clip_model_forward.1} parent=11 // pred_region
          %s631 = ssub.s32 16, 16
          %632 = vsyncadd [#allocation4], %s631
          %s634 = sshll.u32 [#allocation3], 4
          %s635 = int_to_ptr.vmem [resolvable:$true] %s634
          %637 = dma.hbm_to_vmem [thread:$0]  %s4, 16, %s635, [#allocation4]
        $region32: #{clip_model_forward.1} parent=11 // pred_fallthru
          _
        // Predicated region
        $region33: #{clip_model_forward.1} parent=11 // pred_check
          %p638 = pneg %p474
        $region34: #{clip_model_forward.1} parent=11 // pred_check_branch
          %640 = sbr.rel (%p638) target = $region36
        $region35: #{clip_model_forward.1} parent=11 // pred_region
          _
        $region36: #{clip_model_forward.1} parent=11 // pred_fallthru
          _
        // Predicated region
        $region37: #{clip_model_forward.1} parent=11 // pred_check
          %p641 = pneg %p495
        $region38: #{clip_model_forward.1} parent=11 // pred_check_branch
          %643 = sbr.rel (%p641) target = $region40
        $region39: #{clip_model_forward.1} parent=11 // pred_region
          _
        $region40: #{clip_model_forward.1} parent=11 // pred_fallthru
          _
        // Predicated region
        $region41: #{clip_model_forward.1} parent=11 // pred_check
          %p644 = pneg %p516
        $region42: #{clip_model_forward.1} parent=11 // pred_check_branch
          %646 = sbr.rel (%p644) target = $region44
        $region43: #{clip_model_forward.1} parent=11 // pred_region
          _
        $region44: #{clip_model_forward.1} parent=11 // pred_fallthru
          _
        // Predicated region
        $region45: #{clip_model_forward.1} parent=11 // pred_check
          %p647 = pneg %p537
        $region46: #{clip_model_forward.1} parent=11 // pred_check_branch
          %649 = sbr.rel (%p647) target = $region48
        $region47: #{clip_model_forward.1} parent=11 // pred_region
          %s651 = ssub.s32 1024, 1024
          %652 = vsyncadd [#allocation10], %s651
          %s653 = sshll.u32 [#allocation9], 4
          %s654 = int_to_ptr.vmem [resolvable:$true] %s653
          %659 = dma.hbm_to_vmem [thread:$0]  %s20, 1024, %s654, [#allocation10], 64, 64, 4
        $region48: #{clip_model_forward.1} parent=11 // pred_fallthru
          _
        // Predicated region
        $region49: #{clip_model_forward.1} parent=11 // pred_check
          %p660 = pneg %p558
        $region50: #{clip_model_forward.1} parent=11 // pred_check_branch
          %662 = sbr.rel (%p660) target = $region52
        $region51: #{clip_model_forward.1} parent=11 // pred_region
          _
        $region52: #{clip_model_forward.1} parent=11 // pred_fallthru
          _
      $region12: #{clip_model_forward.1} parent=5 // pred_fallthru
        _
      %p663 = scmp.lt.s32.totalorder %s36, 2
      // Predicated region
      $region53: #{clip_model_forward.1} parent=5 // pred_check
        %p664 = pneg %p663
      $region54: #{clip_model_forward.1} parent=5 // pred_check_branch
        %666 = sbr.rel (%p664) target = $region56
      $region55: #{clip_model_forward.1} parent=5 // pred_region
        // Predicated region
        $region57: #{clip_model_forward.1} parent=55 // pred_check
          %p667 = pneg %p161
        $region58: #{clip_model_forward.1} parent=55 // pred_check_branch
          %669 = sbr.rel (%p667) target = $region60
        $region59: #{clip_model_forward.1} parent=55 // pred_region
          %p670 = scmp.lt.s32.totalorder %s36, 1
          %s671 = scalar_select %p670, %s36, 1
          %s672 = scalar_lea.vmem %s5, %s671
        $region60: #{clip_model_forward.1} parent=55 // pred_fallthru
          _
        // Predicated region
        $region61: #{clip_model_forward.1} parent=55 // pred_check
          %p673 = pneg %p187
        $region62: #{clip_model_forward.1} parent=55 // pred_check_branch
          %675 = sbr.rel (%p673) target = $region64
        $region63: #{clip_model_forward.1} parent=55 // pred_region
          %p676 = scmp.lt.s32.totalorder %s36, 1
          %s677 = scalar_select %p676, %s36, 1
          %s678 = scalar_lea.vmem %s6, %s677
        $region64: #{clip_model_forward.1} parent=55 // pred_fallthru
          _
        // Predicated region
        $region65: #{clip_model_forward.1} parent=55 // pred_check
          %p679 = pneg %p213
        $region66: #{clip_model_forward.1} parent=55 // pred_check_branch
          %681 = sbr.rel (%p679) target = $region68
        $region67: #{clip_model_forward.1} parent=55 // pred_region
          %s682 = sand.u32 %s36, 1
          %s683 = scalar_lea.sflag [#allocation7], %s682
          %s684 = sand.u32 %s203, 1
          %s685 = smul.addr %s684, 384
          %s686 = scalar_lea.vmem [#allocation6], %s685
          %s688 = ssub.s32 6144, 6144
          %689 = vsyncadd %s683, %s688
          %s690 = smul.addr %s36, 96
          %s691 = smul.addr %s690, 64
          %s692 = scalar_lea.hbm %s7, %s691
          %s693 = sshll.u32 %s686, 4
          %s694 = int_to_ptr.vmem [resolvable:$true] %s693
          %699 = dma.hbm_to_vmem [thread:$0]  %s692, 6144, %s694, %s683, 384, 384, 24
        $region68: #{clip_model_forward.1} parent=55 // pred_fallthru
          _
        // Predicated region
        $region69: #{clip_model_forward.1} parent=55 // pred_check
          %p700 = pneg %p239
        $region70: #{clip_model_forward.1} parent=55 // pred_check_branch
          %702 = sbr.rel (%p700) target = $region72
        $region71: #{clip_model_forward.1} parent=55 // pred_region
          %p703 = scmp.lt.s32.totalorder %s36, 1
          %s704 = scalar_select %p703, %s36, 1
          %s705 = smul.addr %s704, 6
          %s706 = scalar_lea.vmem %s8, %s705
        $region72: #{clip_model_forward.1} parent=55 // pred_fallthru
          _
        // Predicated region
        $region73: #{clip_model_forward.1} parent=55 // pred_check
          %p707 = pneg %p265
        $region74: #{clip_model_forward.1} parent=55 // pred_check_branch
          %709 = sbr.rel (%p707) target = $region76
        $region75: #{clip_model_forward.1} parent=55 // pred_region
          %p710 = scmp.lt.s32.totalorder %s36, 1
          %s711 = scalar_select %p710, %s36, 1
          %s712 = smul.addr %s711, 32
          %s713 = smul.addr %s712, 4
          %s714 = scalar_lea.vmem %s9, %s713
        $region76: #{clip_model_forward.1} parent=55 // pred_fallthru
          _
        // Predicated region
        $region77: #{clip_model_forward.1} parent=55 // pred_check
          %p715 = pneg %p291
        $region78: #{clip_model_forward.1} parent=55 // pred_check_branch
          %717 = sbr.rel (%p715) target = $region80
        $region79: #{clip_model_forward.1} parent=55 // pred_region
          %p718 = scmp.lt.s32.totalorder %s36, 1
          %s719 = scalar_select %p718, %s36, 1
          %s720 = scalar_lea.vmem %s10, %s719
        $region80: #{clip_model_forward.1} parent=55 // pred_fallthru
          _
        // Predicated region
        $region81: #{clip_model_forward.1} parent=55 // pred_check
          %p721 = pneg %p317
        $region82: #{clip_model_forward.1} parent=55 // pred_check_branch
          %723 = sbr.rel (%p721) target = $region84
        $region83: #{clip_model_forward.1} parent=55 // pred_region
          %p724 = scmp.lt.s32.totalorder %s36, 1
          %s725 = scalar_select %p724, %s36, 1
          %s726 = scalar_lea.vmem %s11, %s725
        $region84: #{clip_model_forward.1} parent=55 // pred_fallthru
          _
        // Predicated region
        $region85: #{clip_model_forward.1} parent=55 // pred_check
          %p727 = pneg %p343
        $region86: #{clip_model_forward.1} parent=55 // pred_check_branch
          %729 = sbr.rel (%p727) target = $region88
        $region87: #{clip_model_forward.1} parent=55 // pred_region
          %p730 = scmp.lt.s32.totalorder %s36, 1
          %s731 = scalar_select %p730, %s36, 1
          %s732 = scalar_lea.vmem %s12, %s731
        $region88: #{clip_model_forward.1} parent=55 // pred_fallthru
          _
        // Predicated region
        $region89: #{clip_model_forward.1} parent=55 // pred_check
          %p733 = pneg %p369
        $region90: #{clip_model_forward.1} parent=55 // pred_check_branch
          %735 = sbr.rel (%p733) target = $region92
        $region91: #{clip_model_forward.1} parent=55 // pred_region
          %p736 = scmp.lt.s32.totalorder %s36, 1
          %s737 = scalar_select %p736, %s36, 1
          %s738 = smul.addr %s737, 16
          %s739 = smul.addr %s738, 4
          %s740 = scalar_lea.vmem %s13, %s739
        $region92: #{clip_model_forward.1} parent=55 // pred_fallthru
          _
        // Predicated region
        $region93: #{clip_model_forward.1} parent=55 // pred_check
          %p741 = pneg %p395
        $region94: #{clip_model_forward.1} parent=55 // pred_check_branch
          %743 = sbr.rel (%p741) target = $region96
        $region95: #{clip_model_forward.1} parent=55 // pred_region
          %p744 = scmp.lt.s32.totalorder %s36, 1
          %s745 = scalar_select %p744, %s36, 1
          %s746 = scalar_lea.vmem %s14, %s745
        $region96: #{clip_model_forward.1} parent=55 // pred_fallthru
          _
        // Predicated region
        $region97: #{clip_model_forward.1} parent=55 // pred_check
          %p747 = pneg %p421
        $region98: #{clip_model_forward.1} parent=55 // pred_check_branch
          %749 = sbr.rel (%p747) target = $region100
        $region99: #{clip_model_forward.1} parent=55 // pred_region
          %s750 = sand.u32 %s36, 1
          %s751 = scalar_lea.sflag [#allocation7], %s750
          %s752 = sand.u32 %s411, 1
          %s753 = smul.addr %s752, 64
          %s754 = scalar_lea.vmem [#allocation8], %s753
          %s756 = ssub.s32 1024, 1024
          %757 = vsyncadd %s751, %s756
          %s758 = smul.addr %s36, 16
          %s759 = smul.addr %s758, 64
          %s760 = scalar_lea.hbm %s15, %s759
          %s761 = sshll.u32 %s754, 4
          %s762 = int_to_ptr.vmem [resolvable:$true] %s761
          %767 = dma.hbm_to_vmem [thread:$0]  %s760, 1024, %s762, %s751, 64, 64, 4
        $region100: #{clip_model_forward.1} parent=55 // pred_fallthru
          _
        // Predicated region
        $region101: #{clip_model_forward.1} parent=55 // pred_check
          %p768 = pneg %p447
        $region102: #{clip_model_forward.1} parent=55 // pred_check_branch
          %770 = sbr.rel (%p768) target = $region104
        $region103: #{clip_model_forward.1} parent=55 // pred_region
          %p771 = scmp.lt.s32.totalorder %s36, 1
          %s772 = scalar_select %p771, %s36, 1
          %s773 = scalar_lea.vmem %s16, %s772
        $region104: #{clip_model_forward.1} parent=55 // pred_fallthru
          _
      $region56: #{clip_model_forward.1} parent=5 // pred_fallthru
        _
      %p774 = scmp.le.s32.totalorder 1, %s36
      %p775 = scmp.lt.s32.totalorder %s36, 3
      %p776 = pnand %p774, %p775
      %p777 = pneg %p776
      // Predicated region
      $region105: #{clip_model_forward.1} parent=5 // pred_check
        _
      $region106: #{clip_model_forward.1} parent=5 // pred_check_branch
        %779 = sbr.rel (%p776) target = $region108
      $region107: #{clip_model_forward.1} parent=5 // pred_region
        %s780 = ssub.s32 %s36, 1
        // Predicated region
        $region109: #{clip_model_forward.1} parent=107 // pred_check
          %p781 = pneg %p141
        $region110: #{clip_model_forward.1} parent=107 // pred_check_branch
          %783 = sbr.rel (%p781) target = $region112
        $region111: #{clip_model_forward.1} parent=107 // pred_region
          %784 = dma.done [#allocation4], 16
        $region112: #{clip_model_forward.1} parent=107 // pred_fallthru
          _
        %s785 = sand.u32 %s41, 1
        %s786 = scalar_lea.sflag [#allocation7], %s785
        %s787 = sand.u32 %s206, 1
        %s788 = smul.addr %s787, 384
        %s789 = scalar_lea.vmem [#allocation6], %s788
        // Predicated region
        $region113: #{clip_model_forward.1} parent=107 // pred_check
          %p790 = pneg %p219
        $region114: #{clip_model_forward.1} parent=107 // pred_check_branch
          %792 = sbr.rel (%p790) target = $region116
        $region115: #{clip_model_forward.1} parent=107 // pred_region
          %793 = dma.done %s786, 6144
        $region116: #{clip_model_forward.1} parent=107 // pred_fallthru
          _
        %s794 = sand.u32 %s41, 1
        %s795 = scalar_lea.sflag [#allocation7], %s794
        %s796 = sand.u32 %s414, 1
        %s797 = smul.addr %s796, 64
        %s798 = scalar_lea.vmem [#allocation8], %s797
        // Predicated region
        $region117: #{clip_model_forward.1} parent=107 // pred_check
          %p799 = pneg %p427
        $region118: #{clip_model_forward.1} parent=107 // pred_check_branch
          %801 = sbr.rel (%p799) target = $region120
        $region119: #{clip_model_forward.1} parent=107 // pred_region
          %802 = dma.done %s795, 1024
        $region120: #{clip_model_forward.1} parent=107 // pred_fallthru
          _
        // Predicated region
        $region121: #{clip_model_forward.1} parent=107 // pred_check
          %p803 = pneg %p537
        $region122: #{clip_model_forward.1} parent=107 // pred_check_branch
          %805 = sbr.rel (%p803) target = $region124
        $region123: #{clip_model_forward.1} parent=107 // pred_region
          %806 = dma.done [#allocation10], 1024
        $region124: #{clip_model_forward.1} parent=107 // pred_fallthru
          _
        %p807 = pneg %p57
        %p808 = pneg %p54
        %p809 = pneg %p78
        %p810 = pneg %p75
        %p811 = pneg %p99
        %p812 = pneg %p96
        %p813 = pneg %p120
        %p814 = pneg %p117
        %p815 = pneg %p141
        %p816 = pneg %p138
        %p817 = scmp.lt.s32.totalorder %s41, 1
        %s818 = scalar_select %p817, %s41, 1
        %s819 = scalar_lea.vmem %s5, %s818
        %p820 = pneg %p167
        %p821 = pneg %p164
        %p822 = scmp.lt.s32.totalorder %s41, 1
        %s823 = scalar_select %p822, %s41, 1
        %s824 = scalar_lea.vmem %s6, %s823
        %p825 = pneg %p193
        %p826 = pneg %p190
        %s827 = sand.u32 %s41, 1
        %s828 = scalar_lea.sflag [#allocation7], %s827
        %s829 = sand.u32 %s206, 1
        %s830 = smul.addr %s829, 384
        %s831 = scalar_lea.vmem [#allocation6], %s830
        %p832 = pneg %p219
        %p833 = pneg %p216
        %p834 = scmp.lt.s32.totalorder %s41, 1
        %s835 = scalar_select %p834, %s41, 1
        %s836 = smul.addr %s835, 6
        %s837 = scalar_lea.vmem %s8, %s836
        %p838 = pneg %p245
        %p839 = pneg %p242
        %p840 = scmp.lt.s32.totalorder %s41, 1
        %s841 = scalar_select %p840, %s41, 1
        %s842 = smul.addr %s841, 32
        %s843 = smul.addr %s842, 4
        %s844 = scalar_lea.vmem %s9, %s843
        %p845 = pneg %p271
        %p846 = pneg %p268
        %p847 = scmp.lt.s32.totalorder %s41, 1
        %s848 = scalar_select %p847, %s41, 1
        %s849 = scalar_lea.vmem %s10, %s848
        %p850 = pneg %p297
        %p851 = pneg %p294
        %p852 = scmp.lt.s32.totalorder %s41, 1
        %s853 = scalar_select %p852, %s41, 1
        %s854 = scalar_lea.vmem %s11, %s853
        %p855 = pneg %p323
        %p856 = pneg %p320
        %p857 = scmp.lt.s32.totalorder %s41, 1
        %s858 = scalar_select %p857, %s41, 1
        %s859 = scalar_lea.vmem %s12, %s858
        %p860 = pneg %p349
        %p861 = pneg %p346
        %p862 = scmp.lt.s32.totalorder %s41, 1
        %s863 = scalar_select %p862, %s41, 1
        %s864 = smul.addr %s863, 16
        %s865 = smul.addr %s864, 4
        %s866 = scalar_lea.vmem %s13, %s865
        %p867 = pneg %p375
        %p868 = pneg %p372
        %p869 = scmp.lt.s32.totalorder %s41, 1
        %s870 = scalar_select %p869, %s41, 1
        %s871 = scalar_lea.vmem %s14, %s870
        %p872 = pneg %p401
        %p873 = pneg %p398
        %s874 = sand.u32 %s41, 1
        %s875 = scalar_lea.sflag [#allocation7], %s874
        %s876 = sand.u32 %s414, 1
        %s877 = smul.addr %s876, 64
        %s878 = scalar_lea.vmem [#allocation8], %s877
        %p879 = pneg %p427
        %p880 = pneg %p424
        %p881 = scmp.lt.s32.totalorder %s41, 1
        %s882 = scalar_select %p881, %s41, 1
        %s883 = scalar_lea.vmem %s16, %s882
        %p884 = pneg %p453
        %p885 = pneg %p450
        %p886 = pneg %p474
        %p887 = pneg %p471
        %p888 = pneg %p495
        %p889 = pneg %p492
        %p890 = pneg %p516
        %p891 = pneg %p513
        %p892 = pneg %p537
        %p893 = pneg %p534
        %p894 = pneg %p558
        %p895 = pneg %p555
        %p896 = pneg %p579
        %p897 = pneg %p576
        %p898 = pneg %p600
        %p899 = pneg %p597
        %p900 = scmp.lt.s32.totalorder %s41, 1
        %s901 = scalar_select %p900, %s41, 1
        %s902 = scalar_lea.vmem %s5, %s901
        %p903 = scmp.lt.s32.totalorder %s41, 1
        %s904 = scalar_select %p903, %s41, 1
        %s905 = scalar_lea.vmem %s6, %s904
        %p906 = scmp.lt.s32.totalorder %s41, 1
        %s907 = scalar_select %p906, %s41, 1
        %s908 = smul.addr %s907, 6
        %s909 = scalar_lea.vmem %s8, %s908
        %p910 = scmp.lt.s32.totalorder %s41, 1
        %s911 = scalar_select %p910, %s41, 1
        %s912 = smul.addr %s911, 32
        %s913 = smul.addr %s912, 4
        %s914 = scalar_lea.vmem %s9, %s913
        %p915 = scmp.lt.s32.totalorder %s41, 1
        %s916 = scalar_select %p915, %s41, 1
        %s917 = scalar_lea.vmem %s10, %s916
        %p918 = scmp.lt.s32.totalorder %s41, 1
        %s919 = scalar_select %p918, %s41, 1
        %s920 = scalar_lea.vmem %s11, %s919
        %p921 = scmp.lt.s32.totalorder %s41, 1
        %s922 = scalar_select %p921, %s41, 1
        %s923 = scalar_lea.vmem %s12, %s922
        %p924 = scmp.lt.s32.totalorder %s41, 1
        %s925 = scalar_select %p924, %s41, 1
        %s926 = smul.addr %s925, 16
        %s927 = smul.addr %s926, 4
        %s928 = scalar_lea.vmem %s13, %s927
        %p929 = scmp.lt.s32.totalorder %s41, 1
        %s930 = scalar_select %p929, %s41, 1
        %s931 = scalar_lea.vmem %s14, %s930
        %p932 = scmp.lt.s32.totalorder %s41, 1
        %s933 = scalar_select %p932, %s41, 1
        %s934 = scalar_lea.vmem %s16, %s933
        %v936 = vlaneseq
        %v937 = vand.u32 %v936, 127
        %vm938 = vcmp.lt.s32.totalorder %v937, 32
        %v939 = vsel %vm938, 1, 0
        %v940 = vcvt.s32.f32 %v939
        %vm941 = vcmp.lt.s32.totalorder %v937, 5
        %v942 = vsel %vm941, 0.0, -1e+30
        %p943 = scmp.eq.s32.totalorder %s41, 0
        // Predicated region
        $region125: #{clip_model_forward.1} parent=107 // pred_check
          %p944 = pneg %p943
        $region126: #{clip_model_forward.1} parent=107 // pred_check_branch
          %946 = sbr.rel (%p944) target = $region128
        $region127: #{clip_model_forward.1} parent=107 // pred_region
          %v947 = vld [vmem:[%s0] sm:$0xff]
          %v948 = vld [vmem:[%s0 + $0x8] sm:$0xff]
          %v949 = vld [vmem:[%s2] sm:$0xf]
          %v950 = vld [vmem:[%s2 + $0x4] sm:$0xf]
          %v951 = vld [vmem:[%s2 + $0x8] sm:$0xf]
          %v952 = vld [vmem:[%s2 + $0xc] sm:$0xf]
          %v953 = vld [vmem:[%s2 + $0x10] sm:$0xf]
          %v954 = vld [vmem:[%s2 + $0x14] sm:$0xf]
          %v955 = vld [vmem:[%s2 + $0x18] sm:$0xf]
          %v956 = vld [vmem:[%s2 + $0x1c] sm:$0xf]
          %v957 = vld [vmem:[%s2 + $0x20] sm:$0xf]
          %v958 = vld [vmem:[%s2 + $0x24] sm:$0xf]
          %v959 = vld [vmem:[%s2 + $0x28] sm:$0xf]
          %v960 = vld [vmem:[%s2 + $0x2c] sm:$0xf]
          %v961 = vld [vmem:[%s2 + $0x30] sm:$0xf]
          %v962 = vld [vmem:[%s2 + $0x34] sm:$0xf]
          %v963 = vld [vmem:[%s2 + $0x38] sm:$0xf]
          %v964 = vld [vmem:[%s2 + $0x3c] sm:$0xf]
          %v965 = vld [vmem:[%s2 + $0x40] sm:$0xf]
          %v966 = vld [vmem:[%s2 + $0x44] sm:$0xf]
          %v967 = vld [vmem:[%s2 + $0x48] sm:$0xf]
          %v968 = vld [vmem:[%s2 + $0x4c] sm:$0xf]
          %v969 = vld [vmem:[%s2 + $0x50] sm:$0xf]
          %v970 = vld [vmem:[%s2 + $0x54] sm:$0xf]
          %v971 = vld [vmem:[%s2 + $0x58] sm:$0xf]
          %v972 = vld [vmem:[%s2 + $0x5c] sm:$0xf]
          %v973 = vld [vmem:[%s2 + $0x60] sm:$0xf]
          %v974 = vld [vmem:[%s2 + $0x64] sm:$0xf]
          %v975 = vld [vmem:[%s2 + $0x68] sm:$0xf]
          %v976 = vld [vmem:[%s2 + $0x6c] sm:$0xf]
          %v977 = vld [vmem:[%s2 + $0x70] sm:$0xf]
          %v978 = vld [vmem:[%s2 + $0x74] sm:$0xf]
          %v979 = vld [vmem:[%s2 + $0x78] sm:$0xf]
          %v980 = vld [vmem:[%s2 + $0x7c] sm:$0xf]
          %v981 = vld [vmem:[%s1] sm:$0xff]
          %v982 = vld [vmem:[%s1 + $0x8] sm:$0xff]
          %v985 = vunpack.c.l.b16 %v947
          %v986 = vunpack.c.h.b16 %v947
          %v987 = vunpack.c.l.b16 %v948
          %v988 = vunpack.c.h.b16 %v948
          %v989 = vpack.c.b16 %v987, %v985
          %v990 = vpack.c.b16 %v988, %v986
          %v1025 = vunpack.c.l.b16 %v949
          %v1026 = vunpack.c.l.b16 %v950
          %v1027 = vunpack.c.l.b16 %v951
          %v1028 = vunpack.c.l.b16 %v952
          %v1029 = vunpack.c.l.b16 %v953
          %v1030 = vunpack.c.l.b16 %v954
          %v1031 = vunpack.c.l.b16 %v955
          %v1032 = vunpack.c.l.b16 %v956
          %v1033 = vunpack.c.l.b16 %v957
          %v1034 = vunpack.c.l.b16 %v958
          %v1035 = vunpack.c.l.b16 %v959
          %v1036 = vunpack.c.l.b16 %v960
          %v1037 = vunpack.c.l.b16 %v961
          %v1038 = vunpack.c.l.b16 %v962
          %v1039 = vunpack.c.l.b16 %v963
          %v1040 = vunpack.c.l.b16 %v964
          %v1041 = vunpack.c.l.b16 %v965
          %v1042 = vunpack.c.l.b16 %v966
          %v1043 = vunpack.c.l.b16 %v967
          %v1044 = vunpack.c.l.b16 %v968
          %v1045 = vunpack.c.l.b16 %v969
          %v1046 = vunpack.c.l.b16 %v970
          %v1047 = vunpack.c.l.b16 %v971
          %v1048 = vunpack.c.l.b16 %v972
          %v1049 = vunpack.c.l.b16 %v973
          %v1050 = vunpack.c.l.b16 %v974
          %v1051 = vunpack.c.l.b16 %v975
          %v1052 = vunpack.c.l.b16 %v976
          %v1053 = vunpack.c.l.b16 %v977
          %v1054 = vunpack.c.l.b16 %v978
          %v1055 = vunpack.c.l.b16 %v979
          %v1056 = vunpack.c.l.b16 %v980
          %v1057 = vpack.c.b16 %v1026, %v1025
          %v1058 = vpack.c.b16 %v1028, %v1027
          %v1059 = vpack.c.b16 %v1030, %v1029
          %v1060 = vpack.c.b16 %v1032, %v1031
          %v1061 = vpack.c.b16 %v1034, %v1033
          %v1062 = vpack.c.b16 %v1036, %v1035
          %v1063 = vpack.c.b16 %v1038, %v1037
          %v1064 = vpack.c.b16 %v1040, %v1039
          %v1065 = vpack.c.b16 %v1042, %v1041
          %v1066 = vpack.c.b16 %v1044, %v1043
          %v1067 = vpack.c.b16 %v1046, %v1045
          %v1068 = vpack.c.b16 %v1048, %v1047
          %v1069 = vpack.c.b16 %v1050, %v1049
          %v1070 = vpack.c.b16 %v1052, %v1051
          %v1071 = vpack.c.b16 %v1054, %v1053
          %v1072 = vpack.c.b16 %v1056, %v1055
          %1089 = vmatprep.subr.bf16.mxu0 0
          %1090 = vmatpush1.bf16.msra.mxu0 %v1064
          %1091 = vmatprep.subr.bf16.mxu0 0
          %1092 = vmatpush1.bf16.msra.mxu0 %v1063
          %1093 = vmatprep.subr.bf16.mxu0 0
          %1094 = vmatpush1.bf16.msra.mxu0 %v1062
          %1095 = vmatprep.subr.bf16.mxu0 0
          %1096 = vmatpush1.bf16.msra.mxu0 %v1061
          %1097 = vmatprep.subr.bf16.mxu0 0
          %1098 = vmatpush1.bf16.msra.mxu0 %v1060
          %1099 = vmatprep.subr.bf16.mxu0 0
          %1100 = vmatpush1.bf16.msra.mxu0 %v1059
          %1101 = vmatprep.subr.bf16.mxu0 0
          %1102 = vmatpush1.bf16.msra.mxu0 %v1058
          %1103 = vmatprep.subr.bf16.mxu0 0
          %1104 = vmatpush1.bf16.msra.mxu0 %v1057
          %1105 = vmatprep.subr.bf16.mxu0 0
          %1106 = vmatpush2.bf16.msra.mxu0 %v1072
          %1107 = vmatprep.subr.bf16.mxu0 0
          %1108 = vmatpush2.bf16.msra.mxu0 %v1071
          %1109 = vmatprep.subr.bf16.mxu0 0
          %1110 = vmatpush2.bf16.msra.mxu0 %v1070
          %1111 = vmatprep.subr.bf16.mxu0 0
          %1112 = vmatpush2.bf16.msra.mxu0 %v1069
          %1113 = vmatprep.subr.bf16.mxu0 0
          %1114 = vmatpush2.bf16.msra.mxu0 %v1068
          %1115 = vmatprep.subr.bf16.mxu0 0
          %1116 = vmatpush2.bf16.msra.mxu0 %v1067
          %1117 = vmatprep.subr.bf16.mxu0 0
          %1118 = vmatpush2.bf16.msra.mxu0 %v1066
          %1119 = vmatprep.subr.bf16.mxu0 0
          %1120 = vmatpush2.bf16.msra.mxu0 %v1065
          %1121 = vmatprep.mubr.bf16.mxu0 %v990
          %1122 = vmatmul.mubr.bf16.gmra.mxu0 %v989
          %v1123 = vpop.f32.mrf.mxu0
          %v1124 = vadd.f32 %v981, %v1123
          %v1125 = vpop.f32.mrf.mxu0
          %v1126 = vpop.f32.mrf.mxu0
          %v1127 = vadd.f32 %v982, %v1126
          %v1128 = vpop.f32.mrf.mxu0
          %1129 = vdwg.mxu0
          %v1130 = vld [vmem:[%s3] sm:$0x1]
          %v1131 = vld [vmem:[#allocation3] sm:$0x1]
          %1132 = vadd.xlane.f32.xlu0 %v1124
          %v1133 = vpop.xlane.xlu0 %1132
          %1134 = vadd.xlane.f32.xlu0 %v1127
          %v1135 = vpop.xlane.xlu0 %1134
          %v1136 = vmul.f32 %v1133, 0.03125
          %v1137 = vmul.f32 %v1135, 0.03125
          %v1138 = vsub.f32 %v1124, %v1136
          %v1139 = vsub.f32 %v1127, %v1137
          %v1140 = vmul.f32 %v1138, %v940
          %v1141 = vmul.f32 %v1139, %v940
          %v1142 = vmul.f32 %v1140, %v1140
          %v1143 = vmul.f32 %v1141, %v1141
          %1144 = vadd.xlane.f32.xlu0 %v1142
          %v1145 = vpop.xlane.xlu0 %1144
          %1146 = vadd.xlane.f32.xlu0 %v1143
          %v1147 = vpop.xlane.xlu0 %1146
          %v1148 = vmul.f32 %v1145, 0.03125
          %v1149 = vmul.f32 %v1147, 0.03125
          %v1150 = vadd.f32 %v1148, 1e-05
          %v1151 = vadd.f32 %v1149, 1e-05
          %v1152 = vrsqrt.pop %v1150
          %v1153 = vrsqrt.pop %v1151
          %v1154 = vmul.f32 %v1140, %v1152
          %v1155 = vmul.f32 %v1141, %v1153
          %v1157 = vlaneseq
          %v1158 = vshrl.u32 %v1157, 7
          %v1159 = vsub.s32 0, %v1158
          %v1160 = vrot.slane %v1130, %v1159
          %v1162 = vmul.f32 %v1154, %v1160
          %v1163 = vmul.f32 %v1155, %v1160
          %v1165 = vlaneseq
          %v1166 = vshrl.u32 %v1165, 7
          %v1167 = vsub.s32 0, %v1166
          %v1168 = vrot.slane %v1131, %v1167
          %v1170 = vadd.f32 %v1162, %v1168
          %v1171 = vadd.f32 %v1163, %v1168
          %1172 = vst [vmem:[#allocation2] sm:$0xff] %v1170
          %1173 = vst [vmem:[#allocation2 + $0x8] sm:$0xff] %v1171
        $region128: #{clip_model_forward.1} parent=107 // pred_fallthru
          _
        %v1174 = vld [vmem:[#allocation2] sm:$0xff]
        %v1175 = vld [vmem:[#allocation2 + $0x8] sm:$0xff]
        %v1176 = vld [vmem:[%s902] sm:$0x1]
        %v1177 = vld [vmem:[%s905] sm:$0x1]
        %1178 = vadd.xlane.f32.xlu0 %v1174
        %v1179 = vpop.xlane.xlu0 %1178
        %1180 = vadd.xlane.f32.xlu0 %v1175
        %v1181 = vpop.xlane.xlu0 %1180
        %v1182 = vmul.f32 %v1179, 0.03125
        %v1183 = vmul.f32 %v1181, 0.03125
        %v1184 = vsub.f32 %v1174, %v1182
        %v1185 = vsub.f32 %v1175, %v1183
        %v1186 = vmul.f32 %v1184, %v940
        %v1187 = vmul.f32 %v1185, %v940
        %v1188 = vmul.f32 %v1186, %v1186
        %v1189 = vmul.f32 %v1187, %v1187
        %1190 = vadd.xlane.f32.xlu0 %v1188
        %v1191 = vpop.xlane.xlu0 %1190
        %1192 = vadd.xlane.f32.xlu0 %v1189
        %v1193 = vpop.xlane.xlu0 %1192
        %v1194 = vmul.f32 %v1191, 0.03125
        %v1195 = vmul.f32 %v1193, 0.03125
        %v1196 = vadd.f32 %v1194, 1e-05
        %v1197 = vadd.f32 %v1195, 1e-05
        %v1198 = vrsqrt.pop %v1196
        %v1199 = vrsqrt.pop %v1197
        %v1200 = vmul.f32 %v1186, %v1198
        %v1201 = vmul.f32 %v1187, %v1199
        %v1203 = vlaneseq
        %v1204 = vshrl.u32 %v1203, 7
        %v1205 = vsub.s32 0, %v1204
        %v1206 = vrot.slane %v1176, %v1205
        %v1208 = vmul.f32 %v1200, %v1206
        %v1209 = vmul.f32 %v1201, %v1206
        %v1211 = vlaneseq
        %v1212 = vshrl.u32 %v1211, 7
        %v1213 = vsub.s32 0, %v1212
        %v1214 = vrot.slane %v1177, %v1213
        %v1216 = vadd.f32 %v1208, %v1214
        %v1217 = vadd.f32 %v1209, %v1214
        %v1218 = vld [vmem:[%s789] sm:$0xff]
        %v1219 = vld [vmem:[%s789 + $0x8] sm:$0xff]
        %v1220 = vld [vmem:[%s789 + $0x10] sm:$0xff]
        %v1221 = vld [vmem:[%s789 + $0x18] sm:$0xff]
        %v1222 = vld [vmem:[%s789 + $0x20] sm:$0xff]
        %v1223 = vld [vmem:[%s789 + $0x28] sm:$0xff]
        %v1224 = vld [vmem:[%s789 + $0x30] sm:$0xff]
        %v1225 = vld [vmem:[%s789 + $0x38] sm:$0xff]
        %v1226 = vld [vmem:[%s789 + $0x40] sm:$0xff]
        %v1227 = vld [vmem:[%s789 + $0x48] sm:$0xff]
        %v1228 = vld [vmem:[%s789 + $0x50] sm:$0xff]
        %v1229 = vld [vmem:[%s789 + $0x58] sm:$0xff]
        %v1230 = vld [vmem:[%s789 + $0x60] sm:$0xff]
        %v1231 = vld [vmem:[%s789 + $0x68] sm:$0xff]
        %v1232 = vld [vmem:[%s789 + $0x70] sm:$0xff]
        %v1233 = vld [vmem:[%s789 + $0x78] sm:$0xff]
        %v1234 = vld [vmem:[%s789 + $0x80] sm:$0xff]
        %v1235 = vld [vmem:[%s789 + $0x88] sm:$0xff]
        %v1236 = vld [vmem:[%s789 + $0x90] sm:$0xff]
        %v1237 = vld [vmem:[%s789 + $0x98] sm:$0xff]
        %v1238 = vld [vmem:[%s789 + $0xa0] sm:$0xff]
        %v1239 = vld [vmem:[%s789 + $0xa8] sm:$0xff]
        %v1240 = vld [vmem:[%s789 + $0xb0] sm:$0xff]
        %v1241 = vld [vmem:[%s789 + $0xb8] sm:$0xff]
        %v1242 = vld [vmem:[%s789 + $0xc0] sm:$0xff]
        %v1243 = vld [vmem:[%s789 + $0xc8] sm:$0xff]
        %v1244 = vld [vmem:[%s789 + $0xd0] sm:$0xff]
        %v1245 = vld [vmem:[%s789 + $0xd8] sm:$0xff]
        %v1246 = vld [vmem:[%s789 + $0xe0] sm:$0xff]
        %v1247 = vld [vmem:[%s789 + $0xe8] sm:$0xff]
        %v1248 = vld [vmem:[%s789 + $0xf0] sm:$0xff]
        %v1249 = vld [vmem:[%s789 + $0xf8] sm:$0xff]
        %v1250 = vld [vmem:[%s789 + $0x100] sm:$0xff]
        %v1251 = vld [vmem:[%s789 + $0x108] sm:$0xff]
        %v1252 = vld [vmem:[%s789 + $0x110] sm:$0xff]
        %v1253 = vld [vmem:[%s789 + $0x118] sm:$0xff]
        %v1254 = vld [vmem:[%s789 + $0x120] sm:$0xff]
        %v1255 = vld [vmem:[%s789 + $0x128] sm:$0xff]
        %v1256 = vld [vmem:[%s789 + $0x130] sm:$0xff]
        %v1257 = vld [vmem:[%s789 + $0x138] sm:$0xff]
        %v1258 = vld [vmem:[%s789 + $0x140] sm:$0xff]
        %v1259 = vld [vmem:[%s789 + $0x148] sm:$0xff]
        %v1260 = vld [vmem:[%s789 + $0x150] sm:$0xff]
        %v1261 = vld [vmem:[%s789 + $0x158] sm:$0xff]
        %v1262 = vld [vmem:[%s789 + $0x160] sm:$0xff]
        %v1263 = vld [vmem:[%s789 + $0x168] sm:$0xff]
        %v1264 = vld [vmem:[%s789 + $0x170] sm:$0xff]
        %v1265 = vld [vmem:[%s789 + $0x178] sm:$0xff]
        %v1266 = vpack.c.bf16 %v1217, %v1216
        %v1267 = vld [vmem:[%s909] sm:$0x3f]
        %v1269 = vlaneseq
        %v1270 = vshrl.u32 %v1269, 7
        %v1271 = vsub.s32 0, %v1270
        %v1272 = vrot.slane %v1267, %v1271
        %v1273 = vlaneseq
        %v1274 = vshrl.u32 %v1273, 7
        %v1275 = vsub.s32 1, %v1274
        %v1276 = vrot.slane %v1267, %v1275
        %v1277 = vlaneseq
        %v1278 = vshrl.u32 %v1277, 7
        %v1279 = vsub.s32 2, %v1278
        %v1280 = vrot.slane %v1267, %v1279
        %v1281 = vlaneseq
        %v1282 = vshrl.u32 %v1281, 7
        %v1283 = vsub.s32 3, %v1282
        %v1284 = vrot.slane %v1267, %v1283
        %v1285 = vlaneseq
        %v1286 = vshrl.u32 %v1285, 7
        %v1287 = vsub.s32 4, %v1286
        %v1288 = vrot.slane %v1267, %v1287
        %v1289 = vlaneseq
        %v1290 = vshrl.u32 %v1289, 7
        %v1291 = vsub.s32 5, %v1290
        %v1292 = vrot.slane %v1267, %v1291
        %v1347 = vunpack.c.l.b16 %v1218
        %v1348 = vunpack.c.h.b16 %v1218
        %v1349 = vunpack.c.l.b16 %v1219
        %v1350 = vunpack.c.h.b16 %v1219
        %v1351 = vunpack.c.l.b16 %v1220
        %v1352 = vunpack.c.h.b16 %v1220
        %v1353 = vunpack.c.l.b16 %v1221
        %v1354 = vunpack.c.h.b16 %v1221
        %v1355 = vunpack.c.l.b16 %v1222
        %v1356 = vunpack.c.h.b16 %v1222
        %v1357 = vunpack.c.l.b16 %v1223
        %v1358 = vunpack.c.h.b16 %v1223
        %v1359 = vunpack.c.l.b16 %v1224
        %v1360 = vunpack.c.h.b16 %v1224
        %v1361 = vunpack.c.l.b16 %v1225
        %v1362 = vunpack.c.h.b16 %v1225
        %v1363 = vunpack.c.l.b16 %v1226
        %v1364 = vunpack.c.h.b16 %v1226
        %v1365 = vunpack.c.l.b16 %v1227
        %v1366 = vunpack.c.h.b16 %v1227
        %v1367 = vunpack.c.l.b16 %v1228
        %v1368 = vunpack.c.h.b16 %v1228
        %v1369 = vunpack.c.l.b16 %v1229
        %v1370 = vunpack.c.h.b16 %v1229
        %v1371 = vunpack.c.l.b16 %v1230
        %v1372 = vunpack.c.h.b16 %v1230
        %v1373 = vunpack.c.l.b16 %v1231
        %v1374 = vunpack.c.h.b16 %v1231
        %v1375 = vunpack.c.l.b16 %v1232
        %v1376 = vunpack.c.h.b16 %v1232
        %v1377 = vunpack.c.l.b16 %v1233
        %v1378 = vunpack.c.h.b16 %v1233
        %v1379 = vunpack.c.l.b16 %v1234
        %v1380 = vunpack.c.h.b16 %v1234
        %v1381 = vunpack.c.l.b16 %v1235
        %v1382 = vunpack.c.h.b16 %v1235
        %v1383 = vunpack.c.l.b16 %v1236
        %v1384 = vunpack.c.h.b16 %v1236
        %v1385 = vunpack.c.l.b16 %v1237
        %v1386 = vunpack.c.h.b16 %v1237
        %v1387 = vunpack.c.l.b16 %v1238
        %v1388 = vunpack.c.h.b16 %v1238
        %v1389 = vunpack.c.l.b16 %v1239
        %v1390 = vunpack.c.h.b16 %v1239
        %v1391 = vunpack.c.l.b16 %v1240
        %v1392 = vunpack.c.h.b16 %v1240
        %v1393 = vunpack.c.l.b16 %v1241
        %v1394 = vunpack.c.h.b16 %v1241
        %v1395 = vunpack.c.l.b16 %v1242
        %v1396 = vunpack.c.h.b16 %v1242
        %v1397 = vunpack.c.l.b16 %v1243
        %v1398 = vunpack.c.h.b16 %v1243
        %v1399 = vunpack.c.l.b16 %v1244
        %v1400 = vunpack.c.h.b16 %v1244
        %v1401 = vunpack.c.l.b16 %v1245
        %v1402 = vunpack.c.h.b16 %v1245
        %v1403 = vunpack.c.l.b16 %v1246
        %v1404 = vunpack.c.h.b16 %v1246
        %v1405 = vunpack.c.l.b16 %v1247
        %v1406 = vunpack.c.h.b16 %v1247
        %v1407 = vunpack.c.l.b16 %v1248
        %v1408 = vunpack.c.h.b16 %v1248
        %v1409 = vunpack.c.l.b16 %v1249
        %v1410 = vunpack.c.h.b16 %v1249
        %v1411 = vunpack.c.l.b16 %v1250
        %v1412 = vunpack.c.h.b16 %v1250
        %v1413 = vunpack.c.l.b16 %v1251
        %v1414 = vunpack.c.h.b16 %v1251
        %v1415 = vunpack.c.l.b16 %v1252
        %v1416 = vunpack.c.h.b16 %v1252
        %v1417 = vunpack.c.l.b16 %v1253
        %v1418 = vunpack.c.h.b16 %v1253
        %v1419 = vunpack.c.l.b16 %v1254
        %v1420 = vunpack.c.h.b16 %v1254
        %v1421 = vunpack.c.l.b16 %v1255
        %v1422 = vunpack.c.h.b16 %v1255
        %v1423 = vunpack.c.l.b16 %v1256
        %v1424 = vunpack.c.h.b16 %v1256
        %v1425 = vunpack.c.l.b16 %v1257
        %v1426 = vunpack.c.h.b16 %v1257
        %v1427 = vunpack.c.l.b16 %v1258
        %v1428 = vunpack.c.h.b16 %v1258
        %v1429 = vunpack.c.l.b16 %v1259
        %v1430 = vunpack.c.h.b16 %v1259
        %v1431 = vunpack.c.l.b16 %v1260
        %v1432 = vunpack.c.h.b16 %v1260
        %v1433 = vunpack.c.l.b16 %v1261
        %v1434 = vunpack.c.h.b16 %v1261
        %v1435 = vunpack.c.l.b16 %v1262
        %v1436 = vunpack.c.h.b16 %v1262
        %v1437 = vunpack.c.l.b16 %v1263
        %v1438 = vunpack.c.h.b16 %v1263
        %v1439 = vunpack.c.l.b16 %v1264
        %v1440 = vunpack.c.h.b16 %v1264
        %v1441 = vunpack.c.l.b16 %v1265
        %v1442 = vunpack.c.h.b16 %v1265
        %v1443 = vpack.c.b16 %v1353, %v1347
        %v1444 = vpack.c.b16 %v1354, %v1348
        %v1445 = vpack.c.b16 %v1355, %v1349
        %v1446 = vpack.c.b16 %v1356, %v1350
        %v1447 = vpack.c.b16 %v1357, %v1351
        %v1448 = vpack.c.b16 %v1358, %v1352
        %v1449 = vpack.c.b16 %v1365, %v1359
        %v1450 = vpack.c.b16 %v1366, %v1360
        %v1451 = vpack.c.b16 %v1367, %v1361
        %v1452 = vpack.c.b16 %v1368, %v1362
        %v1453 = vpack.c.b16 %v1369, %v1363
        %v1454 = vpack.c.b16 %v1370, %v1364
        %v1455 = vpack.c.b16 %v1377, %v1371
        %v1456 = vpack.c.b16 %v1378, %v1372
        %v1457 = vpack.c.b16 %v1379, %v1373
        %v1458 = vpack.c.b16 %v1380, %v1374
        %v1459 = vpack.c.b16 %v1381, %v1375
        %v1460 = vpack.c.b16 %v1382, %v1376
        %v1461 = vpack.c.b16 %v1389, %v1383
        %v1462 = vpack.c.b16 %v1390, %v1384
        %v1463 = vpack.c.b16 %v1391, %v1385
        %v1464 = vpack.c.b16 %v1392, %v1386
        %v1465 = vpack.c.b16 %v1393, %v1387
        %v1466 = vpack.c.b16 %v1394, %v1388
        %v1467 = vpack.c.b16 %v1401, %v1395
        %v1468 = vpack.c.b16 %v1402, %v1396
        %v1469 = vpack.c.b16 %v1403, %v1397
        %v1470 = vpack.c.b16 %v1404, %v1398
        %v1471 = vpack.c.b16 %v1405, %v1399
        %v1472 = vpack.c.b16 %v1406, %v1400
        %v1473 = vpack.c.b16 %v1413, %v1407
        %v1474 = vpack.c.b16 %v1414, %v1408
        %v1475 = vpack.c.b16 %v1415, %v1409
        %v1476 = vpack.c.b16 %v1416, %v1410
        %v1477 = vpack.c.b16 %v1417, %v1411
        %v1478 = vpack.c.b16 %v1418, %v1412
        %v1479 = vpack.c.b16 %v1425, %v1419
        %v1480 = vpack.c.b16 %v1426, %v1420
        %v1481 = vpack.c.b16 %v1427, %v1421
        %v1482 = vpack.c.b16 %v1428, %v1422
        %v1483 = vpack.c.b16 %v1429, %v1423
        %v1484 = vpack.c.b16 %v1430, %v1424
        %v1485 = vpack.c.b16 %v1437, %v1431
        %v1486 = vpack.c.b16 %v1438, %v1432
        %v1487 = vpack.c.b16 %v1439, %v1433
        %v1488 = vpack.c.b16 %v1440, %v1434
        %v1489 = vpack.c.b16 %v1441, %v1435
        %v1490 = vpack.c.b16 %v1442, %v1436
        %1539 = vmatprep.subr.bf16.mxu0 %v1486
        %1540 = vmatpush1.bf16.msra.mxu0 %v1485
        %1541 = vmatprep.subr.bf16.mxu0 %v1480
        %1542 = vmatpush1.bf16.msra.mxu0 %v1479
        %1543 = vmatprep.subr.bf16.mxu0 %v1474
        %1544 = vmatpush1.bf16.msra.mxu0 %v1473
        %1545 = vmatprep.subr.bf16.mxu0 %v1468
        %1546 = vmatpush1.bf16.msra.mxu0 %v1467
        %1547 = vmatprep.subr.bf16.mxu0 %v1462
        %1548 = vmatpush1.bf16.msra.mxu0 %v1461
        %1549 = vmatprep.subr.bf16.mxu0 %v1456
        %1550 = vmatpush1.bf16.msra.mxu0 %v1455
        %1551 = vmatprep.subr.bf16.mxu0 %v1450
        %1552 = vmatpush1.bf16.msra.mxu0 %v1449
        %1553 = vmatprep.subr.bf16.mxu0 %v1444
        %1554 = vmatpush1.bf16.msra.mxu0 %v1443
        %1555 = vmatprep.subr.bf16.mxu0 0
        %1556 = vmatpush2.bf16.msra.mxu0 0
        %1557 = vmatprep.subr.bf16.mxu0 0
        %1558 = vmatpush2.bf16.msra.mxu0 0
        %1559 = vmatprep.subr.bf16.mxu0 0
        %1560 = vmatpush2.bf16.msra.mxu0 0
        %1561 = vmatprep.subr.bf16.mxu0 0
        %1562 = vmatpush2.bf16.msra.mxu0 0
        %1563 = vmatprep.subr.bf16.mxu0 0
        %1564 = vmatpush2.bf16.msra.mxu0 0
        %1565 = vmatprep.subr.bf16.mxu0 0
        %1566 = vmatpush2.bf16.msra.mxu0 0
        %1567 = vmatprep.subr.bf16.mxu0 0
        %1568 = vmatpush2.bf16.msra.mxu0 0
        %1569 = vmatprep.subr.bf16.mxu0 0
        %1570 = vmatpush2.bf16.msra.mxu0 0
        %1571 = vmatprep.mubr.bf16.mxu0 0
        %1572 = vmatmul.mubr.bf16.gmra.mxu0 %v1266
        %v1573 = vpop.f32.mrf.mxu0
        %v1574 = vadd.f32 %v1272, %v1573
        %v1575 = vpop.f32.mrf.mxu0
        %v1576 = vadd.f32 %v1276, %v1575
        %v1577 = vpop.f32.mrf.mxu0
        %v1578 = vadd.f32 %v1272, %v1577
        %v1579 = vpop.f32.mrf.mxu0
        %v1580 = vadd.f32 %v1276, %v1579
        %1581 = vdwg.mxu0
        %1582 = vmatprep.subr.bf16.mxu0 %v1488
        %1583 = vmatpush1.bf16.msra.mxu0 %v1487
        %1584 = vmatprep.subr.bf16.mxu0 %v1482
        %1585 = vmatpush1.bf16.msra.mxu0 %v1481
        %1586 = vmatprep.subr.bf16.mxu0 %v1476
        %1587 = vmatpush1.bf16.msra.mxu0 %v1475
        %1588 = vmatprep.subr.bf16.mxu0 %v1470
        %1589 = vmatpush1.bf16.msra.mxu0 %v1469
        %1590 = vmatprep.subr.bf16.mxu0 %v1464
        %1591 = vmatpush1.bf16.msra.mxu0 %v1463
        %1592 = vmatprep.subr.bf16.mxu0 %v1458
        %1593 = vmatpush1.bf16.msra.mxu0 %v1457
        %1594 = vmatprep.subr.bf16.mxu0 %v1452
        %1595 = vmatpush1.bf16.msra.mxu0 %v1451
        %1596 = vmatprep.subr.bf16.mxu0 %v1446
        %1597 = vmatpush1.bf16.msra.mxu0 %v1445
        %1598 = vmatprep.subr.bf16.mxu0 0
        %1599 = vmatpush2.bf16.msra.mxu0 0
        %1600 = vmatprep.subr.bf16.mxu0 0
        %1601 = vmatpush2.bf16.msra.mxu0 0
        %1602 = vmatprep.subr.bf16.mxu0 0
        %1603 = vmatpush2.bf16.msra.mxu0 0
        %1604 = vmatprep.subr.bf16.mxu0 0
        %1605 = vmatpush2.bf16.msra.mxu0 0
        %1606 = vmatprep.subr.bf16.mxu0 0
        %1607 = vmatpush2.bf16.msra.mxu0 0
        %1608 = vmatprep.subr.bf16.mxu0 0
        %1609 = vmatpush2.bf16.msra.mxu0 0
        %1610 = vmatprep.subr.bf16.mxu0 0
        %1611 = vmatpush2.bf16.msra.mxu0 0
        %1612 = vmatprep.subr.bf16.mxu0 0
        %1613 = vmatpush2.bf16.msra.mxu0 0
        %1614 = vmatprep.mubr.bf16.mxu0 0
        %1615 = vmatmul.mubr.bf16.gmra.mxu0 %v1266
        %v1616 = vpop.f32.mrf.mxu0
        %v1617 = vadd.f32 %v1280, %v1616
        %v1618 = vpop.f32.mrf.mxu0
        %v1619 = vadd.f32 %v1284, %v1618
        %v1620 = vpop.f32.mrf.mxu0
        %v1621 = vadd.f32 %v1280, %v1620
        %v1622 = vpop.f32.mrf.mxu0
        %v1623 = vadd.f32 %v1284, %v1622
        %1624 = vdwg.mxu0
        %1625 = vmatprep.subr.bf16.mxu0 %v1490
        %1626 = vmatpush1.bf16.msra.mxu0 %v1489
        %1627 = vmatprep.subr.bf16.mxu0 %v1484
        %1628 = vmatpush1.bf16.msra.mxu0 %v1483
        %1629 = vmatprep.subr.bf16.mxu0 %v1478
        %1630 = vmatpush1.bf16.msra.mxu0 %v1477
        %1631 = vmatprep.subr.bf16.mxu0 %v1472
        %1632 = vmatpush1.bf16.msra.mxu0 %v1471
        %1633 = vmatprep.subr.bf16.mxu0 %v1466
        %1634 = vmatpush1.bf16.msra.mxu0 %v1465
        %1635 = vmatprep.subr.bf16.mxu0 %v1460
        %1636 = vmatpush1.bf16.msra.mxu0 %v1459
        %1637 = vmatprep.subr.bf16.mxu0 %v1454
        %1638 = vmatpush1.bf16.msra.mxu0 %v1453
        %1639 = vmatprep.subr.bf16.mxu0 %v1448
        %1640 = vmatpush1.bf16.msra.mxu0 %v1447
        %1641 = vmatprep.subr.bf16.mxu0 0
        %1642 = vmatpush2.bf16.msra.mxu0 0
        %1643 = vmatprep.subr.bf16.mxu0 0
        %1644 = vmatpush2.bf16.msra.mxu0 0
        %1645 = vmatprep.subr.bf16.mxu0 0
        %1646 = vmatpush2.bf16.msra.mxu0 0
        %1647 = vmatprep.subr.bf16.mxu0 0
        %1648 = vmatpush2.bf16.msra.mxu0 0
        %1649 = vmatprep.subr.bf16.mxu0 0
        %1650 = vmatpush2.bf16.msra.mxu0 0
        %1651 = vmatprep.subr.bf16.mxu0 0
        %1652 = vmatpush2.bf16.msra.mxu0 0
        %1653 = vmatprep.subr.bf16.mxu0 0
        %1654 = vmatpush2.bf16.msra.mxu0 0
        %1655 = vmatprep.subr.bf16.mxu0 0
        %1656 = vmatpush2.bf16.msra.mxu0 0
        %1657 = vmatprep.mubr.bf16.mxu0 0
        %1658 = vmatmul.mubr.bf16.gmra.mxu0 %v1266
        %v1659 = vpop.f32.mrf.mxu0
        %v1660 = vadd.f32 %v1288, %v1659
        %v1661 = vpop.f32.mrf.mxu0
        %v1662 = vadd.f32 %v1292, %v1661
        %v1663 = vpop.f32.mrf.mxu0
        %v1664 = vadd.f32 %v1288, %v1663
        %v1665 = vpop.f32.mrf.mxu0
        %v1666 = vadd.f32 %v1292, %v1665
        %1667 = vdwg.mxu0
        %v1668 = vld [vmem:[%s914] sm:$0xf]
        %v1669 = vld [vmem:[%s914 + $0x4] sm:$0xf]
        %v1670 = vld [vmem:[%s914 + $0x8] sm:$0xf]
        %v1671 = vld [vmem:[%s914 + $0xc] sm:$0xf]
        %v1672 = vld [vmem:[%s914 + $0x10] sm:$0xf]
        %v1673 = vld [vmem:[%s914 + $0x14] sm:$0xf]
        %v1674 = vld [vmem:[%s914 + $0x18] sm:$0xf]
        %v1675 = vld [vmem:[%s914 + $0x1c] sm:$0xf]
        %v1676 = vld [vmem:[%s914 + $0x20] sm:$0xf]
        %v1677 = vld [vmem:[%s914 + $0x24] sm:$0xf]
        %v1678 = vld [vmem:[%s914 + $0x28] sm:$0xf]
        %v1679 = vld [vmem:[%s914 + $0x2c] sm:$0xf]
        %v1680 = vld [vmem:[%s914 + $0x30] sm:$0xf]
        %v1681 = vld [vmem:[%s914 + $0x34] sm:$0xf]
        %v1682 = vld [vmem:[%s914 + $0x38] sm:$0xf]
        %v1683 = vld [vmem:[%s914 + $0x3c] sm:$0xf]
        %v1684 = vld [vmem:[%s914 + $0x40] sm:$0xf]
        %v1685 = vld [vmem:[%s914 + $0x44] sm:$0xf]
        %v1686 = vld [vmem:[%s914 + $0x48] sm:$0xf]
        %v1687 = vld [vmem:[%s914 + $0x4c] sm:$0xf]
        %v1688 = vld [vmem:[%s914 + $0x50] sm:$0xf]
        %v1689 = vld [vmem:[%s914 + $0x54] sm:$0xf]
        %v1690 = vld [vmem:[%s914 + $0x58] sm:$0xf]
        %v1691 = vld [vmem:[%s914 + $0x5c] sm:$0xf]
        %v1692 = vld [vmem:[%s914 + $0x60] sm:$0xf]
        %v1693 = vld [vmem:[%s914 + $0x64] sm:$0xf]
        %v1694 = vld [vmem:[%s914 + $0x68] sm:$0xf]
        %v1695 = vld [vmem:[%s914 + $0x6c] sm:$0xf]
        %v1696 = vld [vmem:[%s914 + $0x70] sm:$0xf]
        %v1697 = vld [vmem:[%s914 + $0x74] sm:$0xf]
        %v1698 = vld [vmem:[%s914 + $0x78] sm:$0xf]
        %v1699 = vld [vmem:[%s914 + $0x7c] sm:$0xf]
        %v1700 = vpack.c.bf16 %v1574, %v1574
        %v1701 = vpack.c.bf16 %v1578, %v1578
        %v1702 = vpack.c.bf16 %v1617, %v1617
        %v1703 = vpack.c.bf16 %v1621, %v1621
        %1704 = vmatprep.subr.bf16.mxu0 0
        %1705 = vmatpush1.bf16.xpose.msra.mxu0 0
        %1706 = vmatprep.subr.bf16.mxu0 0
        %1707 = vmatpush1.bf16.xpose.msra.mxu0 0
        %1708 = vmatprep.subr.bf16.mxu0 0
        %1709 = vmatpush1.bf16.xpose.msra.mxu0 0
        %1710 = vmatprep.subr.bf16.mxu0 0
        %1711 = vmatpush1.bf16.xpose.msra.mxu0 0
        %1712 = vmatprep.subr.bf16.mxu0 0
        %1713 = vmatpush1.bf16.xpose.msra.mxu0 0
        %1714 = vmatprep.subr.bf16.mxu0 0
        %1715 = vmatpush1.bf16.xpose.msra.mxu0 0
        %1716 = vmatprep.subr.bf16.mxu0 0
        %1717 = vmatpush1.bf16.xpose.msra.mxu0 0
        %1718 = vmatprep.subr.bf16.mxu0 0
        %1719 = vmatpush1.bf16.xpose.msra.mxu0 %v1702
        %1720 = vmatprep.subr.bf16.mxu0 0
        %1721 = vmatpush2.bf16.xpose.msra.mxu0 0
        %1722 = vmatprep.subr.bf16.mxu0 0
        %1723 = vmatpush2.bf16.xpose.msra.mxu0 0
        %1724 = vmatprep.subr.bf16.mxu0 0
        %1725 = vmatpush2.bf16.xpose.msra.mxu0 0
        %1726 = vmatprep.subr.bf16.mxu0 0
        %1727 = vmatpush2.bf16.xpose.msra.mxu0 0
        %1728 = vmatprep.subr.bf16.mxu0 0
        %1729 = vmatpush2.bf16.xpose.msra.mxu0 0
        %1730 = vmatprep.subr.bf16.mxu0 0
        %1731 = vmatpush2.bf16.xpose.msra.mxu0 0
        %1732 = vmatprep.subr.bf16.mxu0 0
        %1733 = vmatpush2.bf16.xpose.msra.mxu0 0
        %1734 = vmatprep.subr.bf16.mxu0 0
        %1735 = vmatpush2.bf16.xpose.msra.mxu0 0
        %1736 = vmatprep.mubr.bf16.mxu0 0
        %1737 = vmatmul.mubr.bf16.gmra.mxu0 %v1700
        %v1738 = vpop.f32.mrf.mxu0
        %v1739 = vadd.f32 0.0, %v1738
        %v1740 = vpop.f32.mrf.mxu0
        %v1741 = vpop.f32.mrf.mxu0
        %v1742 = vpop.f32.mrf.mxu0
        %1743 = vdwg.mxu0
        %1744 = vmatprep.subr.bf16.mxu0 0
        %1745 = vmatpush1.bf16.xpose.msra.mxu0 0
        %1746 = vmatprep.subr.bf16.mxu0 0
        %1747 = vmatpush1.bf16.xpose.msra.mxu0 0
        %1748 = vmatprep.subr.bf16.mxu0 0
        %1749 = vmatpush1.bf16.xpose.msra.mxu0 0
        %1750 = vmatprep.subr.bf16.mxu0 0
        %1751 = vmatpush1.bf16.xpose.msra.mxu0 0
        %1752 = vmatprep.subr.bf16.mxu0 0
        %1753 = vmatpush1.bf16.xpose.msra.mxu0 0
        %1754 = vmatprep.subr.bf16.mxu0 0
        %1755 = vmatpush1.bf16.xpose.msra.mxu0 0
        %1756 = vmatprep.subr.bf16.mxu0 0
        %1757 = vmatpush1.bf16.xpose.msra.mxu0 0
        %1758 = vmatprep.subr.bf16.mxu0 0
        %1759 = vmatpush1.bf16.xpose.msra.mxu0 %v1703
        %1760 = vmatprep.subr.bf16.mxu0 0
        %1761 = vmatpush2.bf16.xpose.msra.mxu0 0
        %1762 = vmatprep.subr.bf16.mxu0 0
        %1763 = vmatpush2.bf16.xpose.msra.mxu0 0
        %1764 = vmatprep.subr.bf16.mxu0 0
        %1765 = vmatpush2.bf16.xpose.msra.mxu0 0
        %1766 = vmatprep.subr.bf16.mxu0 0
        %1767 = vmatpush2.bf16.xpose.msra.mxu0 0
        %1768 = vmatprep.subr.bf16.mxu0 0
        %1769 = vmatpush2.bf16.xpose.msra.mxu0 0
        %1770 = vmatprep.subr.bf16.mxu0 0
        %1771 = vmatpush2.bf16.xpose.msra.mxu0 0
        %1772 = vmatprep.subr.bf16.mxu0 0
        %1773 = vmatpush2.bf16.xpose.msra.mxu0 0
        %1774 = vmatprep.subr.bf16.mxu0 0
        %1775 = vmatpush2.bf16.xpose.msra.mxu0 0
        %1776 = vmatprep.mubr.bf16.mxu0 0
        %1777 = vmatmul.mubr.bf16.gmra.mxu0 %v1701
        %v1778 = vpop.f32.mrf.mxu0
        %v1779 = vadd.f32 0.0, %v1778
        %v1780 = vpop.f32.mrf.mxu0
        %v1781 = vpop.f32.mrf.mxu0
        %v1782 = vpop.f32.mrf.mxu0
        %1783 = vdwg.mxu0
        %v1784 = vmul.f32 %v1739, 0.25
        %v1785 = vmul.f32 %v1779, 0.25
        %v1786 = vadd.f32 %v1784, %v942
        %v1787 = vadd.f32 %v1785, %v942
        %vm1788 = vcmask 64512
        %v1789 = vsel %vm1788, %v1786, -inf
        %1790 = vmax.xlane.f32.xlu0 %v1789
        %v1791 = vpop.xlane.xlu0 %1790
        %v1792 = vsel %vm1788, %v1787, -inf
        %1793 = vmax.xlane.f32.xlu0 %v1792
        %v1794 = vpop.xlane.xlu0 %1793
        %v1795 = vsub.f32 %v1786, %v1791
        %v1796 = vsub.f32 %v1787, %v1794
        %v1797 = vmul.f32 %v1795, 1.442695
        %v1798 = vpow.pop %v1797
        %v1799 = vmul.f32 %v1796, 1.442695
        %v1800 = vpow.pop %v1799
        %v1801 = vsel %vm1788, %v1798, 0.0
        %1802 = vadd.xlane.f32.xlu0 %v1801
        %v1803 = vpop.xlane.xlu0 %1802
        %v1804 = vsel %vm1788, %v1800, 0.0
        %1805 = vadd.xlane.f32.xlu0 %v1804
        %v1806 = vpop.xlane.xlu0 %1805
        %v1807 = vrcp.pop %v1803
        %v1808 = vrcp.pop %v1806
        %v1809 = vmul.f32 %v1798, %v1807
        %v1810 = vmul.f32 %v1800, %v1808
        %v1811 = vpack.c.bf16 %v1809, %v1809
        %v1812 = vpack.c.bf16 %v1810, %v1810
        %v1813 = vpack.c.bf16 %v1660, %v1660
        %v1814 = vpack.c.bf16 %v1664, %v1664
        %v1816 = vsel %vm1788, %v1811, 0
        %vm1818 = vcmask 1043456
        %v1820 = vsel %vm1818, %v1813, 0
        %1822 = vmatprep.subr.bf16.mxu0 0
        %1823 = vmatpush1.bf16.msra.mxu0 0
        %1824 = vmatprep.subr.bf16.mxu0 0
        %1825 = vmatpush1.bf16.msra.mxu0 0
        %1826 = vmatprep.subr.bf16.mxu0 0
        %1827 = vmatpush1.bf16.msra.mxu0 0
        %1828 = vmatprep.subr.bf16.mxu0 0
        %1829 = vmatpush1.bf16.msra.mxu0 0
        %1830 = vmatprep.subr.bf16.mxu0 0
        %1831 = vmatpush1.bf16.msra.mxu0 0
        %1832 = vmatprep.subr.bf16.mxu0 0
        %1833 = vmatpush1.bf16.msra.mxu0 0
        %1834 = vmatprep.subr.bf16.mxu0 0
        %1835 = vmatpush1.bf16.msra.mxu0 0
        %1836 = vmatprep.subr.bf16.mxu0 0
        %1837 = vmatpush1.bf16.msra.mxu0 %v1820
        %1838 = vmatprep.subr.bf16.mxu0 0
        %1839 = vmatpush2.bf16.msra.mxu0 0
        %1840 = vmatprep.subr.bf16.mxu0 0
        %1841 = vmatpush2.bf16.msra.mxu0 0
        %1842 = vmatprep.subr.bf16.mxu0 0
        %1843 = vmatpush2.bf16.msra.mxu0 0
        %1844 = vmatprep.subr.bf16.mxu0 0
        %1845 = vmatpush2.bf16.msra.mxu0 0
        %1846 = vmatprep.subr.bf16.mxu0 0
        %1847 = vmatpush2.bf16.msra.mxu0 0
        %1848 = vmatprep.subr.bf16.mxu0 0
        %1849 = vmatpush2.bf16.msra.mxu0 0
        %1850 = vmatprep.subr.bf16.mxu0 0
        %1851 = vmatpush2.bf16.msra.mxu0 0
        %1852 = vmatprep.subr.bf16.mxu0 0
        %1853 = vmatpush2.bf16.msra.mxu0 0
        %1854 = vmatprep.mubr.bf16.mxu0 0
        %1855 = vmatmul.mubr.bf16.gmra.mxu0 %v1816
        %v1856 = vpop.f32.mrf.mxu0
        %v1857 = vadd.f32 0.0, %v1856
        %v1858 = vpop.f32.mrf.mxu0
        %v1859 = vpop.f32.mrf.mxu0
        %v1860 = vpop.f32.mrf.mxu0
        %1861 = vdwg.mxu0
        %v1863 = vsel %vm1788, %v1812, 0
        %v1866 = vsel %vm1818, %v1814, 0
        %1868 = vmatprep.subr.bf16.mxu0 0
        %1869 = vmatpush1.bf16.msra.mxu0 0
        %1870 = vmatprep.subr.bf16.mxu0 0
        %1871 = vmatpush1.bf16.msra.mxu0 0
        %1872 = vmatprep.subr.bf16.mxu0 0
        %1873 = vmatpush1.bf16.msra.mxu0 0
        %1874 = vmatprep.subr.bf16.mxu0 0
        %1875 = vmatpush1.bf16.msra.mxu0 0
        %1876 = vmatprep.subr.bf16.mxu0 0
        %1877 = vmatpush1.bf16.msra.mxu0 0
        %1878 = vmatprep.subr.bf16.mxu0 0
        %1879 = vmatpush1.bf16.msra.mxu0 0
        %1880 = vmatprep.subr.bf16.mxu0 0
        %1881 = vmatpush1.bf16.msra.mxu0 0
        %1882 = vmatprep.subr.bf16.mxu0 0
        %1883 = vmatpush1.bf16.msra.mxu0 %v1866
        %1884 = vmatprep.subr.bf16.mxu0 0
        %1885 = vmatpush2.bf16.msra.mxu0 0
        %1886 = vmatprep.subr.bf16.mxu0 0
        %1887 = vmatpush2.bf16.msra.mxu0 0
        %1888 = vmatprep.subr.bf16.mxu0 0
        %1889 = vmatpush2.bf16.msra.mxu0 0
        %1890 = vmatprep.subr.bf16.mxu0 0
        %1891 = vmatpush2.bf16.msra.mxu0 0
        %1892 = vmatprep.subr.bf16.mxu0 0
        %1893 = vmatpush2.bf16.msra.mxu0 0
        %1894 = vmatprep.subr.bf16.mxu0 0
        %1895 = vmatpush2.bf16.msra.mxu0 0
        %1896 = vmatprep.subr.bf16.mxu0 0
        %1897 = vmatpush2.bf16.msra.mxu0 0
        %1898 = vmatprep.subr.bf16.mxu0 0
        %1899 = vmatpush2.bf16.msra.mxu0 0
        %1900 = vmatprep.mubr.bf16.mxu0 0
        %1901 = vmatmul.mubr.bf16.gmra.mxu0 %v1863
        %v1902 = vpop.f32.mrf.mxu0
        %v1903 = vadd.f32 0.0, %v1902
        %v1904 = vpop.f32.mrf.mxu0
        %v1905 = vpop.f32.mrf.mxu0
        %v1906 = vpop.f32.mrf.mxu0
        %1907 = vdwg.mxu0
        %v1908 = vpack.c.bf16 %v1903, %v1857
        %v1909 = vpack.c.bf16 %v1576, %v1576
        %v1910 = vpack.c.bf16 %v1580, %v1580
        %v1911 = vpack.c.bf16 %v1619, %v1619
        %v1912 = vpack.c.bf16 %v1623, %v1623
        %1913 = vmatprep.subr.bf16.mxu0 0
        %1914 = vmatpush1.bf16.xpose.msra.mxu0 0
        %1915 = vmatprep.subr.bf16.mxu0 0
        %1916 = vmatpush1.bf16.xpose.msra.mxu0 0
        %1917 = vmatprep.subr.bf16.mxu0 0
        %1918 = vmatpush1.bf16.xpose.msra.mxu0 0
        %1919 = vmatprep.subr.bf16.mxu0 0
        %1920 = vmatpush1.bf16.xpose.msra.mxu0 0
        %1921 = vmatprep.subr.bf16.mxu0 0
        %1922 = vmatpush1.bf16.xpose.msra.mxu0 0
        %1923 = vmatprep.subr.bf16.mxu0 0
        %1924 = vmatpush1.bf16.xpose.msra.mxu0 0
        %1925 = vmatprep.subr.bf16.mxu0 0
        %1926 = vmatpush1.bf16.xpose.msra.mxu0 0
        %1927 = vmatprep.subr.bf16.mxu0 0
        %1928 = vmatpush1.bf16.xpose.msra.mxu0 %v1911
        %1929 = vmatprep.subr.bf16.mxu0 0
        %1930 = vmatpush2.bf16.xpose.msra.mxu0 0
        %1931 = vmatprep.subr.bf16.mxu0 0
        %1932 = vmatpush2.bf16.xpose.msra.mxu0 0
        %1933 = vmatprep.subr.bf16.mxu0 0
        %1934 = vmatpush2.bf16.xpose.msra.mxu0 0
        %1935 = vmatprep.subr.bf16.mxu0 0
        %1936 = vmatpush2.bf16.xpose.msra.mxu0 0
        %1937 = vmatprep.subr.bf16.mxu0 0
        %1938 = vmatpush2.bf16.xpose.msra.mxu0 0
        %1939 = vmatprep.subr.bf16.mxu0 0
        %1940 = vmatpush2.bf16.xpose.msra.mxu0 0
        %1941 = vmatprep.subr.bf16.mxu0 0
        %1942 = vmatpush2.bf16.xpose.msra.mxu0 0
        %1943 = vmatprep.subr.bf16.mxu0 0
        %1944 = vmatpush2.bf16.xpose.msra.mxu0 0
        %1945 = vmatprep.mubr.bf16.mxu0 0
        %1946 = vmatmul.mubr.bf16.gmra.mxu0 %v1909
        %v1947 = vpop.f32.mrf.mxu0
        %v1948 = vadd.f32 0.0, %v1947
        %v1949 = vpop.f32.mrf.mxu0
        %v1950 = vpop.f32.mrf.mxu0
        %v1951 = vpop.f32.mrf.mxu0
        %1952 = vdwg.mxu0
        %1953 = vmatprep.subr.bf16.mxu0 0
        %1954 = vmatpush1.bf16.xpose.msra.mxu0 0
        %1955 = vmatprep.subr.bf16.mxu0 0
        %1956 = vmatpush1.bf16.xpose.msra.mxu0 0
        %1957 = vmatprep.subr.bf16.mxu0 0
        %1958 = vmatpush1.bf16.xpose.msra.mxu0 0
        %1959 = vmatprep.subr.bf16.mxu0 0
        %1960 = vmatpush1.bf16.xpose.msra.mxu0 0
        %1961 = vmatprep.subr.bf16.mxu0 0
        %1962 = vmatpush1.bf16.xpose.msra.mxu0 0
        %1963 = vmatprep.subr.bf16.mxu0 0
        %1964 = vmatpush1.bf16.xpose.msra.mxu0 0
        %1965 = vmatprep.subr.bf16.mxu0 0
        %1966 = vmatpush1.bf16.xpose.msra.mxu0 0
        %1967 = vmatprep.subr.bf16.mxu0 0
        %1968 = vmatpush1.bf16.xpose.msra.mxu0 %v1912
        %1969 = vmatprep.subr.bf16.mxu0 0
        %1970 = vmatpush2.bf16.xpose.msra.mxu0 0
        %1971 = vmatprep.subr.bf16.mxu0 0
        %1972 = vmatpush2.bf16.xpose.msra.mxu0 0
        %1973 = vmatprep.subr.bf16.mxu0 0
        %1974 = vmatpush2.bf16.xpose.msra.mxu0 0
        %1975 = vmatprep.subr.bf16.mxu0 0
        %1976 = vmatpush2.bf16.xpose.msra.mxu0 0
        %1977 = vmatprep.subr.bf16.mxu0 0
        %1978 = vmatpush2.bf16.xpose.msra.mxu0 0
        %1979 = vmatprep.subr.bf16.mxu0 0
        %1980 = vmatpush2.bf16.xpose.msra.mxu0 0
        %1981 = vmatprep.subr.bf16.mxu0 0
        %1982 = vmatpush2.bf16.xpose.msra.mxu0 0
        %1983 = vmatprep.subr.bf16.mxu0 0
        %1984 = vmatpush2.bf16.xpose.msra.mxu0 0
        %1985 = vmatprep.mubr.bf16.mxu0 0
        %1986 = vmatmul.mubr.bf16.gmra.mxu0 %v1910
        %v1987 = vpop.f32.mrf.mxu0
        %v1988 = vadd.f32 0.0, %v1987
        %v1989 = vpop.f32.mrf.mxu0
        %v1990 = vpop.f32.mrf.mxu0
        %v1991 = vpop.f32.mrf.mxu0
        %1992 = vdwg.mxu0
        %v1993 = vmul.f32 %v1948, 0.25
        %v1994 = vmul.f32 %v1988, 0.25
        %v1995 = vadd.f32 %v1993, %v942
        %v1996 = vadd.f32 %v1994, %v942
        %v1997 = vsel %vm1788, %v1995, -inf
        %1998 = vmax.xlane.f32.xlu0 %v1997
        %v1999 = vpop.xlane.xlu0 %1998
        %v2000 = vsel %vm1788, %v1996, -inf
        %2001 = vmax.xlane.f32.xlu0 %v2000
        %v2002 = vpop.xlane.xlu0 %2001
        %v2003 = vsub.f32 %v1995, %v1999
        %v2004 = vsub.f32 %v1996, %v2002
        %v2005 = vmul.f32 %v2003, 1.442695
        %v2006 = vpow.pop %v2005
        %v2007 = vmul.f32 %v2004, 1.442695
        %v2008 = vpow.pop %v2007
        %v2009 = vsel %vm1788, %v2006, 0.0
        %2010 = vadd.xlane.f32.xlu0 %v2009
        %v2011 = vpop.xlane.xlu0 %2010
        %v2012 = vsel %vm1788, %v2008, 0.0
        %2013 = vadd.xlane.f32.xlu0 %v2012
        %v2014 = vpop.xlane.xlu0 %2013
        %v2015 = vrcp.pop %v2011
        %v2016 = vrcp.pop %v2014
        %v2017 = vmul.f32 %v2006, %v2015
        %v2018 = vmul.f32 %v2008, %v2016
        %v2019 = vpack.c.bf16 %v2017, %v2017
        %v2020 = vpack.c.bf16 %v2018, %v2018
        %v2021 = vpack.c.bf16 %v1662, %v1662
        %v2022 = vpack.c.bf16 %v1666, %v1666
        %v2024 = vsel %vm1788, %v2019, 0
        %v2027 = vsel %vm1818, %v2021, 0
        %2029 = vmatprep.subr.bf16.mxu0 0
        %2030 = vmatpush1.bf16.msra.mxu0 0
        %2031 = vmatprep.subr.bf16.mxu0 0
        %2032 = vmatpush1.bf16.msra.mxu0 0
        %2033 = vmatprep.subr.bf16.mxu0 0
        %2034 = vmatpush1.bf16.msra.mxu0 0
        %2035 = vmatprep.subr.bf16.mxu0 0
        %2036 = vmatpush1.bf16.msra.mxu0 0
        %2037 = vmatprep.subr.bf16.mxu0 0
        %2038 = vmatpush1.bf16.msra.mxu0 0
        %2039 = vmatprep.subr.bf16.mxu0 0
        %2040 = vmatpush1.bf16.msra.mxu0 0
        %2041 = vmatprep.subr.bf16.mxu0 0
        %2042 = vmatpush1.bf16.msra.mxu0 0
        %2043 = vmatprep.subr.bf16.mxu0 0
        %2044 = vmatpush1.bf16.msra.mxu0 %v2027
        %2045 = vmatprep.subr.bf16.mxu0 0
        %2046 = vmatpush2.bf16.msra.mxu0 0
        %2047 = vmatprep.subr.bf16.mxu0 0
        %2048 = vmatpush2.bf16.msra.mxu0 0
        %2049 = vmatprep.subr.bf16.mxu0 0
        %2050 = vmatpush2.bf16.msra.mxu0 0
        %2051 = vmatprep.subr.bf16.mxu0 0
        %2052 = vmatpush2.bf16.msra.mxu0 0
        %2053 = vmatprep.subr.bf16.mxu0 0
        %2054 = vmatpush2.bf16.msra.mxu0 0
        %2055 = vmatprep.subr.bf16.mxu0 0
        %2056 = vmatpush2.bf16.msra.mxu0 0
        %2057 = vmatprep.subr.bf16.mxu0 0
        %2058 = vmatpush2.bf16.msra.mxu0 0
        %2059 = vmatprep.subr.bf16.mxu0 0
        %2060 = vmatpush2.bf16.msra.mxu0 0
        %2061 = vmatprep.mubr.bf16.mxu0 0
        %2062 = vmatmul.mubr.bf16.gmra.mxu0 %v2024
        %v2063 = vpop.f32.mrf.mxu0
        %v2064 = vadd.f32 0.0, %v2063
        %v2065 = vpop.f32.mrf.mxu0
        %v2066 = vpop.f32.mrf.mxu0
        %v2067 = vpop.f32.mrf.mxu0
        %2068 = vdwg.mxu0
        %v2070 = vsel %vm1788, %v2020, 0
        %v2073 = vsel %vm1818, %v2022, 0
        %2075 = vmatprep.subr.bf16.mxu0 0
        %2076 = vmatpush1.bf16.msra.mxu0 0
        %2077 = vmatprep.subr.bf16.mxu0 0
        %2078 = vmatpush1.bf16.msra.mxu0 0
        %2079 = vmatprep.subr.bf16.mxu0 0
        %2080 = vmatpush1.bf16.msra.mxu0 0
        %2081 = vmatprep.subr.bf16.mxu0 0
        %2082 = vmatpush1.bf16.msra.mxu0 0
        %2083 = vmatprep.subr.bf16.mxu0 0
        %2084 = vmatpush1.bf16.msra.mxu0 0
        %2085 = vmatprep.subr.bf16.mxu0 0
        %2086 = vmatpush1.bf16.msra.mxu0 0
        %2087 = vmatprep.subr.bf16.mxu0 0
        %2088 = vmatpush1.bf16.msra.mxu0 0
        %2089 = vmatprep.subr.bf16.mxu0 0
        %2090 = vmatpush1.bf16.msra.mxu0 %v2073
        %2091 = vmatprep.subr.bf16.mxu0 0
        %2092 = vmatpush2.bf16.msra.mxu0 0
        %2093 = vmatprep.subr.bf16.mxu0 0
        %2094 = vmatpush2.bf16.msra.mxu0 0
        %2095 = vmatprep.subr.bf16.mxu0 0
        %2096 = vmatpush2.bf16.msra.mxu0 0
        %2097 = vmatprep.subr.bf16.mxu0 0
        %2098 = vmatpush2.bf16.msra.mxu0 0
        %2099 = vmatprep.subr.bf16.mxu0 0
        %2100 = vmatpush2.bf16.msra.mxu0 0
        %2101 = vmatprep.subr.bf16.mxu0 0
        %2102 = vmatpush2.bf16.msra.mxu0 0
        %2103 = vmatprep.subr.bf16.mxu0 0
        %2104 = vmatpush2.bf16.msra.mxu0 0
        %2105 = vmatprep.subr.bf16.mxu0 0
        %2106 = vmatpush2.bf16.msra.mxu0 0
        %2107 = vmatprep.mubr.bf16.mxu0 0
        %2108 = vmatmul.mubr.bf16.gmra.mxu0 %v2070
        %v2109 = vpop.f32.mrf.mxu0
        %v2110 = vadd.f32 0.0, %v2109
        %v2111 = vpop.f32.mrf.mxu0
        %v2112 = vpop.f32.mrf.mxu0
        %v2113 = vpop.f32.mrf.mxu0
        %2114 = vdwg.mxu0
        %v2115 = vpack.c.bf16 %v2110, %v2064
        %v2132 = vunpack.c.l.b16 %v1684
        %v2133 = vunpack.c.l.b16 %v1685
        %v2134 = vunpack.c.l.b16 %v1686
        %v2135 = vunpack.c.l.b16 %v1687
        %v2136 = vunpack.c.l.b16 %v1688
        %v2137 = vunpack.c.l.b16 %v1689
        %v2138 = vunpack.c.l.b16 %v1690
        %v2139 = vunpack.c.l.b16 %v1691
        %v2140 = vunpack.c.l.b16 %v1692
        %v2141 = vunpack.c.l.b16 %v1693
        %v2142 = vunpack.c.l.b16 %v1694
        %v2143 = vunpack.c.l.b16 %v1695
        %v2144 = vunpack.c.l.b16 %v1696
        %v2145 = vunpack.c.l.b16 %v1697
        %v2146 = vunpack.c.l.b16 %v1698
        %v2147 = vunpack.c.l.b16 %v1699
        %v2148 = vpack.c.b16 %v2133, %v2132
        %v2149 = vpack.c.b16 %v2135, %v2134
        %v2150 = vpack.c.b16 %v2137, %v2136
        %v2151 = vpack.c.b16 %v2139, %v2138
        %v2152 = vpack.c.b16 %v2141, %v2140
        %v2153 = vpack.c.b16 %v2143, %v2142
        %v2154 = vpack.c.b16 %v2145, %v2144
        %v2155 = vpack.c.b16 %v2147, %v2146
        %2164 = vmatprep.subr.bf16.mxu0 0
        %2165 = vmatpush1.bf16.msra.mxu0 %v2155
        %2166 = vmatprep.subr.bf16.mxu0 0
        %2167 = vmatpush1.bf16.msra.mxu0 %v2154
        %2168 = vmatprep.subr.bf16.mxu0 0
        %2169 = vmatpush1.bf16.msra.mxu0 %v2153
        %2170 = vmatprep.subr.bf16.mxu0 0
        %2171 = vmatpush1.bf16.msra.mxu0 %v2152
        %2172 = vmatprep.subr.bf16.mxu0 0
        %2173 = vmatpush1.bf16.msra.mxu0 %v2151
        %2174 = vmatprep.subr.bf16.mxu0 0
        %2175 = vmatpush1.bf16.msra.mxu0 %v2150
        %2176 = vmatprep.subr.bf16.mxu0 0
        %2177 = vmatpush1.bf16.msra.mxu0 %v2149
        %2178 = vmatprep.subr.bf16.mxu0 0
        %2179 = vmatpush1.bf16.msra.mxu0 %v2148
        %2180 = vmatprep.subr.bf16.mxu0 0
        %2181 = vmatpush2.bf16.msra.mxu0 0
        %2182 = vmatprep.subr.bf16.mxu0 0
        %2183 = vmatpush2.bf16.msra.mxu0 0
        %2184 = vmatprep.subr.bf16.mxu0 0
        %2185 = vmatpush2.bf16.msra.mxu0 0
        %2186 = vmatprep.subr.bf16.mxu0 0
        %2187 = vmatpush2.bf16.msra.mxu0 0
        %2188 = vmatprep.subr.bf16.mxu0 0
        %2189 = vmatpush2.bf16.msra.mxu0 0
        %2190 = vmatprep.subr.bf16.mxu0 0
        %2191 = vmatpush2.bf16.msra.mxu0 0
        %2192 = vmatprep.subr.bf16.mxu0 0
        %2193 = vmatpush2.bf16.msra.mxu0 0
        %2194 = vmatprep.subr.bf16.mxu0 0
        %2195 = vmatpush2.bf16.msra.mxu0 0
        %2196 = vmatprep.mubr.bf16.mxu0 0
        %2197 = vmatmul.mubr.bf16.gmra.mxu0 %v2115
        %v2198 = vpop.f32.mrf.mxu0
        %v2199 = vadd.f32 0.0, %v2198
        %v2200 = vpop.f32.mrf.mxu0
        %v2201 = vpop.f32.mrf.mxu0
        %v2202 = vadd.f32 0.0, %v2201
        %v2203 = vpop.f32.mrf.mxu0
        %2204 = vdwg.mxu0
        %v2221 = vunpack.c.l.b16 %v1668
        %v2222 = vunpack.c.l.b16 %v1669
        %v2223 = vunpack.c.l.b16 %v1670
        %v2224 = vunpack.c.l.b16 %v1671
        %v2225 = vunpack.c.l.b16 %v1672
        %v2226 = vunpack.c.l.b16 %v1673
        %v2227 = vunpack.c.l.b16 %v1674
        %v2228 = vunpack.c.l.b16 %v1675
        %v2229 = vunpack.c.l.b16 %v1676
        %v2230 = vunpack.c.l.b16 %v1677
        %v2231 = vunpack.c.l.b16 %v1678
        %v2232 = vunpack.c.l.b16 %v1679
        %v2233 = vunpack.c.l.b16 %v1680
        %v2234 = vunpack.c.l.b16 %v1681
        %v2235 = vunpack.c.l.b16 %v1682
        %v2236 = vunpack.c.l.b16 %v1683
        %v2237 = vpack.c.b16 %v2222, %v2221
        %v2238 = vpack.c.b16 %v2224, %v2223
        %v2239 = vpack.c.b16 %v2226, %v2225
        %v2240 = vpack.c.b16 %v2228, %v2227
        %v2241 = vpack.c.b16 %v2230, %v2229
        %v2242 = vpack.c.b16 %v2232, %v2231
        %v2243 = vpack.c.b16 %v2234, %v2233
        %v2244 = vpack.c.b16 %v2236, %v2235
        %2253 = vmatprep.subr.bf16.mxu0 0
        %2254 = vmatpush1.bf16.msra.mxu0 %v2244
        %2255 = vmatprep.subr.bf16.mxu0 0
        %2256 = vmatpush1.bf16.msra.mxu0 %v2243
        %2257 = vmatprep.subr.bf16.mxu0 0
        %2258 = vmatpush1.bf16.msra.mxu0 %v2242
        %2259 = vmatprep.subr.bf16.mxu0 0
        %2260 = vmatpush1.bf16.msra.mxu0 %v2241
        %2261 = vmatprep.subr.bf16.mxu0 0
        %2262 = vmatpush1.bf16.msra.mxu0 %v2240
        %2263 = vmatprep.subr.bf16.mxu0 0
        %2264 = vmatpush1.bf16.msra.mxu0 %v2239
        %2265 = vmatprep.subr.bf16.mxu0 0
        %2266 = vmatpush1.bf16.msra.mxu0 %v2238
        %2267 = vmatprep.subr.bf16.mxu0 0
        %2268 = vmatpush1.bf16.msra.mxu0 %v2237
        %2269 = vmatprep.subr.bf16.mxu0 0
        %2270 = vmatpush2.bf16.msra.mxu0 0
        %2271 = vmatprep.subr.bf16.mxu0 0
        %2272 = vmatpush2.bf16.msra.mxu0 0
        %2273 = vmatprep.subr.bf16.mxu0 0
        %2274 = vmatpush2.bf16.msra.mxu0 0
        %2275 = vmatprep.subr.bf16.mxu0 0
        %2276 = vmatpush2.bf16.msra.mxu0 0
        %2277 = vmatprep.subr.bf16.mxu0 0
        %2278 = vmatpush2.bf16.msra.mxu0 0
        %2279 = vmatprep.subr.bf16.mxu0 0
        %2280 = vmatpush2.bf16.msra.mxu0 0
        %2281 = vmatprep.subr.bf16.mxu0 0
        %2282 = vmatpush2.bf16.msra.mxu0 0
        %2283 = vmatprep.subr.bf16.mxu0 0
        %2284 = vmatpush2.bf16.msra.mxu0 0
        %2285 = vmatprep.mubr.bf16.mxu0 0
        %2286 = vmatmul.mubr.bf16.gmra.mxu0 %v1908
        %v2287 = vpop.f32.mrf.mxu0
        %v2288 = vadd.f32 %v2199, %v2287
        %v2289 = vpop.f32.mrf.mxu0
        %v2290 = vpop.f32.mrf.mxu0
        %v2291 = vadd.f32 %v2202, %v2290
        %v2292 = vpop.f32.mrf.mxu0
        %2293 = vdwg.mxu0
        %v2294 = vadd.f32 %v1174, %v2288
        %v2295 = vadd.f32 %v1175, %v2291
        %v2296 = vld [vmem:[%s917] sm:$0x1]
        %v2298 = vlaneseq
        %v2299 = vshrl.u32 %v2298, 7
        %v2300 = vsub.s32 0, %v2299
        %v2301 = vrot.slane %v2296, %v2300
        %v2303 = vadd.f32 %v2294, %v2301
        %v2304 = vadd.f32 %v2295, %v2301
        %v2305 = vld [vmem:[%s920] sm:$0x1]
        %v2306 = vld [vmem:[%s923] sm:$0x1]
        %2307 = vadd.xlane.f32.xlu0 %v2303
        %v2308 = vpop.xlane.xlu0 %2307
        %2309 = vadd.xlane.f32.xlu0 %v2304
        %v2310 = vpop.xlane.xlu0 %2309
        %v2311 = vmul.f32 %v2308, 0.03125
        %v2312 = vmul.f32 %v2310, 0.03125
        %v2313 = vsub.f32 %v2303, %v2311
        %v2314 = vsub.f32 %v2304, %v2312
        %v2315 = vmul.f32 %v2313, %v940
        %v2316 = vmul.f32 %v2314, %v940
        %v2317 = vmul.f32 %v2315, %v2315
        %v2318 = vmul.f32 %v2316, %v2316
        %2319 = vadd.xlane.f32.xlu0 %v2317
        %v2320 = vpop.xlane.xlu0 %2319
        %2321 = vadd.xlane.f32.xlu0 %v2318
        %v2322 = vpop.xlane.xlu0 %2321
        %v2323 = vmul.f32 %v2320, 0.03125
        %v2324 = vmul.f32 %v2322, 0.03125
        %v2325 = vadd.f32 %v2323, 1e-05
        %v2326 = vadd.f32 %v2324, 1e-05
        %v2327 = vrsqrt.pop %v2325
        %v2328 = vrsqrt.pop %v2326
        %v2329 = vmul.f32 %v2315, %v2327
        %v2330 = vmul.f32 %v2316, %v2328
        %v2332 = vlaneseq
        %v2333 = vshrl.u32 %v2332, 7
        %v2334 = vsub.s32 0, %v2333
        %v2335 = vrot.slane %v2305, %v2334
        %v2337 = vmul.f32 %v2329, %v2335
        %v2338 = vmul.f32 %v2330, %v2335
        %v2340 = vlaneseq
        %v2341 = vshrl.u32 %v2340, 7
        %v2342 = vsub.s32 0, %v2341
        %v2343 = vrot.slane %v2306, %v2342
        %v2345 = vadd.f32 %v2337, %v2343
        %v2346 = vadd.f32 %v2338, %v2343
        %v2347 = vld [vmem:[%s928] sm:$0xf]
        %v2348 = vld [vmem:[%s928 + $0x4] sm:$0xf]
        %v2349 = vld [vmem:[%s928 + $0x8] sm:$0xf]
        %v2350 = vld [vmem:[%s928 + $0xc] sm:$0xf]
        %v2351 = vld [vmem:[%s928 + $0x10] sm:$0xf]
        %v2352 = vld [vmem:[%s928 + $0x14] sm:$0xf]
        %v2353 = vld [vmem:[%s928 + $0x18] sm:$0xf]
        %v2354 = vld [vmem:[%s928 + $0x1c] sm:$0xf]
        %v2355 = vld [vmem:[%s928 + $0x20] sm:$0xf]
        %v2356 = vld [vmem:[%s928 + $0x24] sm:$0xf]
        %v2357 = vld [vmem:[%s928 + $0x28] sm:$0xf]
        %v2358 = vld [vmem:[%s928 + $0x2c] sm:$0xf]
        %v2359 = vld [vmem:[%s928 + $0x30] sm:$0xf]
        %v2360 = vld [vmem:[%s928 + $0x34] sm:$0xf]
        %v2361 = vld [vmem:[%s928 + $0x38] sm:$0xf]
        %v2362 = vld [vmem:[%s928 + $0x3c] sm:$0xf]
        %v2363 = vpack.c.bf16 %v2346, %v2345
        %v2364 = vld [vmem:[%s931] sm:$0x1]
        %v2366 = vlaneseq
        %v2367 = vshrl.u32 %v2366, 7
        %v2368 = vsub.s32 0, %v2367
        %v2369 = vrot.slane %v2364, %v2368
        %v2387 = vunpack.c.l.b16 %v2347
        %v2388 = vunpack.c.l.b16 %v2348
        %v2389 = vunpack.c.l.b16 %v2349
        %v2390 = vunpack.c.l.b16 %v2350
        %v2391 = vunpack.c.l.b16 %v2351
        %v2392 = vunpack.c.l.b16 %v2352
        %v2393 = vunpack.c.l.b16 %v2353
        %v2394 = vunpack.c.l.b16 %v2354
        %v2395 = vunpack.c.l.b16 %v2355
        %v2396 = vunpack.c.l.b16 %v2356
        %v2397 = vunpack.c.l.b16 %v2357
        %v2398 = vunpack.c.l.b16 %v2358
        %v2399 = vunpack.c.l.b16 %v2359
        %v2400 = vunpack.c.l.b16 %v2360
        %v2401 = vunpack.c.l.b16 %v2361
        %v2402 = vunpack.c.l.b16 %v2362
        %v2403 = vpack.c.b16 %v2388, %v2387
        %v2404 = vpack.c.b16 %v2390, %v2389
        %v2405 = vpack.c.b16 %v2392, %v2391
        %v2406 = vpack.c.b16 %v2394, %v2393
        %v2407 = vpack.c.b16 %v2396, %v2395
        %v2408 = vpack.c.b16 %v2398, %v2397
        %v2409 = vpack.c.b16 %v2400, %v2399
        %v2410 = vpack.c.b16 %v2402, %v2401
        %2419 = vmatprep.subr.bf16.mxu0 0
        %2420 = vmatpush1.bf16.msra.mxu0 %v2410
        %2421 = vmatprep.subr.bf16.mxu0 0
        %2422 = vmatpush1.bf16.msra.mxu0 %v2409
        %2423 = vmatprep.subr.bf16.mxu0 0
        %2424 = vmatpush1.bf16.msra.mxu0 %v2408
        %2425 = vmatprep.subr.bf16.mxu0 0
        %2426 = vmatpush1.bf16.msra.mxu0 %v2407
        %2427 = vmatprep.subr.bf16.mxu0 0
        %2428 = vmatpush1.bf16.msra.mxu0 %v2406
        %2429 = vmatprep.subr.bf16.mxu0 0
        %2430 = vmatpush1.bf16.msra.mxu0 %v2405
        %2431 = vmatprep.subr.bf16.mxu0 0
        %2432 = vmatpush1.bf16.msra.mxu0 %v2404
        %2433 = vmatprep.subr.bf16.mxu0 0
        %2434 = vmatpush1.bf16.msra.mxu0 %v2403
        %2435 = vmatprep.subr.bf16.mxu0 0
        %2436 = vmatpush2.bf16.msra.mxu0 0
        %2437 = vmatprep.subr.bf16.mxu0 0
        %2438 = vmatpush2.bf16.msra.mxu0 0
        %2439 = vmatprep.subr.bf16.mxu0 0
        %2440 = vmatpush2.bf16.msra.mxu0 0
        %2441 = vmatprep.subr.bf16.mxu0 0
        %2442 = vmatpush2.bf16.msra.mxu0 0
        %2443 = vmatprep.subr.bf16.mxu0 0
        %2444 = vmatpush2.bf16.msra.mxu0 0
        %2445 = vmatprep.subr.bf16.mxu0 0
        %2446 = vmatpush2.bf16.msra.mxu0 0
        %2447 = vmatprep.subr.bf16.mxu0 0
        %2448 = vmatpush2.bf16.msra.mxu0 0
        %2449 = vmatprep.subr.bf16.mxu0 0
        %2450 = vmatpush2.bf16.msra.mxu0 0
        %2451 = vmatprep.mubr.bf16.mxu0 0
        %2452 = vmatmul.mubr.bf16.gmra.mxu0 %v2363
        %v2453 = vpop.f32.mrf.mxu0
        %v2454 = vadd.f32 %v2369, %v2453
        %v2455 = vpop.f32.mrf.mxu0
        %v2456 = vpop.f32.mrf.mxu0
        %v2457 = vadd.f32 %v2369, %v2456
        %v2458 = vpop.f32.mrf.mxu0
        %2459 = vdwg.mxu0
        %v2460 = vmul.f32 %v2454, 1.702
        %v2461 = vmul.f32 %v2457, 1.702
        %v2462 = vxor.u32 %v2460, 2147483648
        %v2463 = vxor.u32 %v2461, 2147483648
        %v2464 = vmul.f32 %v2462, 1.442695
        %v2465 = vpow.pop %v2464
        %v2466 = vmul.f32 %v2463, 1.442695
        %v2467 = vpow.pop %v2466
        %v2468 = vadd.f32 %v2465, 1.0
        %v2469 = vadd.f32 %v2467, 1.0
        %v2470 = vrcp.pop %v2468
        %v2471 = vmul.f32 1.0, %v2470
        %v2472 = vrcp.pop %v2469
        %v2473 = vmul.f32 1.0, %v2472
        %v2474 = vmul.f32 %v2454, %v2471
        %v2475 = vmul.f32 %v2457, %v2473
        %v2476 = vld [vmem:[%s798] sm:$0xf]
        %v2477 = vld [vmem:[%s798 + $0x4] sm:$0xf]
        %v2478 = vld [vmem:[%s798 + $0x8] sm:$0xf]
        %v2479 = vld [vmem:[%s798 + $0xc] sm:$0xf]
        %v2480 = vld [vmem:[%s798 + $0x10] sm:$0xf]
        %v2481 = vld [vmem:[%s798 + $0x14] sm:$0xf]
        %v2482 = vld [vmem:[%s798 + $0x18] sm:$0xf]
        %v2483 = vld [vmem:[%s798 + $0x1c] sm:$0xf]
        %v2484 = vld [vmem:[%s798 + $0x20] sm:$0xf]
        %v2485 = vld [vmem:[%s798 + $0x24] sm:$0xf]
        %v2486 = vld [vmem:[%s798 + $0x28] sm:$0xf]
        %v2487 = vld [vmem:[%s798 + $0x2c] sm:$0xf]
        %v2488 = vld [vmem:[%s798 + $0x30] sm:$0xf]
        %v2489 = vld [vmem:[%s798 + $0x34] sm:$0xf]
        %v2490 = vld [vmem:[%s798 + $0x38] sm:$0xf]
        %v2491 = vld [vmem:[%s798 + $0x3c] sm:$0xf]
        %v2492 = vpack.c.bf16 %v2475, %v2474
        %v2509 = vunpack.c.l.b16 %v2476
        %v2510 = vunpack.c.l.b16 %v2477
        %v2511 = vunpack.c.l.b16 %v2478
        %v2512 = vunpack.c.l.b16 %v2479
        %v2513 = vunpack.c.l.b16 %v2480
        %v2514 = vunpack.c.l.b16 %v2481
        %v2515 = vunpack.c.l.b16 %v2482
        %v2516 = vunpack.c.l.b16 %v2483
        %v2517 = vunpack.c.l.b16 %v2484
        %v2518 = vunpack.c.l.b16 %v2485
        %v2519 = vunpack.c.l.b16 %v2486
        %v2520 = vunpack.c.l.b16 %v2487
        %v2521 = vunpack.c.l.b16 %v2488
        %v2522 = vunpack.c.l.b16 %v2489
        %v2523 = vunpack.c.l.b16 %v2490
        %v2524 = vunpack.c.l.b16 %v2491
        %v2525 = vpack.c.b16 %v2510, %v2509
        %v2526 = vpack.c.b16 %v2512, %v2511
        %v2527 = vpack.c.b16 %v2514, %v2513
        %v2528 = vpack.c.b16 %v2516, %v2515
        %v2529 = vpack.c.b16 %v2518, %v2517
        %v2530 = vpack.c.b16 %v2520, %v2519
        %v2531 = vpack.c.b16 %v2522, %v2521
        %v2532 = vpack.c.b16 %v2524, %v2523
        %2541 = vmatprep.subr.bf16.mxu0 0
        %2542 = vmatpush1.bf16.msra.mxu0 %v2532
        %2543 = vmatprep.subr.bf16.mxu0 0
        %2544 = vmatpush1.bf16.msra.mxu0 %v2531
        %2545 = vmatprep.subr.bf16.mxu0 0
        %2546 = vmatpush1.bf16.msra.mxu0 %v2530
        %2547 = vmatprep.subr.bf16.mxu0 0
        %2548 = vmatpush1.bf16.msra.mxu0 %v2529
        %2549 = vmatprep.subr.bf16.mxu0 0
        %2550 = vmatpush1.bf16.msra.mxu0 %v2528
        %2551 = vmatprep.subr.bf16.mxu0 0
        %2552 = vmatpush1.bf16.msra.mxu0 %v2527
        %2553 = vmatprep.subr.bf16.mxu0 0
        %2554 = vmatpush1.bf16.msra.mxu0 %v2526
        %2555 = vmatprep.subr.bf16.mxu0 0
        %2556 = vmatpush1.bf16.msra.mxu0 %v2525
        %2557 = vmatprep.subr.bf16.mxu0 0
        %2558 = vmatpush2.bf16.msra.mxu0 0
        %2559 = vmatprep.subr.bf16.mxu0 0
        %2560 = vmatpush2.bf16.msra.mxu0 0
        %2561 = vmatprep.subr.bf16.mxu0 0
        %2562 = vmatpush2.bf16.msra.mxu0 0
        %2563 = vmatprep.subr.bf16.mxu0 0
        %2564 = vmatpush2.bf16.msra.mxu0 0
        %2565 = vmatprep.subr.bf16.mxu0 0
        %2566 = vmatpush2.bf16.msra.mxu0 0
        %2567 = vmatprep.subr.bf16.mxu0 0
        %2568 = vmatpush2.bf16.msra.mxu0 0
        %2569 = vmatprep.subr.bf16.mxu0 0
        %2570 = vmatpush2.bf16.msra.mxu0 0
        %2571 = vmatprep.subr.bf16.mxu0 0
        %2572 = vmatpush2.bf16.msra.mxu0 0
        %2573 = vmatprep.mubr.bf16.mxu0 0
        %2574 = vmatmul.mubr.bf16.gmra.mxu0 %v2492
        %v2575 = vpop.f32.mrf.mxu0
        %v2576 = vadd.f32 0.0, %v2575
        %v2577 = vpop.f32.mrf.mxu0
        %v2578 = vpop.f32.mrf.mxu0
        %v2579 = vadd.f32 0.0, %v2578
        %v2580 = vpop.f32.mrf.mxu0
        %2581 = vdwg.mxu0
        %v2582 = vadd.f32 %v2303, %v2576
        %v2583 = vadd.f32 %v2304, %v2579
        %v2584 = vld [vmem:[%s934] sm:$0x1]
        %v2586 = vlaneseq
        %v2587 = vshrl.u32 %v2586, 7
        %v2588 = vsub.s32 0, %v2587
        %v2589 = vrot.slane %v2584, %v2588
        %v2591 = vadd.f32 %v2582, %v2589
        %v2592 = vadd.f32 %v2583, %v2589
        %2593 = vst [vmem:[#allocation2] sm:$0xff] %v2591
        %2594 = vst [vmem:[#allocation2 + $0x8] sm:$0xff] %v2592
        %p2595 = scmp.eq.s32.totalorder %s41, 1
        // Predicated region
        $region129: #{clip_model_forward.1} parent=107 // pred_check
          %p2596 = pneg %p2595
        $region130: #{clip_model_forward.1} parent=107 // pred_check_branch
          %2598 = sbr.rel (%p2596) target = $region132
        $region131: #{clip_model_forward.1} parent=107 // pred_region
          %v2599 = vld [vmem:[%s17] sm:$0x1]
          %v2600 = vld [vmem:[%s18] sm:$0x1]
          %2601 = vadd.xlane.f32.xlu0 %v2591
          %v2602 = vpop.xlane.xlu0 %2601
          %2603 = vadd.xlane.f32.xlu0 %v2592
          %v2604 = vpop.xlane.xlu0 %2603
          %v2605 = vmul.f32 %v2602, 0.03125
          %v2606 = vmul.f32 %v2604, 0.03125
          %v2607 = vsub.f32 %v2591, %v2605
          %v2608 = vsub.f32 %v2592, %v2606
          %v2609 = vmul.f32 %v2607, %v940
          %v2610 = vmul.f32 %v2608, %v940
          %v2611 = vmul.f32 %v2609, %v2609
          %v2612 = vmul.f32 %v2610, %v2610
          %2613 = vadd.xlane.f32.xlu0 %v2611
          %v2614 = vpop.xlane.xlu0 %2613
          %2615 = vadd.xlane.f32.xlu0 %v2612
          %v2616 = vpop.xlane.xlu0 %2615
          %v2617 = vmul.f32 %v2614, 0.03125
          %v2618 = vmul.f32 %v2616, 0.03125
          %v2619 = vadd.f32 %v2617, 1e-05
          %v2620 = vadd.f32 %v2618, 1e-05
          %v2621 = vrsqrt.pop %v2619
          %v2622 = vrsqrt.pop %v2620
          %v2623 = vmul.f32 %v2609, %v2621
          %v2624 = vmul.f32 %v2610, %v2622
          %v2626 = vlaneseq
          %v2627 = vshrl.u32 %v2626, 7
          %v2628 = vsub.s32 0, %v2627
          %v2629 = vrot.slane %v2599, %v2628
          %v2631 = vmul.f32 %v2623, %v2629
          %v2632 = vmul.f32 %v2624, %v2629
          %v2634 = vlaneseq
          %v2635 = vshrl.u32 %v2634, 7
          %v2636 = vsub.s32 0, %v2635
          %v2637 = vrot.slane %v2600, %v2636
          %v2639 = vadd.f32 %v2631, %v2637
          %v2640 = vadd.f32 %v2632, %v2637
          %v2641 = vld [vmem:[%s19] sm:$0xf]
          %v2642 = vld [vmem:[%s19 + $0x4] sm:$0xf]
          %v2643 = vld [vmem:[%s19 + $0x8] sm:$0xf]
          %v2644 = vld [vmem:[%s19 + $0xc] sm:$0xf]
          %v2645 = vld [vmem:[%s19 + $0x10] sm:$0xf]
          %v2646 = vld [vmem:[%s19 + $0x14] sm:$0xf]
          %v2647 = vld [vmem:[%s19 + $0x18] sm:$0xf]
          %v2648 = vld [vmem:[%s19 + $0x1c] sm:$0xf]
          %v2649 = vld [vmem:[%s19 + $0x20] sm:$0xf]
          %v2650 = vld [vmem:[%s19 + $0x24] sm:$0xf]
          %v2651 = vld [vmem:[%s19 + $0x28] sm:$0xf]
          %v2652 = vld [vmem:[%s19 + $0x2c] sm:$0xf]
          %v2653 = vld [vmem:[%s19 + $0x30] sm:$0xf]
          %v2654 = vld [vmem:[%s19 + $0x34] sm:$0xf]
          %v2655 = vld [vmem:[%s19 + $0x38] sm:$0xf]
          %v2656 = vld [vmem:[%s19 + $0x3c] sm:$0xf]
          %v2657 = vpack.c.bf16 %v2640, %v2639
          %v2674 = vunpack.c.l.b16 %v2641
          %v2675 = vunpack.c.l.b16 %v2642
          %v2676 = vunpack.c.l.b16 %v2643
          %v2677 = vunpack.c.l.b16 %v2644
          %v2678 = vunpack.c.l.b16 %v2645
          %v2679 = vunpack.c.l.b16 %v2646
          %v2680 = vunpack.c.l.b16 %v2647
          %v2681 = vunpack.c.l.b16 %v2648
          %v2682 = vunpack.c.l.b16 %v2649
          %v2683 = vunpack.c.l.b16 %v2650
          %v2684 = vunpack.c.l.b16 %v2651
          %v2685 = vunpack.c.l.b16 %v2652
          %v2686 = vunpack.c.l.b16 %v2653
          %v2687 = vunpack.c.l.b16 %v2654
          %v2688 = vunpack.c.l.b16 %v2655
          %v2689 = vunpack.c.l.b16 %v2656
          %v2690 = vpack.c.b16 %v2675, %v2674
          %v2691 = vpack.c.b16 %v2677, %v2676
          %v2692 = vpack.c.b16 %v2679, %v2678
          %v2693 = vpack.c.b16 %v2681, %v2680
          %v2694 = vpack.c.b16 %v2683, %v2682
          %v2695 = vpack.c.b16 %v2685, %v2684
          %v2696 = vpack.c.b16 %v2687, %v2686
          %v2697 = vpack.c.b16 %v2689, %v2688
          %2706 = vmatprep.subr.bf16.mxu0 0
          %2707 = vmatpush1.bf16.msra.mxu0 %v2697
          %2708 = vmatprep.subr.bf16.mxu0 0
          %2709 = vmatpush1.bf16.msra.mxu0 %v2696
          %2710 = vmatprep.subr.bf16.mxu0 0
          %2711 = vmatpush1.bf16.msra.mxu0 %v2695
          %2712 = vmatprep.subr.bf16.mxu0 0
          %2713 = vmatpush1.bf16.msra.mxu0 %v2694
          %2714 = vmatprep.subr.bf16.mxu0 0
          %2715 = vmatpush1.bf16.msra.mxu0 %v2693
          %2716 = vmatprep.subr.bf16.mxu0 0
          %2717 = vmatpush1.bf16.msra.mxu0 %v2692
          %2718 = vmatprep.subr.bf16.mxu0 0
          %2719 = vmatpush1.bf16.msra.mxu0 %v2691
          %2720 = vmatprep.subr.bf16.mxu0 0
          %2721 = vmatpush1.bf16.msra.mxu0 %v2690
          %2722 = vmatprep.subr.bf16.mxu0 0
          %2723 = vmatpush2.bf16.msra.mxu0 0
          %2724 = vmatprep.subr.bf16.mxu0 0
          %2725 = vmatpush2.bf16.msra.mxu0 0
          %2726 = vmatprep.subr.bf16.mxu0 0
          %2727 = vmatpush2.bf16.msra.mxu0 0
          %2728 = vmatprep.subr.bf16.mxu0 0
          %2729 = vmatpush2.bf16.msra.mxu0 0
          %2730 = vmatprep.subr.bf16.mxu0 0
          %2731 = vmatpush2.bf16.msra.mxu0 0
          %2732 = vmatprep.subr.bf16.mxu0 0
          %2733 = vmatpush2.bf16.msra.mxu0 0
          %2734 = vmatprep.subr.bf16.mxu0 0
          %2735 = vmatpush2.bf16.msra.mxu0 0
          %2736 = vmatprep.subr.bf16.mxu0 0
          %2737 = vmatpush2.bf16.msra.mxu0 0
          %2738 = vmatprep.mubr.bf16.mxu0 0
          %2739 = vmatmul.mubr.bf16.gmra.mxu0 %v2657
          %v2740 = vpop.f32.mrf.mxu0
          %v2741 = vadd.f32 0.0, %v2740
          %v2742 = vpop.f32.mrf.mxu0
          %v2743 = vpop.f32.mrf.mxu0
          %v2744 = vadd.f32 0.0, %v2743
          %v2745 = vpop.f32.mrf.mxu0
          %2746 = vdwg.mxu0
          %2747 = vst [vmem:[#allocation11] sm:$0xff] %v2741
          %2748 = vst [vmem:[#allocation11 + $0x8] sm:$0xff] %v2744
          %v2749 = vld [vmem:[#allocation9] sm:$0xf]
          %v2750 = vld [vmem:[#allocation9 + $0x4] sm:$0xf]
          %v2751 = vld [vmem:[#allocation9 + $0x8] sm:$0xf]
          %v2752 = vld [vmem:[#allocation9 + $0xc] sm:$0xf]
          %v2753 = vld [vmem:[#allocation9 + $0x10] sm:$0xf]
          %v2754 = vld [vmem:[#allocation9 + $0x14] sm:$0xf]
          %v2755 = vld [vmem:[#allocation9 + $0x18] sm:$0xf]
          %v2756 = vld [vmem:[#allocation9 + $0x1c] sm:$0xf]
          %v2757 = vld [vmem:[#allocation9 + $0x20] sm:$0xf]
          %v2758 = vld [vmem:[#allocation9 + $0x24] sm:$0xf]
          %v2759 = vld [vmem:[#allocation9 + $0x28] sm:$0xf]
          %v2760 = vld [vmem:[#allocation9 + $0x2c] sm:$0xf]
          %v2761 = vld [vmem:[#allocation9 + $0x30] sm:$0xf]
          %v2762 = vld [vmem:[#allocation9 + $0x34] sm:$0xf]
          %v2763 = vld [vmem:[#allocation9 + $0x38] sm:$0xf]
          %v2764 = vld [vmem:[#allocation9 + $0x3c] sm:$0xf]
          %v2765 = vpack.c.bf16 %v2744, %v2741
          %v2766 = vld [vmem:[%s21] sm:$0x1]
          %v2768 = vlaneseq
          %v2769 = vshrl.u32 %v2768, 7
          %v2770 = vsub.s32 0, %v2769
          %v2771 = vrot.slane %v2766, %v2770
          %v2789 = vunpack.c.l.b16 %v2749
          %v2790 = vunpack.c.l.b16 %v2750
          %v2791 = vunpack.c.l.b16 %v2751
          %v2792 = vunpack.c.l.b16 %v2752
          %v2793 = vunpack.c.l.b16 %v2753
          %v2794 = vunpack.c.l.b16 %v2754
          %v2795 = vunpack.c.l.b16 %v2755
          %v2796 = vunpack.c.l.b16 %v2756
          %v2797 = vunpack.c.l.b16 %v2757
          %v2798 = vunpack.c.l.b16 %v2758
          %v2799 = vunpack.c.l.b16 %v2759
          %v2800 = vunpack.c.l.b16 %v2760
          %v2801 = vunpack.c.l.b16 %v2761
          %v2802 = vunpack.c.l.b16 %v2762
          %v2803 = vunpack.c.l.b16 %v2763
          %v2804 = vunpack.c.l.b16 %v2764
          %v2805 = vpack.c.b16 %v2790, %v2789
          %v2806 = vpack.c.b16 %v2792, %v2791
          %v2807 = vpack.c.b16 %v2794, %v2793
          %v2808 = vpack.c.b16 %v2796, %v2795
          %v2809 = vpack.c.b16 %v2798, %v2797
          %v2810 = vpack.c.b16 %v2800, %v2799
          %v2811 = vpack.c.b16 %v2802, %v2801
          %v2812 = vpack.c.b16 %v2804, %v2803
          %2821 = vmatprep.subr.bf16.mxu0 0
          %2822 = vmatpush1.bf16.msra.mxu0 %v2812
          %2823 = vmatprep.subr.bf16.mxu0 0
          %2824 = vmatpush1.bf16.msra.mxu0 %v2811
          %2825 = vmatprep.subr.bf16.mxu0 0
          %2826 = vmatpush1.bf16.msra.mxu0 %v2810
          %2827 = vmatprep.subr.bf16.mxu0 0
          %2828 = vmatpush1.bf16.msra.mxu0 %v2809
          %2829 = vmatprep.subr.bf16.mxu0 0
          %2830 = vmatpush1.bf16.msra.mxu0 %v2808
          %2831 = vmatprep.subr.bf16.mxu0 0
          %2832 = vmatpush1.bf16.msra.mxu0 %v2807
          %2833 = vmatprep.subr.bf16.mxu0 0
          %2834 = vmatpush1.bf16.msra.mxu0 %v2806
          %2835 = vmatprep.subr.bf16.mxu0 0
          %2836 = vmatpush1.bf16.msra.mxu0 %v2805
          %2837 = vmatprep.subr.bf16.mxu0 0
          %2838 = vmatpush2.bf16.msra.mxu0 0
          %2839 = vmatprep.subr.bf16.mxu0 0
          %2840 = vmatpush2.bf16.msra.mxu0 0
          %2841 = vmatprep.subr.bf16.mxu0 0
          %2842 = vmatpush2.bf16.msra.mxu0 0
          %2843 = vmatprep.subr.bf16.mxu0 0
          %2844 = vmatpush2.bf16.msra.mxu0 0
          %2845 = vmatprep.subr.bf16.mxu0 0
          %2846 = vmatpush2.bf16.msra.mxu0 0
          %2847 = vmatprep.subr.bf16.mxu0 0
          %2848 = vmatpush2.bf16.msra.mxu0 0
          %2849 = vmatprep.subr.bf16.mxu0 0
          %2850 = vmatpush2.bf16.msra.mxu0 0
          %2851 = vmatprep.subr.bf16.mxu0 0
          %2852 = vmatpush2.bf16.msra.mxu0 0
          %2853 = vmatprep.mubr.bf16.mxu0 0
          %2854 = vmatmul.mubr.bf16.gmra.mxu0 %v2765
          %v2855 = vpop.f32.mrf.mxu0
          %v2856 = vadd.f32 %v2771, %v2855
          %v2857 = vpop.f32.mrf.mxu0
          %v2858 = vpop.f32.mrf.mxu0
          %v2859 = vadd.f32 %v2771, %v2858
          %v2860 = vpop.f32.mrf.mxu0
          %2861 = vdwg.mxu0
          %2862 = vst [vmem:[%s23] sm:$0xff] %v2856
          %2863 = vst [vmem:[%s23 + $0x8] sm:$0xff] %v2859
        $region132: #{clip_model_forward.1} parent=107 // pred_fallthru
          _
        // Predicated region
        $region133: #{clip_model_forward.1} parent=107 // pred_check
          %p2864 = pneg %p576
        $region134: #{clip_model_forward.1} parent=107 // pred_check_branch
          %2866 = sbr.rel (%p2864) target = $region136
        $region135: #{clip_model_forward.1} parent=107 // pred_region
          %s2868 = ssub.s32 256, 256
          %2869 = vsyncadd [#allocation5], %s2868
          %s2870 = sshll.u32 [#allocation11], 4
          %s2871 = int_to_ptr.vmem [resolvable:$true] %s2870
          %2876 = dma.vmem_to_hbm [thread:$0]  %s2871, 256, %s22, [#allocation5], 128, 128, 8
        $region136: #{clip_model_forward.1} parent=107 // pred_fallthru
          _
        // Predicated region
        $region137: #{clip_model_forward.1} parent=107 // pred_check
          %p2877 = pneg %p597
        $region138: #{clip_model_forward.1} parent=107 // pred_check_branch
          %2879 = sbr.rel (%p2877) target = $region140
        $region139: #{clip_model_forward.1} parent=107 // pred_region
          _
        $region140: #{clip_model_forward.1} parent=107 // pred_fallthru
          _
        // Predicated region
        $region141: #{clip_model_forward.1} parent=107 // pred_check
          %p2880 = pneg %p576
        $region142: #{clip_model_forward.1} parent=107 // pred_check_branch
          %2882 = sbr.rel (%p2880) target = $region144
        $region143: #{clip_model_forward.1} parent=107 // pred_region
          %2883 = dma.done [#allocation5], 256
        $region144: #{clip_model_forward.1} parent=107 // pred_fallthru
          _
        // Predicated region
        $region145: #{clip_model_forward.1} parent=107 // pred_check
          %p2884 = pneg %p597
        $region146: #{clip_model_forward.1} parent=107 // pred_check_branch
          %2886 = sbr.rel (%p2884) target = $region148
        $region147: #{clip_model_forward.1} parent=107 // pred_region
          _
        $region148: #{clip_model_forward.1} parent=107 // pred_fallthru
          _
      $region108: #{clip_model_forward.1} parent=5 // pred_fallthru
        _
      %p2887 = scmp.le.s32.totalorder 2, %s36
      // Predicated region
      $region149: #{clip_model_forward.1} parent=5 // pred_check
        %p2888 = pneg %p2887
      $region150: #{clip_model_forward.1} parent=5 // pred_check_branch
        %2890 = sbr.rel (%p2888) target = $region152
      $region151: #{clip_model_forward.1} parent=5 // pred_region
        %s2891 = ssub.s32 %s36, 2
      $region152: #{clip_model_forward.1} parent=5 // pred_fallthru
        _
    $region6: #{clip_model_forward.1} parent=1 // loop_footer
      %s40 = sadd.s32 1, %s36
    $region7: #{clip_model_forward.1} parent=1 // loop_footer_branch
      %35 = sbr.rel target = $region3
    $region8: #{clip_model_forward.1} parent=1 // loop_exit
      _
    %2892 = vsyncpa [#allocation4], 1
    %s2893 = scalar_lea.sflag [#allocation4], 1
    %2894 = vsyncpa %s2893, 1
    %2895 = vsyncpa [#allocation7], 1
    %s2896 = scalar_lea.sflag [#allocation7], 1
    %2897 = vsyncpa %s2896, 1
    %2898 = vsyncpa [#allocation10], 1
    %2899 = vsyncpa [#allocation5], 1
    %s2900 = scalar_lea.sflag [#allocation5], 1
    %2901 = vsyncpa %s2900, 1

</llo_original>
